<compile_context>
chip_gen: v6e
topology: v6e:2x2x1
jax: 0.10.0
libtpu: 0.0.40
codegen_flags: <defaults>
</compile_context>

<pallas_src>
import functools

import jax
import jax.numpy as jnp
import numpy as np
from jax.experimental import pallas as pl
from jax.experimental.pallas import tpu as pltpu

EPS = 1e-5


# --------------------------------------------------------------------------- host-side helpers
def _tap_masks(h, w):
    """0/1 border masks, one row per 3x3 tap (tap = (dh+1)*3 + (dw+1)), flattened
    over H*W.  Precomputed on the host so the kernel needs no vector int div/mod."""
    hw = h * w
    rows = np.arange(hw) // w
    cols = np.arange(hw) % w
    m = np.zeros((9, hw), np.float32)
    for dh in (-1, 0, 1):
        for dw in (-1, 0, 1):
            t = (dh + 1) * 3 + (dw + 1)
            ok = ((rows + dh >= 0) & (rows + dh < h) &
                  (cols + dw >= 0) & (cols + dw < w))
            m[t] = ok.astype(np.float32)
    return m


def _fold_bn_params(stats, gamma, beta, count):
    """Fold batch statistics (training-mode BN) with gamma/beta into per-channel
    scale/shift column vectors so the kernels apply  y_norm = y * scale + shift."""
    tot = jnp.sum(stats[:, :, 0], axis=0)          # (C,)
    tot_sq = jnp.sum(stats[:, :, 1], axis=0)       # (C,)
    mean = tot / count
    var = jnp.maximum(tot_sq / count - mean * mean, 0.0)   # biased variance
    scale = gamma * jax.lax.rsqrt(var + EPS)
    shift = beta - mean * scale
    return (scale.astype(jnp.float32).reshape(-1, 1),
            shift.astype(jnp.float32).reshape(-1, 1))


# --------------------------------------------------------------------------- in-kernel conv helper
def _conv3x3_flat(x, wm, masks, width):
    """3x3 'same' convolution on a channels-major, spatially flattened tile.

    x     : (Cin, H*W) f32      lane axis = flattened spatial (lane dense)
    wm    : (Cout, 9*Cin) f32   column index = tap*Cin + cin, tap = (dh+1)*3+(dw+1)
    masks : (9, H*W) f32        0/1 border masks per tap (zero padding + wrap kill)
    width : image width W (static Python int)
    returns (Cout, H*W) f32
    """
    cin, hw = x.shape
    cout = wm.shape[0]
    acc = jnp.zeros((cout, hw), jnp.float32)
    for dh in (-1, 0, 1):
        for dw in (-1, 0, 1):
            tap = (dh + 1) * 3 + (dw + 1)
            shift = dh * width + dw
            if shift == 0:
                shifted = x
            else:
                # Lane rotation runs on the XLU; circularly wrapped positions are
                # zeroed by the border mask, which also implements the conv padding.
                shifted = pltpu.roll(x, (-shift) % hw, 1) * masks[tap:tap + 1, :]
            for ci in range(cin):
                i0 = tap * cin + ci
                # (Cout,1) * (1,HW) broadcast FMA on the VPU; with channels this
                # small this beats nine K=Cin MXU matmuls.
                acc = acc + wm[:, i0:i0 + 1] * shifted[ci:ci + 1, :]
    return acc


def _write_channel_stats(st_ref, y):
    """Per-sample, per-channel sum and sum of squares (fused BN partial stats)."""
    st_ref[0, :, 0:1] = jnp.sum(y, axis=1, keepdims=True)
    st_ref[0, :, 1:2] = jnp.sum(y * y, axis=1, keepdims=True)


# --------------------------------------------------------------------------- kernels
def _conv_stats_kernel(x_ref, w_ref, m_ref, y_ref, st_ref, *, width):
    # x_ref: (1, Cin, HW); w_ref: (Cout, 9*Cin); m_ref: (9, HW)
    x = x_ref[0].astype(jnp.float32)                        # (Cin, HW)
    y = _conv3x3_flat(x, w_ref[...], m_ref[...], width)     # (Cout, HW) f32
    y_ref[0] = y.astype(y_ref.dtype)                        # lane-dense store
    _write_channel_stats(st_ref, y)


def _bn_relu_conv_stats_kernel(y1_ref, sc_ref, sh_ref, w_ref, m_ref,
                               y2_ref, st_ref, *, width):
    y1 = y1_ref[0].astype(jnp.float32)                      # (C, HW)
    a = jnp.maximum(y1 * sc_ref[...] + sh_ref[...], 0.0)    # bn1 + relu
    y2 = _conv3x3_flat(a, w_ref[...], m_ref[...], width)    # conv2
    y2_ref[0] = y2.astype(y2_ref.dtype)
    _write_channel_stats(st_ref, y2)


def _bn_add_kernel(y2_ref, sc_ref, sh_ref, r_ref, o_ref):
    y2 = y2_ref[0].astype(jnp.float32)
    out = y2 * sc_ref[...] + sh_ref[...] + r_ref[0].astype(jnp.float32)
    o_ref[0] = out.astype(o_ref.dtype)


# --------------------------------------------------------------------------- pallas_call wrappers
def _conv1_call(x_flat, w_mat, masks, width):
    n, cin, hw = x_flat.shape
    cout = w_mat.shape[0]
    return pl.pallas_call(
        functools.partial(_conv_stats_kernel, width=width),
        out_shape=(jax.ShapeDtypeStruct((n, cout, hw), x_flat.dtype),
                   jax.ShapeDtypeStruct((n, cout, 2), jnp.float32)),
        grid_spec=pltpu.PrefetchScalarGridSpec(
            num_scalar_prefetch=0,
            grid=(n,),
            in_specs=[
                pl.BlockSpec((1, cin, hw), lambda i: (i, 0, 0)),
                pl.BlockSpec((cout, 9 * cin), lambda i: (0, 0)),
                pl.BlockSpec((9, hw), lambda i: (0, 0)),
            ],
            out_specs=(
                pl.BlockSpec((1, cout, hw), lambda i: (i, 0, 0)),
                pl.BlockSpec((1, cout, 2), lambda i: (i, 0, 0)),
            ),
        ),
        compiler_params=pltpu.CompilerParams(dimension_semantics=("parallel",)),
    )(x_flat, w_mat, masks)


def _conv2_call(y1, scale, shift, w_mat, masks, width):
    n, cin, hw = y1.shape
    cout = w_mat.shape[0]
    return pl.pallas_call(
        functools.partial(_bn_relu_conv_stats_kernel, width=width),
        out_shape=(jax.ShapeDtypeStruct((n, cout, hw), y1.dtype),
                   jax.ShapeDtypeStruct((n, cout, 2), jnp.float32)),
        grid_spec=pltpu.PrefetchScalarGridSpec(
            num_scalar_prefetch=0,
            grid=(n,),
            in_specs=[
                pl.BlockSpec((1, cin, hw), lambda i: (i, 0, 0)),
                pl.BlockSpec((cin, 1), lambda i: (0, 0)),
                pl.BlockSpec((cin, 1), lambda i: (0, 0)),
                pl.BlockSpec((cout, 9 * cin), lambda i: (0, 0)),
                pl.BlockSpec((9, hw), lambda i: (0, 0)),
            ],
            out_specs=(
                pl.BlockSpec((1, cout, hw), lambda i: (i, 0, 0)),
                pl.BlockSpec((1, cout, 2), lambda i: (i, 0, 0)),
            ),
        ),
        compiler_params=pltpu.CompilerParams(dimension_semantics=("parallel",)),
    )(y1, scale, shift, w_mat, masks)


def _bn_add_call(y2, scale, shift, residual):
    n, c, hw = y2.shape
    return pl.pallas_call(
        _bn_add_kernel,
        out_shape=jax.ShapeDtypeStruct((n, c, hw), y2.dtype),
        grid_spec=pltpu.PrefetchScalarGridSpec(
            num_scalar_prefetch=0,
            grid=(n,),
            in_specs=[
                pl.BlockSpec((1, c, hw), lambda i: (i, 0, 0)),
                pl.BlockSpec((c, 1), lambda i: (0, 0)),
                pl.BlockSpec((c, 1), lambda i: (0, 0)),
                pl.BlockSpec((1, c, hw), lambda i: (i, 0, 0)),
            ],
            out_specs=pl.BlockSpec((1, c, hw), lambda i: (i, 0, 0)),
        ),
        compiler_params=pltpu.CompilerParams(dimension_semantics=("parallel",)),
    )(y2, scale, shift, residual)


# --------------------------------------------------------------------------- full ResNet_block forward
def resnet_block_forward(x_nchw, params):
    """x_nchw: (N, C, H, W) f32 -> (N, C, H, W) f32 (matches the PyTorch module).

    params = (w1_oihw, gamma1, beta1, w2_oihw, gamma2, beta2); conv weights in
    PyTorch OIHW layout.
    """
    w1, g1, b1, w2, g2, b2 = params
    n, c, h, w = x_nchw.shape
    hw = h * w
    count = float(n * hw)

    # Free reshape: NCHW is already channel-major, so (N, C, H*W) is a view and
    # the lane axis becomes H*W (lane dense).  No transpose, no pad.
    xf = x_nchw.reshape(n, c, hw)

    # (Cout, 9*Cin) weight matrices, column index = tap*Cin + cin.  Tiny one-off
    # rearrangement of the 3x3 kernels (weights are ~0.5 KiB here).
    w1m = jnp.transpose(w1, (0, 2, 3, 1)).reshape(c, 9 * c)
    w2m = jnp.transpose(w2, (0, 2, 3, 1)).reshape(c, 9 * c)
    masks = jnp.asarray(_tap_masks(h, w))

    # Pass 1: conv1, with BN1 partial statistics fused into the epilogue.
    y1, st1 = _conv1_call(xf, w1m, masks, w)
    sc1, sh1 = _fold_bn_params(st1, g1, b1, count)

    # Pass 2: bn1 + relu + conv2, with BN2 partial statistics fused.
    y2, st2 = _conv2_call(y1, sc1, sh1, w2m, masks, w)
    sc2, sh2 = _fold_bn_params(st2, g2, b2, count)

    # Pass 3: bn2 + residual add.  (self.relu2 is unused in the PyTorch forward.)
    out = _bn_add_call(y2, sc2, sh2, xf)
    return out.reshape(n, c, h, w)


# --------------------------------------------------------------------------- pure-JAX reference (for checking)
def _reference(x_nchw, w1_oihw, g1, b1, w2_oihw, g2, b2):
    def conv(x, w):
        return jax.lax.conv_general_dilated(
            x, w, (1, 1), ((1, 1), (1, 1)),
            dimension_numbers=("NCHW", "OIHW", "NCHW"))

    def bn(y, g, b):
        mean = jnp.mean(y, axis=(0, 2, 3), keepdims=True)
        var = jnp.mean(jnp.square(y - mean), axis=(0, 2, 3), keepdims=True)
        return (y - mean) * jax.lax.rsqrt(var + EPS) * g.reshape(1, -1, 1, 1) \
            + b.reshape(1, -1, 1, 1)

    out = jax.nn.relu(bn(conv(x_nchw, w1_oihw), g1, b1))
    out = bn(conv(out, w2_oihw), g2, b2)
    return out + x_nchw


if __name__ == "__main__":
    key = jax.random.PRNGKey(0)
    N, C, H, W = 2, 4, 16, 16                       # in_channel == out_channel == 4

    ks = jax.random.split(key, 7)
    x = jax.random.normal(ks[0], (N, C, H, W), jnp.float32)

    # Deterministic synthetic parameters (shapes follow the PyTorch module).
    w1_oihw = jax.random.normal(ks[1], (C, C, 3, 3), jnp.float32) * 0.2
    w2_oihw = jax.random.normal(ks[2], (C, C, 3, 3), jnp.float32) * 0.2
    gamma1 = 1.0 + 0.1 * jax.random.normal(ks[3], (C,), jnp.float32)
    beta1 = 0.1 * jax.random.normal(ks[4], (C,), jnp.float32)
    gamma2 = 1.0 + 0.1 * jax.random.normal(ks[5], (C,), jnp.float32)
    beta2 = 0.1 * jax.random.normal(ks[6], (C,), jnp.float32)

    params = (w1_oihw, gamma1, beta1, w2_oihw, gamma2, beta2)

    fwd = jax.jit(resnet_block_forward)
    out = jax.block_until_ready(fwd(x, params))

    ref = jax.block_until_ready(
        _reference(x, w1_oihw, gamma1, beta1, w2_oihw, gamma2, beta2))
    np.testing.assert_allclose(np.asarray(out), np.asarray(ref), rtol=1e-4, atol=1e-4)

    print("KERNEL_OK")
</pallas_src>

<mosaic_0001>
module attributes {stable_mosaic.version = 11 : i64} {
  func.func @_conv_stats_kernel(%arg0: i32, %arg1: memref<1x4x256xf32, #tpu.memory_space<vmem>>, %arg2: memref<4x36xf32, #tpu.memory_space<vmem>>, %arg3: memref<9x256xf32, #tpu.memory_space<vmem>>, %arg4: memref<1x4x256xf32, #tpu.memory_space<vmem>>, %arg5: memref<1x4x2xf32, #tpu.memory_space<vmem>>) attributes {dimension_semantics = [#tpu.dimension_semantics<parallel>], iteration_bounds = array<i64: 2>, scalar_prefetch = 0 : i64, scratch_operands = 0 : i64, tpu.core_type = #tpu.core_type<tc>, window_params = [{transform_indices = @transform_0, window_bounds = array<i64: 1, 4, 256>}, {pipeline_mode = #tpu.pipeline_mode<synchronous>, transform_indices = @transform_1, window_bounds = array<i64: 4, 36>}, {pipeline_mode = #tpu.pipeline_mode<synchronous>, transform_indices = @transform_2, window_bounds = array<i64: 9, 256>}, {transform_indices = @transform_3, window_bounds = array<i64: 1, 4, 256>}, {transform_indices = @transform_4, window_bounds = array<i64: 1, 4, 2>}]} {
    %c0 = arith.constant 0 : index
    %c0_0 = arith.constant 0 : index
    %c0_1 = arith.constant 0 : index
    %0 = vector.load %arg1[%c0, %c0_0, %c0_1] : memref<1x4x256xf32, #tpu.memory_space<vmem>>, vector<1x4x256xf32>
    %1 = vector.shape_cast %0 : vector<1x4x256xf32> to vector<4x256xf32>
    %c0_2 = arith.constant 0 : index
    %c0_3 = arith.constant 0 : index
    %2 = vector.load %arg2[%c0_2, %c0_3] : memref<4x36xf32, #tpu.memory_space<vmem>>, vector<4x36xf32>
    %c0_4 = arith.constant 0 : index
    %c0_5 = arith.constant 0 : index
    %3 = vector.load %arg3[%c0_4, %c0_5] : memref<9x256xf32, #tpu.memory_space<vmem>>, vector<9x256xf32>
    %cst = arith.constant 0.000000e+00 : f32
    %4 = vector.broadcast %cst : f32 to vector<4x256xf32>
    %c17_i32 = arith.constant 17 : i32
    %5 = tpu.dynamic_rotate %1 by %c17_i32 dim 1 : vector<4x256xf32>, i32 -> vector<4x256xf32>
    %6 = vector.extract_strided_slice %3 {offsets = [0, 0], sizes = [1, 256], strides = [1, 1]} : vector<9x256xf32> to vector<1x256xf32>
    %7 = vector.broadcast %6 : vector<1x256xf32> to vector<4x256xf32>
    %8 = arith.mulf %5, %7 : vector<4x256xf32>
    %9 = vector.extract_strided_slice %2 {offsets = [0, 0], sizes = [4, 1], strides = [1, 1]} : vector<4x36xf32> to vector<4x1xf32>
    %10 = vector.extract_strided_slice %8 {offsets = [0, 0], sizes = [1, 256], strides = [1, 1]} : vector<4x256xf32> to vector<1x256xf32>
    %11 = vector.broadcast %9 : vector<4x1xf32> to vector<4x256xf32>
    %12 = vector.broadcast %10 : vector<1x256xf32> to vector<4x256xf32>
    %13 = arith.mulf %11, %12 : vector<4x256xf32>
    %14 = arith.addf %4, %13 : vector<4x256xf32>
    %15 = vector.extract_strided_slice %2 {offsets = [0, 1], sizes = [4, 1], strides = [1, 1]} : vector<4x36xf32> to vector<4x1xf32>
    %16 = vector.extract_strided_slice %8 {offsets = [1, 0], sizes = [1, 256], strides = [1, 1]} : vector<4x256xf32> to vector<1x256xf32>
    %17 = vector.broadcast %15 : vector<4x1xf32> to vector<4x256xf32>
    %18 = vector.broadcast %16 : vector<1x256xf32> to vector<4x256xf32>
    %19 = arith.mulf %17, %18 : vector<4x256xf32>
    %20 = arith.addf %14, %19 : vector<4x256xf32>
    %21 = vector.extract_strided_slice %2 {offsets = [0, 2], sizes = [4, 1], strides = [1, 1]} : vector<4x36xf32> to vector<4x1xf32>
    %22 = vector.extract_strided_slice %8 {offsets = [2, 0], sizes = [1, 256], strides = [1, 1]} : vector<4x256xf32> to vector<1x256xf32>
    %23 = vector.broadcast %21 : vector<4x1xf32> to vector<4x256xf32>
    %24 = vector.broadcast %22 : vector<1x256xf32> to vector<4x256xf32>
    %25 = arith.mulf %23, %24 : vector<4x256xf32>
    %26 = arith.addf %20, %25 : vector<4x256xf32>
    %27 = vector.extract_strided_slice %2 {offsets = [0, 3], sizes = [4, 1], strides = [1, 1]} : vector<4x36xf32> to vector<4x1xf32>
    %28 = vector.extract_strided_slice %8 {offsets = [3, 0], sizes = [1, 256], strides = [1, 1]} : vector<4x256xf32> to vector<1x256xf32>
    %29 = vector.broadcast %27 : vector<4x1xf32> to vector<4x256xf32>
    %30 = vector.broadcast %28 : vector<1x256xf32> to vector<4x256xf32>
    %31 = arith.mulf %29, %30 : vector<4x256xf32>
    %32 = arith.addf %26, %31 : vector<4x256xf32>
    %c16_i32 = arith.constant 16 : i32
    %33 = tpu.dynamic_rotate %1 by %c16_i32 dim 1 : vector<4x256xf32>, i32 -> vector<4x256xf32>
    %34 = vector.extract_strided_slice %3 {offsets = [1, 0], sizes = [1, 256], strides = [1, 1]} : vector<9x256xf32> to vector<1x256xf32>
    %35 = vector.broadcast %34 : vector<1x256xf32> to vector<4x256xf32>
    %36 = arith.mulf %33, %35 : vector<4x256xf32>
    %37 = vector.extract_strided_slice %2 {offsets = [0, 4], sizes = [4, 1], strides = [1, 1]} : vector<4x36xf32> to vector<4x1xf32>
    %38 = vector.extract_strided_slice %36 {offsets = [0, 0], sizes = [1, 256], strides = [1, 1]} : vector<4x256xf32> to vector<1x256xf32>
    %39 = vector.broadcast %37 : vector<4x1xf32> to vector<4x256xf32>
    %40 = vector.broadcast %38 : vector<1x256xf32> to vector<4x256xf32>
    %41 = arith.mulf %39, %40 : vector<4x256xf32>
    %42 = arith.addf %32, %41 : vector<4x256xf32>
    %43 = vector.extract_strided_slice %2 {offsets = [0, 5], sizes = [4, 1], strides = [1, 1]} : vector<4x36xf32> to vector<4x1xf32>
    %44 = vector.extract_strided_slice %36 {offsets = [1, 0], sizes = [1, 256], strides = [1, 1]} : vector<4x256xf32> to vector<1x256xf32>
    %45 = vector.broadcast %43 : vector<4x1xf32> to vector<4x256xf32>
    %46 = vector.broadcast %44 : vector<1x256xf32> to vector<4x256xf32>
    %47 = arith.mulf %45, %46 : vector<4x256xf32>
    %48 = arith.addf %42, %47 : vector<4x256xf32>
    %49 = vector.extract_strided_slice %2 {offsets = [0, 6], sizes = [4, 1], strides = [1, 1]} : vector<4x36xf32> to vector<4x1xf32>
    %50 = vector.extract_strided_slice %36 {offsets = [2, 0], sizes = [1, 256], strides = [1, 1]} : vector<4x256xf32> to vector<1x256xf32>
    %51 = vector.broadcast %49 : vector<4x1xf32> to vector<4x256xf32>
    %52 = vector.broadcast %50 : vector<1x256xf32> to vector<4x256xf32>
    %53 = arith.mulf %51, %52 : vector<4x256xf32>
    %54 = arith.addf %48, %53 : vector<4x256xf32>
    %55 = vector.extract_strided_slice %2 {offsets = [0, 7], sizes = [4, 1], strides = [1, 1]} : vector<4x36xf32> to vector<4x1xf32>
    %56 = vector.extract_strided_slice %36 {offsets = [3, 0], sizes = [1, 256], strides = [1, 1]} : vector<4x256xf32> to vector<1x256xf32>
    %57 = vector.broadcast %55 : vector<4x1xf32> to vector<4x256xf32>
    %58 = vector.broadcast %56 : vector<1x256xf32> to vector<4x256xf32>
    %59 = arith.mulf %57, %58 : vector<4x256xf32>
    %60 = arith.addf %54, %59 : vector<4x256xf32>
    %c15_i32 = arith.constant 15 : i32
    %61 = tpu.dynamic_rotate %1 by %c15_i32 dim 1 : vector<4x256xf32>, i32 -> vector<4x256xf32>
    %62 = vector.extract_strided_slice %3 {offsets = [2, 0], sizes = [1, 256], strides = [1, 1]} : vector<9x256xf32> to vector<1x256xf32>
    %63 = vector.broadcast %62 : vector<1x256xf32> to vector<4x256xf32>
    %64 = arith.mulf %61, %63 : vector<4x256xf32>
    %65 = vector.extract_strided_slice %2 {offsets = [0, 8], sizes = [4, 1], strides = [1, 1]} : vector<4x36xf32> to vector<4x1xf32>
    %66 = vector.extract_strided_slice %64 {offsets = [0, 0], sizes = [1, 256], strides = [1, 1]} : vector<4x256xf32> to vector<1x256xf32>
    %67 = vector.broadcast %65 : vector<4x1xf32> to vector<4x256xf32>
    %68 = vector.broadcast %66 : vector<1x256xf32> to vector<4x256xf32>
    %69 = arith.mulf %67, %68 : vector<4x256xf32>
    %70 = arith.addf %60, %69 : vector<4x256xf32>
    %71 = vector.extract_strided_slice %2 {offsets = [0, 9], sizes = [4, 1], strides = [1, 1]} : vector<4x36xf32> to vector<4x1xf32>
    %72 = vector.extract_strided_slice %64 {offsets = [1, 0], sizes = [1, 256], strides = [1, 1]} : vector<4x256xf32> to vector<1x256xf32>
    %73 = vector.broadcast %71 : vector<4x1xf32> to vector<4x256xf32>
    %74 = vector.broadcast %72 : vector<1x256xf32> to vector<4x256xf32>
    %75 = arith.mulf %73, %74 : vector<4x256xf32>
    %76 = arith.addf %70, %75 : vector<4x256xf32>
    %77 = vector.extract_strided_slice %2 {offsets = [0, 10], sizes = [4, 1], strides = [1, 1]} : vector<4x36xf32> to vector<4x1xf32>
    %78 = vector.extract_strided_slice %64 {offsets = [2, 0], sizes = [1, 256], strides = [1, 1]} : vector<4x256xf32> to vector<1x256xf32>
    %79 = vector.broadcast %77 : vector<4x1xf32> to vector<4x256xf32>
    %80 = vector.broadcast %78 : vector<1x256xf32> to vector<4x256xf32>
    %81 = arith.mulf %79, %80 : vector<4x256xf32>
    %82 = arith.addf %76, %81 : vector<4x256xf32>
    %83 = vector.extract_strided_slice %2 {offsets = [0, 11], sizes = [4, 1], strides = [1, 1]} : vector<4x36xf32> to vector<4x1xf32>
    %84 = vector.extract_strided_slice %64 {offsets = [3, 0], sizes = [1, 256], strides = [1, 1]} : vector<4x256xf32> to vector<1x256xf32>
    %85 = vector.broadcast %83 : vector<4x1xf32> to vector<4x256xf32>
    %86 = vector.broadcast %84 : vector<1x256xf32> to vector<4x256xf32>
    %87 = arith.mulf %85, %86 : vector<4x256xf32>
    %88 = arith.addf %82, %87 : vector<4x256xf32>
    %c1_i32 = arith.constant 1 : i32
    %89 = tpu.dynamic_rotate %1 by %c1_i32 dim 1 : vector<4x256xf32>, i32 -> vector<4x256xf32>
    %90 = vector.extract_strided_slice %3 {offsets = [3, 0], sizes = [1, 256], strides = [1, 1]} : vector<9x256xf32> to vector<1x256xf32>
    %91 = vector.broadcast %90 : vector<1x256xf32> to vector<4x256xf32>
    %92 = arith.mulf %89, %91 : vector<4x256xf32>
    %93 = vector.extract_strided_slice %2 {offsets = [0, 12], sizes = [4, 1], strides = [1, 1]} : vector<4x36xf32> to vector<4x1xf32>
    %94 = vector.extract_strided_slice %92 {offsets = [0, 0], sizes = [1, 256], strides = [1, 1]} : vector<4x256xf32> to vector<1x256xf32>
    %95 = vector.broadcast %93 : vector<4x1xf32> to vector<4x256xf32>
    %96 = vector.broadcast %94 : vector<1x256xf32> to vector<4x256xf32>
    %97 = arith.mulf %95, %96 : vector<4x256xf32>
    %98 = arith.addf %88, %97 : vector<4x256xf32>
    %99 = vector.extract_strided_slice %2 {offsets = [0, 13], sizes = [4, 1], strides = [1, 1]} : vector<4x36xf32> to vector<4x1xf32>
    %100 = vector.extract_strided_slice %92 {offsets = [1, 0], sizes = [1, 256], strides = [1, 1]} : vector<4x256xf32> to vector<1x256xf32>
    %101 = vector.broadcast %99 : vector<4x1xf32> to vector<4x256xf32>
    %102 = vector.broadcast %100 : vector<1x256xf32> to vector<4x256xf32>
    %103 = arith.mulf %101, %102 : vector<4x256xf32>
    %104 = arith.addf %98, %103 : vector<4x256xf32>
    %105 = vector.extract_strided_slice %2 {offsets = [0, 14], sizes = [4, 1], strides = [1, 1]} : vector<4x36xf32> to vector<4x1xf32>
    %106 = vector.extract_strided_slice %92 {offsets = [2, 0], sizes = [1, 256], strides = [1, 1]} : vector<4x256xf32> to vector<1x256xf32>
    %107 = vector.broadcast %105 : vector<4x1xf32> to vector<4x256xf32>
    %108 = vector.broadcast %106 : vector<1x256xf32> to vector<4x256xf32>
    %109 = arith.mulf %107, %108 : vector<4x256xf32>
    %110 = arith.addf %104, %109 : vector<4x256xf32>
    %111 = vector.extract_strided_slice %2 {offsets = [0, 15], sizes = [4, 1], strides = [1, 1]} : vector<4x36xf32> to vector<4x1xf32>
    %112 = vector.extract_strided_slice %92 {offsets = [3, 0], sizes = [1, 256], strides = [1, 1]} : vector<4x256xf32> to vector<1x256xf32>
    %113 = vector.broadcast %111 : vector<4x1xf32> to vector<4x256xf32>
    %114 = vector.broadcast %112 : vector<1x256xf32> to vector<4x256xf32>
    %115 = arith.mulf %113, %114 : vector<4x256xf32>
    %116 = arith.addf %110, %115 : vector<4x256xf32>
    %117 = vector.extract_strided_slice %2 {offsets = [0, 16], sizes = [4, 1], strides = [1, 1]} : vector<4x36xf32> to vector<4x1xf32>
    %118 = vector.extract_strided_slice %1 {offsets = [0, 0], sizes = [1, 256], strides = [1, 1]} : vector<4x256xf32> to vector<1x256xf32>
    %119 = vector.broadcast %117 : vector<4x1xf32> to vector<4x256xf32>
    %120 = vector.broadcast %118 : vector<1x256xf32> to vector<4x256xf32>
    %121 = arith.mulf %119, %120 : vector<4x256xf32>
    %122 = arith.addf %116, %121 : vector<4x256xf32>
    %123 = vector.extract_strided_slice %2 {offsets = [0, 17], sizes = [4, 1], strides = [1, 1]} : vector<4x36xf32> to vector<4x1xf32>
    %124 = vector.extract_strided_slice %1 {offsets = [1, 0], sizes = [1, 256], strides = [1, 1]} : vector<4x256xf32> to vector<1x256xf32>
    %125 = vector.broadcast %123 : vector<4x1xf32> to vector<4x256xf32>
    %126 = vector.broadcast %124 : vector<1x256xf32> to vector<4x256xf32>
    %127 = arith.mulf %125, %126 : vector<4x256xf32>
    %128 = arith.addf %122, %127 : vector<4x256xf32>
    %129 = vector.extract_strided_slice %2 {offsets = [0, 18], sizes = [4, 1], strides = [1, 1]} : vector<4x36xf32> to vector<4x1xf32>
    %130 = vector.extract_strided_slice %1 {offsets = [2, 0], sizes = [1, 256], strides = [1, 1]} : vector<4x256xf32> to vector<1x256xf32>
    %131 = vector.broadcast %129 : vector<4x1xf32> to vector<4x256xf32>
    %132 = vector.broadcast %130 : vector<1x256xf32> to vector<4x256xf32>
    %133 = arith.mulf %131, %132 : vector<4x256xf32>
    %134 = arith.addf %128, %133 : vector<4x256xf32>
    %135 = vector.extract_strided_slice %2 {offsets = [0, 19], sizes = [4, 1], strides = [1, 1]} : vector<4x36xf32> to vector<4x1xf32>
    %136 = vector.extract_strided_slice %1 {offsets = [3, 0], sizes = [1, 256], strides = [1, 1]} : vector<4x256xf32> to vector<1x256xf32>
    %137 = vector.broadcast %135 : vector<4x1xf32> to vector<4x256xf32>
    %138 = vector.broadcast %136 : vector<1x256xf32> to vector<4x256xf32>
    %139 = arith.mulf %137, %138 : vector<4x256xf32>
    %140 = arith.addf %134, %139 : vector<4x256xf32>
    %c255_i32 = arith.constant 255 : i32
    %141 = tpu.dynamic_rotate %1 by %c255_i32 dim 1 : vector<4x256xf32>, i32 -> vector<4x256xf32>
    %142 = vector.extract_strided_slice %3 {offsets = [5, 0], sizes = [1, 256], strides = [1, 1]} : vector<9x256xf32> to vector<1x256xf32>
    %143 = vector.broadcast %142 : vector<1x256xf32> to vector<4x256xf32>
    %144 = arith.mulf %141, %143 : vector<4x256xf32>
    %145 = vector.extract_strided_slice %2 {offsets = [0, 20], sizes = [4, 1], strides = [1, 1]} : vector<4x36xf32> to vector<4x1xf32>
    %146 = vector.extract_strided_slice %144 {offsets = [0, 0], sizes = [1, 256], strides = [1, 1]} : vector<4x256xf32> to vector<1x256xf32>
    %147 = vector.broadcast %145 : vector<4x1xf32> to vector<4x256xf32>
    %148 = vector.broadcast %146 : vector<1x256xf32> to vector<4x256xf32>
    %149 = arith.mulf %147, %148 : vector<4x256xf32>
    %150 = arith.addf %140, %149 : vector<4x256xf32>
    %151 = vector.extract_strided_slice %2 {offsets = [0, 21], sizes = [4, 1], strides = [1, 1]} : vector<4x36xf32> to vector<4x1xf32>
    %152 = vector.extract_strided_slice %144 {offsets = [1, 0], sizes = [1, 256], strides = [1, 1]} : vector<4x256xf32> to vector<1x256xf32>
    %153 = vector.broadcast %151 : vector<4x1xf32> to vector<4x256xf32>
    %154 = vector.broadcast %152 : vector<1x256xf32> to vector<4x256xf32>
    %155 = arith.mulf %153, %154 : vector<4x256xf32>
    %156 = arith.addf %150, %155 : vector<4x256xf32>
    %157 = vector.extract_strided_slice %2 {offsets = [0, 22], sizes = [4, 1], strides = [1, 1]} : vector<4x36xf32> to vector<4x1xf32>
    %158 = vector.extract_strided_slice %144 {offsets = [2, 0], sizes = [1, 256], strides = [1, 1]} : vector<4x256xf32> to vector<1x256xf32>
    %159 = vector.broadcast %157 : vector<4x1xf32> to vector<4x256xf32>
    %160 = vector.broadcast %158 : vector<1x256xf32> to vector<4x256xf32>
    %161 = arith.mulf %159, %160 : vector<4x256xf32>
    %162 = arith.addf %156, %161 : vector<4x256xf32>
    %163 = vector.extract_strided_slice %2 {offsets = [0, 23], sizes = [4, 1], strides = [1, 1]} : vector<4x36xf32> to vector<4x1xf32>
    %164 = vector.extract_strided_slice %144 {offsets = [3, 0], sizes = [1, 256], strides = [1, 1]} : vector<4x256xf32> to vector<1x256xf32>
    %165 = vector.broadcast %163 : vector<4x1xf32> to vector<4x256xf32>
    %166 = vector.broadcast %164 : vector<1x256xf32> to vector<4x256xf32>
    %167 = arith.mulf %165, %166 : vector<4x256xf32>
    %168 = arith.addf %162, %167 : vector<4x256xf32>
    %c241_i32 = arith.constant 241 : i32
    %169 = tpu.dynamic_rotate %1 by %c241_i32 dim 1 : vector<4x256xf32>, i32 -> vector<4x256xf32>
    %170 = vector.extract_strided_slice %3 {offsets = [6, 0], sizes = [1, 256], strides = [1, 1]} : vector<9x256xf32> to vector<1x256xf32>
    %171 = vector.broadcast %170 : vector<1x256xf32> to vector<4x256xf32>
    %172 = arith.mulf %169, %171 : vector<4x256xf32>
    %173 = vector.extract_strided_slice %2 {offsets = [0, 24], sizes = [4, 1], strides = [1, 1]} : vector<4x36xf32> to vector<4x1xf32>
    %174 = vector.extract_strided_slice %172 {offsets = [0, 0], sizes = [1, 256], strides = [1, 1]} : vector<4x256xf32> to vector<1x256xf32>
    %175 = vector.broadcast %173 : vector<4x1xf32> to vector<4x256xf32>
    %176 = vector.broadcast %174 : vector<1x256xf32> to vector<4x256xf32>
    %177 = arith.mulf %175, %176 : vector<4x256xf32>
    %178 = arith.addf %168, %177 : vector<4x256xf32>
    %179 = vector.extract_strided_slice %2 {offsets = [0, 25], sizes = [4, 1], strides = [1, 1]} : vector<4x36xf32> to vector<4x1xf32>
    %180 = vector.extract_strided_slice %172 {offsets = [1, 0], sizes = [1, 256], strides = [1, 1]} : vector<4x256xf32> to vector<1x256xf32>
    %181 = vector.broadcast %179 : vector<4x1xf32> to vector<4x256xf32>
    %182 = vector.broadcast %180 : vector<1x256xf32> to vector<4x256xf32>
    %183 = arith.mulf %181, %182 : vector<4x256xf32>
    %184 = arith.addf %178, %183 : vector<4x256xf32>
    %185 = vector.extract_strided_slice %2 {offsets = [0, 26], sizes = [4, 1], strides = [1, 1]} : vector<4x36xf32> to vector<4x1xf32>
    %186 = vector.extract_strided_slice %172 {offsets = [2, 0], sizes = [1, 256], strides = [1, 1]} : vector<4x256xf32> to vector<1x256xf32>
    %187 = vector.broadcast %185 : vector<4x1xf32> to vector<4x256xf32>
    %188 = vector.broadcast %186 : vector<1x256xf32> to vector<4x256xf32>
    %189 = arith.mulf %187, %188 : vector<4x256xf32>
    %190 = arith.addf %184, %189 : vector<4x256xf32>
    %191 = vector.extract_strided_slice %2 {offsets = [0, 27], sizes = [4, 1], strides = [1, 1]} : vector<4x36xf32> to vector<4x1xf32>
    %192 = vector.extract_strided_slice %172 {offsets = [3, 0], sizes = [1, 256], strides = [1, 1]} : vector<4x256xf32> to vector<1x256xf32>
    %193 = vector.broadcast %191 : vector<4x1xf32> to vector<4x256xf32>
    %194 = vector.broadcast %192 : vector<1x256xf32> to vector<4x256xf32>
    %195 = arith.mulf %193, %194 : vector<4x256xf32>
    %196 = arith.addf %190, %195 : vector<4x256xf32>
    %c240_i32 = arith.constant 240 : i32
    %197 = tpu.dynamic_rotate %1 by %c240_i32 dim 1 : vector<4x256xf32>, i32 -> vector<4x256xf32>
    %198 = vector.extract_strided_slice %3 {offsets = [7, 0], sizes = [1, 256], strides = [1, 1]} : vector<9x256xf32> to vector<1x256xf32>
    %199 = vector.broadcast %198 : vector<1x256xf32> to vector<4x256xf32>
    %200 = arith.mulf %197, %199 : vector<4x256xf32>
    %201 = vector.extract_strided_slice %2 {offsets = [0, 28], sizes = [4, 1], strides = [1, 1]} : vector<4x36xf32> to vector<4x1xf32>
    %202 = vector.extract_strided_slice %200 {offsets = [0, 0], sizes = [1, 256], strides = [1, 1]} : vector<4x256xf32> to vector<1x256xf32>
    %203 = vector.broadcast %201 : vector<4x1xf32> to vector<4x256xf32>
    %204 = vector.broadcast %202 : vector<1x256xf32> to vector<4x256xf32>
    %205 = arith.mulf %203, %204 : vector<4x256xf32>
    %206 = arith.addf %196, %205 : vector<4x256xf32>
    %207 = vector.extract_strided_slice %2 {offsets = [0, 29], sizes = [4, 1], strides = [1, 1]} : vector<4x36xf32> to vector<4x1xf32>
    %208 = vector.extract_strided_slice %200 {offsets = [1, 0], sizes = [1, 256], strides = [1, 1]} : vector<4x256xf32> to vector<1x256xf32>
    %209 = vector.broadcast %207 : vector<4x1xf32> to vector<4x256xf32>
    %210 = vector.broadcast %208 : vector<1x256xf32> to vector<4x256xf32>
    %211 = arith.mulf %209, %210 : vector<4x256xf32>
    %212 = arith.addf %206, %211 : vector<4x256xf32>
    %213 = vector.extract_strided_slice %2 {offsets = [0, 30], sizes = [4, 1], strides = [1, 1]} : vector<4x36xf32> to vector<4x1xf32>
    %214 = vector.extract_strided_slice %200 {offsets = [2, 0], sizes = [1, 256], strides = [1, 1]} : vector<4x256xf32> to vector<1x256xf32>
    %215 = vector.broadcast %213 : vector<4x1xf32> to vector<4x256xf32>
    %216 = vector.broadcast %214 : vector<1x256xf32> to vector<4x256xf32>
    %217 = arith.mulf %215, %216 : vector<4x256xf32>
    %218 = arith.addf %212, %217 : vector<4x256xf32>
    %219 = vector.extract_strided_slice %2 {offsets = [0, 31], sizes = [4, 1], strides = [1, 1]} : vector<4x36xf32> to vector<4x1xf32>
    %220 = vector.extract_strided_slice %200 {offsets = [3, 0], sizes = [1, 256], strides = [1, 1]} : vector<4x256xf32> to vector<1x256xf32>
    %221 = vector.broadcast %219 : vector<4x1xf32> to vector<4x256xf32>
    %222 = vector.broadcast %220 : vector<1x256xf32> to vector<4x256xf32>
    %223 = arith.mulf %221, %222 : vector<4x256xf32>
    %224 = arith.addf %218, %223 : vector<4x256xf32>
    %c239_i32 = arith.constant 239 : i32
    %225 = tpu.dynamic_rotate %1 by %c239_i32 dim 1 : vector<4x256xf32>, i32 -> vector<4x256xf32>
    %226 = vector.extract_strided_slice %3 {offsets = [8, 0], sizes = [1, 256], strides = [1, 1]} : vector<9x256xf32> to vector<1x256xf32>
    %227 = vector.broadcast %226 : vector<1x256xf32> to vector<4x256xf32>
    %228 = arith.mulf %225, %227 : vector<4x256xf32>
    %229 = vector.extract_strided_slice %2 {offsets = [0, 32], sizes = [4, 1], strides = [1, 1]} : vector<4x36xf32> to vector<4x1xf32>
    %230 = vector.extract_strided_slice %228 {offsets = [0, 0], sizes = [1, 256], strides = [1, 1]} : vector<4x256xf32> to vector<1x256xf32>
    %231 = vector.broadcast %229 : vector<4x1xf32> to vector<4x256xf32>
    %232 = vector.broadcast %230 : vector<1x256xf32> to vector<4x256xf32>
    %233 = arith.mulf %231, %232 : vector<4x256xf32>
    %234 = arith.addf %224, %233 : vector<4x256xf32>
    %235 = vector.extract_strided_slice %2 {offsets = [0, 33], sizes = [4, 1], strides = [1, 1]} : vector<4x36xf32> to vector<4x1xf32>
    %236 = vector.extract_strided_slice %228 {offsets = [1, 0], sizes = [1, 256], strides = [1, 1]} : vector<4x256xf32> to vector<1x256xf32>
    %237 = vector.broadcast %235 : vector<4x1xf32> to vector<4x256xf32>
    %238 = vector.broadcast %236 : vector<1x256xf32> to vector<4x256xf32>
    %239 = arith.mulf %237, %238 : vector<4x256xf32>
    %240 = arith.addf %234, %239 : vector<4x256xf32>
    %241 = vector.extract_strided_slice %2 {offsets = [0, 34], sizes = [4, 1], strides = [1, 1]} : vector<4x36xf32> to vector<4x1xf32>
    %242 = vector.extract_strided_slice %228 {offsets = [2, 0], sizes = [1, 256], strides = [1, 1]} : vector<4x256xf32> to vector<1x256xf32>
    %243 = vector.broadcast %241 : vector<4x1xf32> to vector<4x256xf32>
    %244 = vector.broadcast %242 : vector<1x256xf32> to vector<4x256xf32>
    %245 = arith.mulf %243, %244 : vector<4x256xf32>
    %246 = arith.addf %240, %245 : vector<4x256xf32>
    %247 = vector.extract_strided_slice %2 {offsets = [0, 35], sizes = [4, 1], strides = [1, 1]} : vector<4x36xf32> to vector<4x1xf32>
    %248 = vector.extract_strided_slice %228 {offsets = [3, 0], sizes = [1, 256], strides = [1, 1]} : vector<4x256xf32> to vector<1x256xf32>
    %249 = vector.broadcast %247 : vector<4x1xf32> to vector<4x256xf32>
    %250 = vector.broadcast %248 : vector<1x256xf32> to vector<4x256xf32>
    %251 = arith.mulf %249, %250 : vector<4x256xf32>
    %252 = arith.addf %246, %251 : vector<4x256xf32>
    %c0_6 = arith.constant 0 : index
    %c0_7 = arith.constant 0 : index
    %c0_8 = arith.constant 0 : index
    %253 = vector.load %arg4[%c0_6, %c0_7, %c0_8] : memref<1x4x256xf32, #tpu.memory_space<vmem>>, vector<1x4x256xf32>
    %254 = vector.shape_cast %253 : vector<1x4x256xf32> to vector<4x256xf32>
    %255 = vector.shape_cast %252 : vector<4x256xf32> to vector<1x4x256xf32>
    tpu.vector_store %arg4[%c0_6, %c0_7, %c0_8], %255 {strides = array<i32>} : memref<1x4x256xf32, #tpu.memory_space<vmem>>, vector<1x4x256xf32>,
    %cst_9 = arith.constant dense<0.000000e+00> : vector<4xf32>
    %256 = vector.multi_reduction <add>, %252, %cst_9 [1] : vector<4x256xf32> to vector<4xf32>
    %257 = vector.shape_cast %256 : vector<4xf32> to vector<4x1xf32>
    %c0_10 = arith.constant 0 : index
    %c0_11 = arith.constant 0 : index
    %c0_12 = arith.constant 0 : index
    %258 = vector.load %arg5[%c0_10, %c0_11, %c0_12] : memref<1x4x2xf32, #tpu.memory_space<vmem>>, vector<1x4x1xf32>
    %259 = vector.shape_cast %258 : vector<1x4x1xf32> to vector<4x1xf32>
    %260 = vector.shape_cast %257 : vector<4x1xf32> to vector<1x4x1xf32>
    tpu.vector_store %arg5[%c0_10, %c0_11, %c0_12], %260 {strides = array<i32>} : memref<1x4x2xf32, #tpu.memory_space<vmem>>, vector<1x4x1xf32>,
    %261 = arith.mulf %252, %252 : vector<4x256xf32>
    %cst_13 = arith.constant dense<0.000000e+00> : vector<4xf32>
    %262 = vector.multi_reduction <add>, %261, %cst_13 [1] : vector<4x256xf32> to vector<4xf32>
    %263 = vector.shape_cast %262 : vector<4xf32> to vector<4x1xf32>
    %c0_14 = arith.constant 0 : index
    %c0_15 = arith.constant 0 : index
    %c1 = arith.constant 1 : index
    %264 = vector.load %arg5[%c0_14, %c0_15, %c1] : memref<1x4x2xf32, #tpu.memory_space<vmem>>, vector<1x4x1xf32>
    %265 = vector.shape_cast %264 : vector<1x4x1xf32> to vector<4x1xf32>
    %266 = vector.shape_cast %263 : vector<4x1xf32> to vector<1x4x1xf32>
    tpu.vector_store %arg5[%c0_14, %c0_15, %c1], %266 {strides = array<i32>} : memref<1x4x2xf32, #tpu.memory_space<vmem>>, vector<1x4x1xf32>,
    return
  }
  func.func @transform_0(%arg0: i32) -> (i32, i32, i32) {
    %c0_i32 = arith.constant 0 : i32
    %c0_i32_0 = arith.constant 0 : i32
    %c0_i32_1 = arith.constant 0 : i32
    return %arg0, %c0_i32, %c0_i32_0 : i32, i32, i32
  }
  func.func @transform_1(%arg0: i32) -> (i32, i32) {
    %c0_i32 = arith.constant 0 : i32
    %c0_i32_0 = arith.constant 0 : i32
    %c0_i32_1 = arith.constant 0 : i32
    return %c0_i32, %c0_i32_0 : i32, i32
  }
  func.func @transform_2(%arg0: i32) -> (i32, i32) {
    %c0_i32 = arith.constant 0 : i32
    %c0_i32_0 = arith.constant 0 : i32
    %c0_i32_1 = arith.constant 0 : i32
    return %c0_i32, %c0_i32_0 : i32, i32
  }
  func.func @transform_3(%arg0: i32) -> (i32, i32, i32) {
    %c0_i32 = arith.constant 0 : i32
    %c0_i32_0 = arith.constant 0 : i32
    %c0_i32_1 = arith.constant 0 : i32
    return %arg0, %c0_i32, %c0_i32_0 : i32, i32, i32
  }
  func.func @transform_4(%arg0: i32) -> (i32, i32, i32) {
    %c0_i32 = arith.constant 0 : i32
    %c0_i32_0 = arith.constant 0 : i32
    %c0_i32_1 = arith.constant 0 : i32
    return %arg0, %c0_i32, %c0_i32_0 : i32, i32, i32
  }
}

module attributes {stable_mosaic.version = 11 : i64} {
  func.func @_bn_add_kernel(%arg0: i32, %arg1: memref<1x4x256xf32, #tpu.memory_space<vmem>>, %arg2: memref<4x1xf32, #tpu.memory_space<vmem>>, %arg3: memref<4x1xf32, #tpu.memory_space<vmem>>, %arg4: memref<1x4x256xf32, #tpu.memory_space<vmem>>, %arg5: memref<1x4x256xf32, #tpu.memory_space<vmem>>) attributes {dimension_semantics = [#tpu.dimension_semantics<parallel>], iteration_bounds = array<i64: 2>, scalar_prefetch = 0 : i64, scratch_operands = 0 : i64, tpu.core_type = #tpu.core_type<tc>, window_params = [{transform_indices = @transform_0, window_bounds = array<i64: 1, 4, 256>}, {pipeline_mode = #tpu.pipeline_mode<synchronous>, transform_indices = @transform_1, window_bounds = array<i64: 4, 1>}, {pipeline_mode = #tpu.pipeline_mode<synchronous>, transform_indices = @transform_2, window_bounds = array<i64: 4, 1>}, {transform_indices = @transform_3, window_bounds = array<i64: 1, 4, 256>}, {transform_indices = @transform_4, window_bounds = array<i64: 1, 4, 256>}]} {
    %c0 = arith.constant 0 : index
    %c0_0 = arith.constant 0 : index
    %c0_1 = arith.constant 0 : index
    %0 = vector.load %arg1[%c0, %c0_0, %c0_1] : memref<1x4x256xf32, #tpu.memory_space<vmem>>, vector<1x4x256xf32>
    %1 = vector.shape_cast %0 : vector<1x4x256xf32> to vector<4x256xf32>
    %c0_2 = arith.constant 0 : index
    %c0_3 = arith.constant 0 : index
    %2 = vector.load %arg2[%c0_2, %c0_3] : memref<4x1xf32, #tpu.memory_space<vmem>>, vector<4x1xf32>
    %3 = vector.broadcast %2 : vector<4x1xf32> to vector<4x256xf32>
    %4 = arith.mulf %1, %3 : vector<4x256xf32>
    %c0_4 = arith.constant 0 : index
    %c0_5 = arith.constant 0 : index
    %5 = vector.load %arg3[%c0_4, %c0_5] : memref<4x1xf32, #tpu.memory_space<vmem>>, vector<4x1xf32>
    %6 = vector.broadcast %5 : vector<4x1xf32> to vector<4x256xf32>
    %7 = arith.addf %4, %6 : vector<4x256xf32>
    %c0_6 = arith.constant 0 : index
    %c0_7 = arith.constant 0 : index
    %c0_8 = arith.constant 0 : index
    %8 = vector.load %arg4[%c0_6, %c0_7, %c0_8] : memref<1x4x256xf32, #tpu.memory_space<vmem>>, vector<1x4x256xf32>
    %9 = vector.shape_cast %8 : vector<1x4x256xf32> to vector<4x256xf32>
    %10 = arith.addf %7, %9 : vector<4x256xf32>
    %c0_9 = arith.constant 0 : index
    %c0_10 = arith.constant 0 : index
    %c0_11 = arith.constant 0 : index
    %11 = vector.load %arg5[%c0_9, %c0_10, %c0_11] : memref<1x4x256xf32, #tpu.memory_space<vmem>>, vector<1x4x256xf32>
    %12 = vector.shape_cast %11 : vector<1x4x256xf32> to vector<4x256xf32>
    %13 = vector.shape_cast %10 : vector<4x256xf32> to vector<1x4x256xf32>
    tpu.vector_store %arg5[%c0_9, %c0_10, %c0_11], %13 {strides = array<i32>} : memref<1x4x256xf32, #tpu.memory_space<vmem>>, vector<1x4x256xf32>,
    return
  }
  func.func @transform_0(%arg0: i32) -> (i32, i32, i32) {
    %c0_i32 = arith.constant 0 : i32
    %c0_i32_0 = arith.constant 0 : i32
    %c0_i32_1 = arith.constant 0 : i32
    return %arg0, %c0_i32, %c0_i32_0 : i32, i32, i32
  }
  func.func @transform_1(%arg0: i32) -> (i32, i32) {
    %c0_i32 = arith.constant 0 : i32
    %c0_i32_0 = arith.constant 0 : i32
    %c0_i32_1 = arith.constant 0 : i32
    return %c0_i32, %c0_i32_0 : i32, i32
  }
  func.func @transform_2(%arg0: i32) -> (i32, i32) {
    %c0_i32 = arith.constant 0 : i32
    %c0_i32_0 = arith.constant 0 : i32
    %c0_i32_1 = arith.constant 0 : i32
    return %c0_i32, %c0_i32_0 : i32, i32
  }
  func.func @transform_3(%arg0: i32) -> (i32, i32, i32) {
    %c0_i32 = arith.constant 0 : i32
    %c0_i32_0 = arith.constant 0 : i32
    %c0_i32_1 = arith.constant 0 : i32
    return %arg0, %c0_i32, %c0_i32_0 : i32, i32, i32
  }
  func.func @transform_4(%arg0: i32) -> (i32, i32, i32) {
    %c0_i32 = arith.constant 0 : i32
    %c0_i32_0 = arith.constant 0 : i32
    %c0_i32_1 = arith.constant 0 : i32
    return %arg0, %c0_i32, %c0_i32_0 : i32, i32, i32
  }
}

module attributes {stable_mosaic.version = 11 : i64} {
  func.func @_bn_relu_conv_stats_kernel(%arg0: i32, %arg1: memref<1x4x256xf32, #tpu.memory_space<vmem>>, %arg2: memref<4x1xf32, #tpu.memory_space<vmem>>, %arg3: memref<4x1xf32, #tpu.memory_space<vmem>>, %arg4: memref<4x36xf32, #tpu.memory_space<vmem>>, %arg5: memref<9x256xf32, #tpu.memory_space<vmem>>, %arg6: memref<1x4x256xf32, #tpu.memory_space<vmem>>, %arg7: memref<1x4x2xf32, #tpu.memory_space<vmem>>) attributes {dimension_semantics = [#tpu.dimension_semantics<parallel>], iteration_bounds = array<i64: 2>, scalar_prefetch = 0 : i64, scratch_operands = 0 : i64, tpu.core_type = #tpu.core_type<tc>, window_params = [{transform_indices = @transform_0, window_bounds = array<i64: 1, 4, 256>}, {pipeline_mode = #tpu.pipeline_mode<synchronous>, transform_indices = @transform_1, window_bounds = array<i64: 4, 1>}, {pipeline_mode = #tpu.pipeline_mode<synchronous>, transform_indices = @transform_2, window_bounds = array<i64: 4, 1>}, {pipeline_mode = #tpu.pipeline_mode<synchronous>, transform_indices = @transform_3, window_bounds = array<i64: 4, 36>}, {pipeline_mode = #tpu.pipeline_mode<synchronous>, transform_indices = @transform_4, window_bounds = array<i64: 9, 256>}, {transform_indices = @transform_5, window_bounds = array<i64: 1, 4, 256>}, {transform_indices = @transform_6, window_bounds = array<i64: 1, 4, 2>}]} {
    %c0 = arith.constant 0 : index
    %c0_0 = arith.constant 0 : index
    %c0_1 = arith.constant 0 : index
    %0 = vector.load %arg1[%c0, %c0_0, %c0_1] : memref<1x4x256xf32, #tpu.memory_space<vmem>>, vector<1x4x256xf32>
    %1 = vector.shape_cast %0 : vector<1x4x256xf32> to vector<4x256xf32>
    %c0_2 = arith.constant 0 : index
    %c0_3 = arith.constant 0 : index
    %2 = vector.load %arg2[%c0_2, %c0_3] : memref<4x1xf32, #tpu.memory_space<vmem>>, vector<4x1xf32>
    %3 = vector.broadcast %2 : vector<4x1xf32> to vector<4x256xf32>
    %4 = arith.mulf %1, %3 : vector<4x256xf32>
    %c0_4 = arith.constant 0 : index
    %c0_5 = arith.constant 0 : index
    %5 = vector.load %arg3[%c0_4, %c0_5] : memref<4x1xf32, #tpu.memory_space<vmem>>, vector<4x1xf32>
    %6 = vector.broadcast %5 : vector<4x1xf32> to vector<4x256xf32>
    %7 = arith.addf %4, %6 : vector<4x256xf32>
    %cst = arith.constant 0.000000e+00 : f32
    %8 = vector.broadcast %cst : f32 to vector<4x256xf32>
    %9 = arith.maximumf %7, %8 : vector<4x256xf32>
    %c0_6 = arith.constant 0 : index
    %c0_7 = arith.constant 0 : index
    %10 = vector.load %arg4[%c0_6, %c0_7] : memref<4x36xf32, #tpu.memory_space<vmem>>, vector<4x36xf32>
    %c0_8 = arith.constant 0 : index
    %c0_9 = arith.constant 0 : index
    %11 = vector.load %arg5[%c0_8, %c0_9] : memref<9x256xf32, #tpu.memory_space<vmem>>, vector<9x256xf32>
    %cst_10 = arith.constant 0.000000e+00 : f32
    %12 = vector.broadcast %cst_10 : f32 to vector<4x256xf32>
    %c17_i32 = arith.constant 17 : i32
    %13 = tpu.dynamic_rotate %9 by %c17_i32 dim 1 : vector<4x256xf32>, i32 -> vector<4x256xf32>
    %14 = vector.extract_strided_slice %11 {offsets = [0, 0], sizes = [1, 256], strides = [1, 1]} : vector<9x256xf32> to vector<1x256xf32>
    %15 = vector.broadcast %14 : vector<1x256xf32> to vector<4x256xf32>
    %16 = arith.mulf %13, %15 : vector<4x256xf32>
    %17 = vector.extract_strided_slice %10 {offsets = [0, 0], sizes = [4, 1], strides = [1, 1]} : vector<4x36xf32> to vector<4x1xf32>
    %18 = vector.extract_strided_slice %16 {offsets = [0, 0], sizes = [1, 256], strides = [1, 1]} : vector<4x256xf32> to vector<1x256xf32>
    %19 = vector.broadcast %17 : vector<4x1xf32> to vector<4x256xf32>
    %20 = vector.broadcast %18 : vector<1x256xf32> to vector<4x256xf32>
    %21 = arith.mulf %19, %20 : vector<4x256xf32>
    %22 = arith.addf %12, %21 : vector<4x256xf32>
    %23 = vector.extract_strided_slice %10 {offsets = [0, 1], sizes = [4, 1], strides = [1, 1]} : vector<4x36xf32> to vector<4x1xf32>
    %24 = vector.extract_strided_slice %16 {offsets = [1, 0], sizes = [1, 256], strides = [1, 1]} : vector<4x256xf32> to vector<1x256xf32>
    %25 = vector.broadcast %23 : vector<4x1xf32> to vector<4x256xf32>
    %26 = vector.broadcast %24 : vector<1x256xf32> to vector<4x256xf32>
    %27 = arith.mulf %25, %26 : vector<4x256xf32>
    %28 = arith.addf %22, %27 : vector<4x256xf32>
    %29 = vector.extract_strided_slice %10 {offsets = [0, 2], sizes = [4, 1], strides = [1, 1]} : vector<4x36xf32> to vector<4x1xf32>
    %30 = vector.extract_strided_slice %16 {offsets = [2, 0], sizes = [1, 256], strides = [1, 1]} : vector<4x256xf32> to vector<1x256xf32>
    %31 = vector.broadcast %29 : vector<4x1xf32> to vector<4x256xf32>
    %32 = vector.broadcast %30 : vector<1x256xf32> to vector<4x256xf32>
    %33 = arith.mulf %31, %32 : vector<4x256xf32>
    %34 = arith.addf %28, %33 : vector<4x256xf32>
    %35 = vector.extract_strided_slice %10 {offsets = [0, 3], sizes = [4, 1], strides = [1, 1]} : vector<4x36xf32> to vector<4x1xf32>
    %36 = vector.extract_strided_slice %16 {offsets = [3, 0], sizes = [1, 256], strides = [1, 1]} : vector<4x256xf32> to vector<1x256xf32>
    %37 = vector.broadcast %35 : vector<4x1xf32> to vector<4x256xf32>
    %38 = vector.broadcast %36 : vector<1x256xf32> to vector<4x256xf32>
    %39 = arith.mulf %37, %38 : vector<4x256xf32>
    %40 = arith.addf %34, %39 : vector<4x256xf32>
    %c16_i32 = arith.constant 16 : i32
    %41 = tpu.dynamic_rotate %9 by %c16_i32 dim 1 : vector<4x256xf32>, i32 -> vector<4x256xf32>
    %42 = vector.extract_strided_slice %11 {offsets = [1, 0], sizes = [1, 256], strides = [1, 1]} : vector<9x256xf32> to vector<1x256xf32>
    %43 = vector.broadcast %42 : vector<1x256xf32> to vector<4x256xf32>
    %44 = arith.mulf %41, %43 : vector<4x256xf32>
    %45 = vector.extract_strided_slice %10 {offsets = [0, 4], sizes = [4, 1], strides = [1, 1]} : vector<4x36xf32> to vector<4x1xf32>
    %46 = vector.extract_strided_slice %44 {offsets = [0, 0], sizes = [1, 256], strides = [1, 1]} : vector<4x256xf32> to vector<1x256xf32>
    %47 = vector.broadcast %45 : vector<4x1xf32> to vector<4x256xf32>
    %48 = vector.broadcast %46 : vector<1x256xf32> to vector<4x256xf32>
    %49 = arith.mulf %47, %48 : vector<4x256xf32>
    %50 = arith.addf %40, %49 : vector<4x256xf32>
    %51 = vector.extract_strided_slice %10 {offsets = [0, 5], sizes = [4, 1], strides = [1, 1]} : vector<4x36xf32> to vector<4x1xf32>
    %52 = vector.extract_strided_slice %44 {offsets = [1, 0], sizes = [1, 256], strides = [1, 1]} : vector<4x256xf32> to vector<1x256xf32>
    %53 = vector.broadcast %51 : vector<4x1xf32> to vector<4x256xf32>
    %54 = vector.broadcast %52 : vector<1x256xf32> to vector<4x256xf32>
    %55 = arith.mulf %53, %54 : vector<4x256xf32>
    %56 = arith.addf %50, %55 : vector<4x256xf32>
    %57 = vector.extract_strided_slice %10 {offsets = [0, 6], sizes = [4, 1], strides = [1, 1]} : vector<4x36xf32> to vector<4x1xf32>
    %58 = vector.extract_strided_slice %44 {offsets = [2, 0], sizes = [1, 256], strides = [1, 1]} : vector<4x256xf32> to vector<1x256xf32>
    %59 = vector.broadcast %57 : vector<4x1xf32> to vector<4x256xf32>
    %60 = vector.broadcast %58 : vector<1x256xf32> to vector<4x256xf32>
    %61 = arith.mulf %59, %60 : vector<4x256xf32>
    %62 = arith.addf %56, %61 : vector<4x256xf32>
    %63 = vector.extract_strided_slice %10 {offsets = [0, 7], sizes = [4, 1], strides = [1, 1]} : vector<4x36xf32> to vector<4x1xf32>
    %64 = vector.extract_strided_slice %44 {offsets = [3, 0], sizes = [1, 256], strides = [1, 1]} : vector<4x256xf32> to vector<1x256xf32>
    %65 = vector.broadcast %63 : vector<4x1xf32> to vector<4x256xf32>
    %66 = vector.broadcast %64 : vector<1x256xf32> to vector<4x256xf32>
    %67 = arith.mulf %65, %66 : vector<4x256xf32>
    %68 = arith.addf %62, %67 : vector<4x256xf32>
    %c15_i32 = arith.constant 15 : i32
    %69 = tpu.dynamic_rotate %9 by %c15_i32 dim 1 : vector<4x256xf32>, i32 -> vector<4x256xf32>
    %70 = vector.extract_strided_slice %11 {offsets = [2, 0], sizes = [1, 256], strides = [1, 1]} : vector<9x256xf32> to vector<1x256xf32>
    %71 = vector.broadcast %70 : vector<1x256xf32> to vector<4x256xf32>
    %72 = arith.mulf %69, %71 : vector<4x256xf32>
    %73 = vector.extract_strided_slice %10 {offsets = [0, 8], sizes = [4, 1], strides = [1, 1]} : vector<4x36xf32> to vector<4x1xf32>
    %74 = vector.extract_strided_slice %72 {offsets = [0, 0], sizes = [1, 256], strides = [1, 1]} : vector<4x256xf32> to vector<1x256xf32>
    %75 = vector.broadcast %73 : vector<4x1xf32> to vector<4x256xf32>
    %76 = vector.broadcast %74 : vector<1x256xf32> to vector<4x256xf32>
    %77 = arith.mulf %75, %76 : vector<4x256xf32>
    %78 = arith.addf %68, %77 : vector<4x256xf32>
    %79 = vector.extract_strided_slice %10 {offsets = [0, 9], sizes = [4, 1], strides = [1, 1]} : vector<4x36xf32> to vector<4x1xf32>
    %80 = vector.extract_strided_slice %72 {offsets = [1, 0], sizes = [1, 256], strides = [1, 1]} : vector<4x256xf32> to vector<1x256xf32>
    %81 = vector.broadcast %79 : vector<4x1xf32> to vector<4x256xf32>
    %82 = vector.broadcast %80 : vector<1x256xf32> to vector<4x256xf32>
    %83 = arith.mulf %81, %82 : vector<4x256xf32>
    %84 = arith.addf %78, %83 : vector<4x256xf32>
    %85 = vector.extract_strided_slice %10 {offsets = [0, 10], sizes = [4, 1], strides = [1, 1]} : vector<4x36xf32> to vector<4x1xf32>
    %86 = vector.extract_strided_slice %72 {offsets = [2, 0], sizes = [1, 256], strides = [1, 1]} : vector<4x256xf32> to vector<1x256xf32>
    %87 = vector.broadcast %85 : vector<4x1xf32> to vector<4x256xf32>
    %88 = vector.broadcast %86 : vector<1x256xf32> to vector<4x256xf32>
    %89 = arith.mulf %87, %88 : vector<4x256xf32>
    %90 = arith.addf %84, %89 : vector<4x256xf32>
    %91 = vector.extract_strided_slice %10 {offsets = [0, 11], sizes = [4, 1], strides = [1, 1]} : vector<4x36xf32> to vector<4x1xf32>
    %92 = vector.extract_strided_slice %72 {offsets = [3, 0], sizes = [1, 256], strides = [1, 1]} : vector<4x256xf32> to vector<1x256xf32>
    %93 = vector.broadcast %91 : vector<4x1xf32> to vector<4x256xf32>
    %94 = vector.broadcast %92 : vector<1x256xf32> to vector<4x256xf32>
    %95 = arith.mulf %93, %94 : vector<4x256xf32>
    %96 = arith.addf %90, %95 : vector<4x256xf32>
    %c1_i32 = arith.constant 1 : i32
    %97 = tpu.dynamic_rotate %9 by %c1_i32 dim 1 : vector<4x256xf32>, i32 -> vector<4x256xf32>
    %98 = vector.extract_strided_slice %11 {offsets = [3, 0], sizes = [1, 256], strides = [1, 1]} : vector<9x256xf32> to vector<1x256xf32>
    %99 = vector.broadcast %98 : vector<1x256xf32> to vector<4x256xf32>
    %100 = arith.mulf %97, %99 : vector<4x256xf32>
    %101 = vector.extract_strided_slice %10 {offsets = [0, 12], sizes = [4, 1], strides = [1, 1]} : vector<4x36xf32> to vector<4x1xf32>
    %102 = vector.extract_strided_slice %100 {offsets = [0, 0], sizes = [1, 256], strides = [1, 1]} : vector<4x256xf32> to vector<1x256xf32>
    %103 = vector.broadcast %101 : vector<4x1xf32> to vector<4x256xf32>
    %104 = vector.broadcast %102 : vector<1x256xf32> to vector<4x256xf32>
    %105 = arith.mulf %103, %104 : vector<4x256xf32>
    %106 = arith.addf %96, %105 : vector<4x256xf32>
    %107 = vector.extract_strided_slice %10 {offsets = [0, 13], sizes = [4, 1], strides = [1, 1]} : vector<4x36xf32> to vector<4x1xf32>
    %108 = vector.extract_strided_slice %100 {offsets = [1, 0], sizes = [1, 256], strides = [1, 1]} : vector<4x256xf32> to vector<1x256xf32>
    %109 = vector.broadcast %107 : vector<4x1xf32> to vector<4x256xf32>
    %110 = vector.broadcast %108 : vector<1x256xf32> to vector<4x256xf32>
    %111 = arith.mulf %109, %110 : vector<4x256xf32>
    %112 = arith.addf %106, %111 : vector<4x256xf32>
    %113 = vector.extract_strided_slice %10 {offsets = [0, 14], sizes = [4, 1], strides = [1, 1]} : vector<4x36xf32> to vector<4x1xf32>
    %114 = vector.extract_strided_slice %100 {offsets = [2, 0], sizes = [1, 256], strides = [1, 1]} : vector<4x256xf32> to vector<1x256xf32>
    %115 = vector.broadcast %113 : vector<4x1xf32> to vector<4x256xf32>
    %116 = vector.broadcast %114 : vector<1x256xf32> to vector<4x256xf32>
    %117 = arith.mulf %115, %116 : vector<4x256xf32>
    %118 = arith.addf %112, %117 : vector<4x256xf32>
    %119 = vector.extract_strided_slice %10 {offsets = [0, 15], sizes = [4, 1], strides = [1, 1]} : vector<4x36xf32> to vector<4x1xf32>
    %120 = vector.extract_strided_slice %100 {offsets = [3, 0], sizes = [1, 256], strides = [1, 1]} : vector<4x256xf32> to vector<1x256xf32>
    %121 = vector.broadcast %119 : vector<4x1xf32> to vector<4x256xf32>
    %122 = vector.broadcast %120 : vector<1x256xf32> to vector<4x256xf32>
    %123 = arith.mulf %121, %122 : vector<4x256xf32>
    %124 = arith.addf %118, %123 : vector<4x256xf32>
    %125 = vector.extract_strided_slice %10 {offsets = [0, 16], sizes = [4, 1], strides = [1, 1]} : vector<4x36xf32> to vector<4x1xf32>
    %126 = vector.extract_strided_slice %9 {offsets = [0, 0], sizes = [1, 256], strides = [1, 1]} : vector<4x256xf32> to vector<1x256xf32>
    %127 = vector.broadcast %125 : vector<4x1xf32> to vector<4x256xf32>
    %128 = vector.broadcast %126 : vector<1x256xf32> to vector<4x256xf32>
    %129 = arith.mulf %127, %128 : vector<4x256xf32>
    %130 = arith.addf %124, %129 : vector<4x256xf32>
    %131 = vector.extract_strided_slice %10 {offsets = [0, 17], sizes = [4, 1], strides = [1, 1]} : vector<4x36xf32> to vector<4x1xf32>
    %132 = vector.extract_strided_slice %9 {offsets = [1, 0], sizes = [1, 256], strides = [1, 1]} : vector<4x256xf32> to vector<1x256xf32>
    %133 = vector.broadcast %131 : vector<4x1xf32> to vector<4x256xf32>
    %134 = vector.broadcast %132 : vector<1x256xf32> to vector<4x256xf32>
    %135 = arith.mulf %133, %134 : vector<4x256xf32>
    %136 = arith.addf %130, %135 : vector<4x256xf32>
    %137 = vector.extract_strided_slice %10 {offsets = [0, 18], sizes = [4, 1], strides = [1, 1]} : vector<4x36xf32> to vector<4x1xf32>
    %138 = vector.extract_strided_slice %9 {offsets = [2, 0], sizes = [1, 256], strides = [1, 1]} : vector<4x256xf32> to vector<1x256xf32>
    %139 = vector.broadcast %137 : vector<4x1xf32> to vector<4x256xf32>
    %140 = vector.broadcast %138 : vector<1x256xf32> to vector<4x256xf32>
    %141 = arith.mulf %139, %140 : vector<4x256xf32>
    %142 = arith.addf %136, %141 : vector<4x256xf32>
    %143 = vector.extract_strided_slice %10 {offsets = [0, 19], sizes = [4, 1], strides = [1, 1]} : vector<4x36xf32> to vector<4x1xf32>
    %144 = vector.extract_strided_slice %9 {offsets = [3, 0], sizes = [1, 256], strides = [1, 1]} : vector<4x256xf32> to vector<1x256xf32>
    %145 = vector.broadcast %143 : vector<4x1xf32> to vector<4x256xf32>
    %146 = vector.broadcast %144 : vector<1x256xf32> to vector<4x256xf32>
    %147 = arith.mulf %145, %146 : vector<4x256xf32>
    %148 = arith.addf %142, %147 : vector<4x256xf32>
    %c255_i32 = arith.constant 255 : i32
    %149 = tpu.dynamic_rotate %9 by %c255_i32 dim 1 : vector<4x256xf32>, i32 -> vector<4x256xf32>
    %150 = vector.extract_strided_slice %11 {offsets = [5, 0], sizes = [1, 256], strides = [1, 1]} : vector<9x256xf32> to vector<1x256xf32>
    %151 = vector.broadcast %150 : vector<1x256xf32> to vector<4x256xf32>
    %152 = arith.mulf %149, %151 : vector<4x256xf32>
    %153 = vector.extract_strided_slice %10 {offsets = [0, 20], sizes = [4, 1], strides = [1, 1]} : vector<4x36xf32> to vector<4x1xf32>
    %154 = vector.extract_strided_slice %152 {offsets = [0, 0], sizes = [1, 256], strides = [1, 1]} : vector<4x256xf32> to vector<1x256xf32>
    %155 = vector.broadcast %153 : vector<4x1xf32> to vector<4x256xf32>
    %156 = vector.broadcast %154 : vector<1x256xf32> to vector<4x256xf32>
    %157 = arith.mulf %155, %156 : vector<4x256xf32>
    %158 = arith.addf %148, %157 : vector<4x256xf32>
    %159 = vector.extract_strided_slice %10 {offsets = [0, 21], sizes = [4, 1], strides = [1, 1]} : vector<4x36xf32> to vector<4x1xf32>
    %160 = vector.extract_strided_slice %152 {offsets = [1, 0], sizes = [1, 256], strides = [1, 1]} : vector<4x256xf32> to vector<1x256xf32>
    %161 = vector.broadcast %159 : vector<4x1xf32> to vector<4x256xf32>
    %162 = vector.broadcast %160 : vector<1x256xf32> to vector<4x256xf32>
    %163 = arith.mulf %161, %162 : vector<4x256xf32>
    %164 = arith.addf %158, %163 : vector<4x256xf32>
    %165 = vector.extract_strided_slice %10 {offsets = [0, 22], sizes = [4, 1], strides = [1, 1]} : vector<4x36xf32> to vector<4x1xf32>
    %166 = vector.extract_strided_slice %152 {offsets = [2, 0], sizes = [1, 256], strides = [1, 1]} : vector<4x256xf32> to vector<1x256xf32>
    %167 = vector.broadcast %165 : vector<4x1xf32> to vector<4x256xf32>
    %168 = vector.broadcast %166 : vector<1x256xf32> to vector<4x256xf32>
    %169 = arith.mulf %167, %168 : vector<4x256xf32>
    %170 = arith.addf %164, %169 : vector<4x256xf32>
    %171 = vector.extract_strided_slice %10 {offsets = [0, 23], sizes = [4, 1], strides = [1, 1]} : vector<4x36xf32> to vector<4x1xf32>
    %172 = vector.extract_strided_slice %152 {offsets = [3, 0], sizes = [1, 256], strides = [1, 1]} : vector<4x256xf32> to vector<1x256xf32>
    %173 = vector.broadcast %171 : vector<4x1xf32> to vector<4x256xf32>
    %174 = vector.broadcast %172 : vector<1x256xf32> to vector<4x256xf32>
    %175 = arith.mulf %173, %174 : vector<4x256xf32>
    %176 = arith.addf %170, %175 : vector<4x256xf32>
    %c241_i32 = arith.constant 241 : i32
    %177 = tpu.dynamic_rotate %9 by %c241_i32 dim 1 : vector<4x256xf32>, i32 -> vector<4x256xf32>
    %178 = vector.extract_strided_slice %11 {offsets = [6, 0], sizes = [1, 256], strides = [1, 1]} : vector<9x256xf32> to vector<1x256xf32>
    %179 = vector.broadcast %178 : vector<1x256xf32> to vector<4x256xf32>
    %180 = arith.mulf %177, %179 : vector<4x256xf32>
    %181 = vector.extract_strided_slice %10 {offsets = [0, 24], sizes = [4, 1], strides = [1, 1]} : vector<4x36xf32> to vector<4x1xf32>
    %182 = vector.extract_strided_slice %180 {offsets = [0, 0], sizes = [1, 256], strides = [1, 1]} : vector<4x256xf32> to vector<1x256xf32>
    %183 = vector.broadcast %181 : vector<4x1xf32> to vector<4x256xf32>
    %184 = vector.broadcast %182 : vector<1x256xf32> to vector<4x256xf32>
    %185 = arith.mulf %183, %184 : vector<4x256xf32>
    %186 = arith.addf %176, %185 : vector<4x256xf32>
    %187 = vector.extract_strided_slice %10 {offsets = [0, 25], sizes = [4, 1], strides = [1, 1]} : vector<4x36xf32> to vector<4x1xf32>
    %188 = vector.extract_strided_slice %180 {offsets = [1, 0], sizes = [1, 256], strides = [1, 1]} : vector<4x256xf32> to vector<1x256xf32>
    %189 = vector.broadcast %187 : vector<4x1xf32> to vector<4x256xf32>
    %190 = vector.broadcast %188 : vector<1x256xf32> to vector<4x256xf32>
    %191 = arith.mulf %189, %190 : vector<4x256xf32>
    %192 = arith.addf %186, %191 : vector<4x256xf32>
    %193 = vector.extract_strided_slice %10 {offsets = [0, 26], sizes = [4, 1], strides = [1, 1]} : vector<4x36xf32> to vector<4x1xf32>
    %194 = vector.extract_strided_slice %180 {offsets = [2, 0], sizes = [1, 256], strides = [1, 1]} : vector<4x256xf32> to vector<1x256xf32>
    %195 = vector.broadcast %193 : vector<4x1xf32> to vector<4x256xf32>
    %196 = vector.broadcast %194 : vector<1x256xf32> to vector<4x256xf32>
    %197 = arith.mulf %195, %196 : vector<4x256xf32>
    %198 = arith.addf %192, %197 : vector<4x256xf32>
    %199 = vector.extract_strided_slice %10 {offsets = [0, 27], sizes = [4, 1], strides = [1, 1]} : vector<4x36xf32> to vector<4x1xf32>
    %200 = vector.extract_strided_slice %180 {offsets = [3, 0], sizes = [1, 256], strides = [1, 1]} : vector<4x256xf32> to vector<1x256xf32>
    %201 = vector.broadcast %199 : vector<4x1xf32> to vector<4x256xf32>
    %202 = vector.broadcast %200 : vector<1x256xf32> to vector<4x256xf32>
    %203 = arith.mulf %201, %202 : vector<4x256xf32>
    %204 = arith.addf %198, %203 : vector<4x256xf32>
    %c240_i32 = arith.constant 240 : i32
    %205 = tpu.dynamic_rotate %9 by %c240_i32 dim 1 : vector<4x256xf32>, i32 -> vector<4x256xf32>
    %206 = vector.extract_strided_slice %11 {offsets = [7, 0], sizes = [1, 256], strides = [1, 1]} : vector<9x256xf32> to vector<1x256xf32>
    %207 = vector.broadcast %206 : vector<1x256xf32> to vector<4x256xf32>
    %208 = arith.mulf %205, %207 : vector<4x256xf32>
    %209 = vector.extract_strided_slice %10 {offsets = [0, 28], sizes = [4, 1], strides = [1, 1]} : vector<4x36xf32> to vector<4x1xf32>
    %210 = vector.extract_strided_slice %208 {offsets = [0, 0], sizes = [1, 256], strides = [1, 1]} : vector<4x256xf32> to vector<1x256xf32>
    %211 = vector.broadcast %209 : vector<4x1xf32> to vector<4x256xf32>
    %212 = vector.broadcast %210 : vector<1x256xf32> to vector<4x256xf32>
    %213 = arith.mulf %211, %212 : vector<4x256xf32>
    %214 = arith.addf %204, %213 : vector<4x256xf32>
    %215 = vector.extract_strided_slice %10 {offsets = [0, 29], sizes = [4, 1], strides = [1, 1]} : vector<4x36xf32> to vector<4x1xf32>
    %216 = vector.extract_strided_slice %208 {offsets = [1, 0], sizes = [1, 256], strides = [1, 1]} : vector<4x256xf32> to vector<1x256xf32>
    %217 = vector.broadcast %215 : vector<4x1xf32> to vector<4x256xf32>
    %218 = vector.broadcast %216 : vector<1x256xf32> to vector<4x256xf32>
    %219 = arith.mulf %217, %218 : vector<4x256xf32>
    %220 = arith.addf %214, %219 : vector<4x256xf32>
    %221 = vector.extract_strided_slice %10 {offsets = [0, 30], sizes = [4, 1], strides = [1, 1]} : vector<4x36xf32> to vector<4x1xf32>
    %222 = vector.extract_strided_slice %208 {offsets = [2, 0], sizes = [1, 256], strides = [1, 1]} : vector<4x256xf32> to vector<1x256xf32>
    %223 = vector.broadcast %221 : vector<4x1xf32> to vector<4x256xf32>
    %224 = vector.broadcast %222 : vector<1x256xf32> to vector<4x256xf32>
    %225 = arith.mulf %223, %224 : vector<4x256xf32>
    %226 = arith.addf %220, %225 : vector<4x256xf32>
    %227 = vector.extract_strided_slice %10 {offsets = [0, 31], sizes = [4, 1], strides = [1, 1]} : vector<4x36xf32> to vector<4x1xf32>
    %228 = vector.extract_strided_slice %208 {offsets = [3, 0], sizes = [1, 256], strides = [1, 1]} : vector<4x256xf32> to vector<1x256xf32>
    %229 = vector.broadcast %227 : vector<4x1xf32> to vector<4x256xf32>
    %230 = vector.broadcast %228 : vector<1x256xf32> to vector<4x256xf32>
    %231 = arith.mulf %229, %230 : vector<4x256xf32>
    %232 = arith.addf %226, %231 : vector<4x256xf32>
    %c239_i32 = arith.constant 239 : i32
    %233 = tpu.dynamic_rotate %9 by %c239_i32 dim 1 : vector<4x256xf32>, i32 -> vector<4x256xf32>
    %234 = vector.extract_strided_slice %11 {offsets = [8, 0], sizes = [1, 256], strides = [1, 1]} : vector<9x256xf32> to vector<1x256xf32>
    %235 = vector.broadcast %234 : vector<1x256xf32> to vector<4x256xf32>
    %236 = arith.mulf %233, %235 : vector<4x256xf32>
    %237 = vector.extract_strided_slice %10 {offsets = [0, 32], sizes = [4, 1], strides = [1, 1]} : vector<4x36xf32> to vector<4x1xf32>
    %238 = vector.extract_strided_slice %236 {offsets = [0, 0], sizes = [1, 256], strides = [1, 1]} : vector<4x256xf32> to vector<1x256xf32>
    %239 = vector.broadcast %237 : vector<4x1xf32> to vector<4x256xf32>
    %240 = vector.broadcast %238 : vector<1x256xf32> to vector<4x256xf32>
    %241 = arith.mulf %239, %240 : vector<4x256xf32>
    %242 = arith.addf %232, %241 : vector<4x256xf32>
    %243 = vector.extract_strided_slice %10 {offsets = [0, 33], sizes = [4, 1], strides = [1, 1]} : vector<4x36xf32> to vector<4x1xf32>
    %244 = vector.extract_strided_slice %236 {offsets = [1, 0], sizes = [1, 256], strides = [1, 1]} : vector<4x256xf32> to vector<1x256xf32>
    %245 = vector.broadcast %243 : vector<4x1xf32> to vector<4x256xf32>
    %246 = vector.broadcast %244 : vector<1x256xf32> to vector<4x256xf32>
    %247 = arith.mulf %245, %246 : vector<4x256xf32>
    %248 = arith.addf %242, %247 : vector<4x256xf32>
    %249 = vector.extract_strided_slice %10 {offsets = [0, 34], sizes = [4, 1], strides = [1, 1]} : vector<4x36xf32> to vector<4x1xf32>
    %250 = vector.extract_strided_slice %236 {offsets = [2, 0], sizes = [1, 256], strides = [1, 1]} : vector<4x256xf32> to vector<1x256xf32>
    %251 = vector.broadcast %249 : vector<4x1xf32> to vector<4x256xf32>
    %252 = vector.broadcast %250 : vector<1x256xf32> to vector<4x256xf32>
    %253 = arith.mulf %251, %252 : vector<4x256xf32>
    %254 = arith.addf %248, %253 : vector<4x256xf32>
    %255 = vector.extract_strided_slice %10 {offsets = [0, 35], sizes = [4, 1], strides = [1, 1]} : vector<4x36xf32> to vector<4x1xf32>
    %256 = vector.extract_strided_slice %236 {offsets = [3, 0], sizes = [1, 256], strides = [1, 1]} : vector<4x256xf32> to vector<1x256xf32>
    %257 = vector.broadcast %255 : vector<4x1xf32> to vector<4x256xf32>
    %258 = vector.broadcast %256 : vector<1x256xf32> to vector<4x256xf32>
    %259 = arith.mulf %257, %258 : vector<4x256xf32>
    %260 = arith.addf %254, %259 : vector<4x256xf32>
    %c0_11 = arith.constant 0 : index
    %c0_12 = arith.constant 0 : index
    %c0_13 = arith.constant 0 : index
    %261 = vector.load %arg6[%c0_11, %c0_12, %c0_13] : memref<1x4x256xf32, #tpu.memory_space<vmem>>, vector<1x4x256xf32>
    %262 = vector.shape_cast %261 : vector<1x4x256xf32> to vector<4x256xf32>
    %263 = vector.shape_cast %260 : vector<4x256xf32> to vector<1x4x256xf32>
    tpu.vector_store %arg6[%c0_11, %c0_12, %c0_13], %263 {strides = array<i32>} : memref<1x4x256xf32, #tpu.memory_space<vmem>>, vector<1x4x256xf32>,
    %cst_14 = arith.constant dense<0.000000e+00> : vector<4xf32>
    %264 = vector.multi_reduction <add>, %260, %cst_14 [1] : vector<4x256xf32> to vector<4xf32>
    %265 = vector.shape_cast %264 : vector<4xf32> to vector<4x1xf32>
    %c0_15 = arith.constant 0 : index
    %c0_16 = arith.constant 0 : index
    %c0_17 = arith.constant 0 : index
    %266 = vector.load %arg7[%c0_15, %c0_16, %c0_17] : memref<1x4x2xf32, #tpu.memory_space<vmem>>, vector<1x4x1xf32>
    %267 = vector.shape_cast %266 : vector<1x4x1xf32> to vector<4x1xf32>
    %268 = vector.shape_cast %265 : vector<4x1xf32> to vector<1x4x1xf32>
    tpu.vector_store %arg7[%c0_15, %c0_16, %c0_17], %268 {strides = array<i32>} : memref<1x4x2xf32, #tpu.memory_space<vmem>>, vector<1x4x1xf32>,
    %269 = arith.mulf %260, %260 : vector<4x256xf32>
    %cst_18 = arith.constant dense<0.000000e+00> : vector<4xf32>
    %270 = vector.multi_reduction <add>, %269, %cst_18 [1] : vector<4x256xf32> to vector<4xf32>
    %271 = vector.shape_cast %270 : vector<4xf32> to vector<4x1xf32>
    %c0_19 = arith.constant 0 : index
    %c0_20 = arith.constant 0 : index
    %c1 = arith.constant 1 : index
    %272 = vector.load %arg7[%c0_19, %c0_20, %c1] : memref<1x4x2xf32, #tpu.memory_space<vmem>>, vector<1x4x1xf32>
    %273 = vector.shape_cast %272 : vector<1x4x1xf32> to vector<4x1xf32>
    %274 = vector.shape_cast %271 : vector<4x1xf32> to vector<1x4x1xf32>
    tpu.vector_store %arg7[%c0_19, %c0_20, %c1], %274 {strides = array<i32>} : memref<1x4x2xf32, #tpu.memory_space<vmem>>, vector<1x4x1xf32>,
    return
  }
  func.func @transform_0(%arg0: i32) -> (i32, i32, i32) {
    %c0_i32 = arith.constant 0 : i32
    %c0_i32_0 = arith.constant 0 : i32
    %c0_i32_1 = arith.constant 0 : i32
    return %arg0, %c0_i32, %c0_i32_0 : i32, i32, i32
  }
  func.func @transform_1(%arg0: i32) -> (i32, i32) {
    %c0_i32 = arith.constant 0 : i32
    %c0_i32_0 = arith.constant 0 : i32
    %c0_i32_1 = arith.constant 0 : i32
    return %c0_i32, %c0_i32_0 : i32, i32
  }
  func.func @transform_2(%arg0: i32) -> (i32, i32) {
    %c0_i32 = arith.constant 0 : i32
    %c0_i32_0 = arith.constant 0 : i32
    %c0_i32_1 = arith.constant 0 : i32
    return %c0_i32, %c0_i32_0 : i32, i32
  }
  func.func @transform_3(%arg0: i32) -> (i32, i32) {
    %c0_i32 = arith.constant 0 : i32
    %c0_i32_0 = arith.constant 0 : i32
    %c0_i32_1 = arith.constant 0 : i32
    return %c0_i32, %c0_i32_0 : i32, i32
  }
  func.func @transform_4(%arg0: i32) -> (i32, i32) {
    %c0_i32 = arith.constant 0 : i32
    %c0_i32_0 = arith.constant 0 : i32
    %c0_i32_1 = arith.constant 0 : i32
    return %c0_i32, %c0_i32_0 : i32, i32
  }
  func.func @transform_5(%arg0: i32) -> (i32, i32, i32) {
    %c0_i32 = arith.constant 0 : i32
    %c0_i32_0 = arith.constant 0 : i32
    %c0_i32_1 = arith.constant 0 : i32
    return %arg0, %c0_i32, %c0_i32_0 : i32, i32, i32
  }
  func.func @transform_6(%arg0: i32) -> (i32, i32, i32) {
    %c0_i32 = arith.constant 0 : i32
    %c0_i32_0 = arith.constant 0 : i32
    %c0_i32_1 = arith.constant 0 : i32
    return %arg0, %c0_i32, %c0_i32_0 : i32, i32, i32
  }
}

</mosaic_0001>

<llo_original>
// kernel: resnet_block_forward.5
$region0: #{resnet_block_forward.5}
  #allocation0 [shape = 'u32[]', space=smem, size = 0x4, offset = 0x4, fixed_abs, tag = 'smem constant byte address 0x4 - core index']
  #allocation1 [shape = 'u32[144,128]{1,0:T(1,128)}', space=vmem, size = 0x12000, scoped, tag = 'internal scratch']
  %s0 = inlined_call_operand.vmem [shape: f32[2,4,256], index: 0, kind: input, shape index: {}]
  %s1 = inlined_call_operand.vmem [shape: f32[4,1], index: 1, kind: input, shape index: {}]
  %s2 = inlined_call_operand.vmem [shape: f32[4,1], index: 2, kind: input, shape index: {}]
  %s3 = inlined_call_operand.vmem [shape: f32[2,4,256], index: 3, kind: input, shape index: {}]
  %s4 = inlined_call_operand.vmem [shape: f32[2,4,256], index: 4, kind: output, shape index: {}]
  %s5 = sld [smem:[#allocation0]]
  $region49: #{resnet_block_forward.5} parent=0
    _
  %s7 = ssub.s32 1, %s5
  %s8 = scalar_select 0, %s7, %s5
  loop: start=0, step=1, limit=4
  $region2: #{resnet_block_forward.5} parent=0 // loop_pre_header
    _
  $region3: #{resnet_block_forward.5} parent=0 // loop_header
    %s10 = sphi 0, %s14
    %p11 = scmp.ge.s32.totalorder %s10, 4
    %s20 = sphi 0, %s22
    %s23 = sphi 0, %s20
    %s24 = sphi 0, %s23
    %s40 = sphi 0, %s24
    %s44 = sphi 0, %s44
    %s46 = sphi 0, %s44
    %s47 = sphi 0, %s46
    %s61 = sphi 0, %s47
    %s65 = sphi 0, %s65
    %s67 = sphi 0, %s65
    %s68 = sphi 0, %s67
    %s82 = sphi 0, %s68
    %s88 = sphi 0, %s90
    %s91 = sphi 0, %s88
    %s92 = sphi 0, %s91
    %s108 = sphi 0, %s92
    %s114 = sphi 0, %s116
    %s117 = sphi 0, %s114
    %s118 = sphi 0, %s117
    %s134 = sphi 0, %s118
  $region4: #{resnet_block_forward.5} parent=0 // loop_header_branch
    %13 = sbr.rel (%p11) target = $region8
  $region5: #{resnet_block_forward.5} parent=0 // loop_body
    %s15 = ssub.s32 %s10, 1
    %s16 = ssub.s32 %s10, 2
    %s17 = sadd.s32 %s10, 1
    %s18 = ssub.s32 %s10, %s17
    %p19 = scmp.eq.s32.totalorder %s18, 0
    %s21 = sadd.s32 %s20, 1
    %s22 = scalar_select %p19, %s20, %s21
    %p25 = pneg %p19
    %p26 = scmp.eq.s32.totalorder %s10, 1
    %p27 = por %p25, %p26
    %p28 = scmp.ne.s32.totalorder %s20, %s23
    %p29 = scmp.eq.s32.totalorder %s10, 0
    %p30 = por %p28, %p29
    %p31 = scmp.ne.s32.totalorder %s20, %s23
    %p32 = scmp.eq.s32.totalorder %s15, 1
    %p33 = por %p31, %p32
    %p34 = scmp.ne.s32.totalorder %s23, %s24
    %p35 = scmp.eq.s32.totalorder %s15, 0
    %p36 = por %p34, %p35
    %p37 = scmp.ne.s32.totalorder %s23, %s24
    %p38 = scmp.eq.s32.totalorder %s16, 1
    %p39 = por %p37, %p38
    %p41 = scmp.ne.s32.totalorder %s24, %s40
    %p42 = scmp.eq.s32.totalorder %s16, 0
    %p43 = por %p41, %p42
    %s45 = sadd.s32 %s44, 1
    %p48 = scmp.eq.s32.totalorder %s10, 1
    %p49 = scmp.ne.s32.totalorder %s44, %s46
    %p50 = scmp.eq.s32.totalorder %s10, 0
    %p51 = por %p49, %p50
    %p52 = scmp.ne.s32.totalorder %s44, %s46
    %p53 = scmp.eq.s32.totalorder %s15, 1
    %p54 = por %p52, %p53
    %p55 = scmp.ne.s32.totalorder %s46, %s47
    %p56 = scmp.eq.s32.totalorder %s15, 0
    %p57 = por %p55, %p56
    %p58 = scmp.ne.s32.totalorder %s46, %s47
    %p59 = scmp.eq.s32.totalorder %s16, 1
    %p60 = por %p58, %p59
    %p62 = scmp.ne.s32.totalorder %s47, %s61
    %p63 = scmp.eq.s32.totalorder %s16, 0
    %p64 = por %p62, %p63
    %s66 = sadd.s32 %s65, 1
    %p69 = scmp.eq.s32.totalorder %s10, 1
    %p70 = scmp.ne.s32.totalorder %s65, %s67
    %p71 = scmp.eq.s32.totalorder %s10, 0
    %p72 = por %p70, %p71
    %p73 = scmp.ne.s32.totalorder %s65, %s67
    %p74 = scmp.eq.s32.totalorder %s15, 1
    %p75 = por %p73, %p74
    %p76 = scmp.ne.s32.totalorder %s67, %s68
    %p77 = scmp.eq.s32.totalorder %s15, 0
    %p78 = por %p76, %p77
    %p79 = scmp.ne.s32.totalorder %s67, %s68
    %p80 = scmp.eq.s32.totalorder %s16, 1
    %p81 = por %p79, %p80
    %p83 = scmp.ne.s32.totalorder %s68, %s82
    %p84 = scmp.eq.s32.totalorder %s16, 0
    %p85 = por %p83, %p84
    %s86 = ssub.s32 %s10, %s17
    %p87 = scmp.eq.s32.totalorder %s86, 0
    %s89 = sadd.s32 %s88, 1
    %s90 = scalar_select %p87, %s88, %s89
    %p93 = pneg %p87
    %p94 = scmp.eq.s32.totalorder %s10, 1
    %p95 = por %p93, %p94
    %p96 = scmp.ne.s32.totalorder %s88, %s91
    %p97 = scmp.eq.s32.totalorder %s10, 0
    %p98 = por %p96, %p97
    %p99 = scmp.ne.s32.totalorder %s88, %s91
    %p100 = scmp.eq.s32.totalorder %s15, 1
    %p101 = por %p99, %p100
    %p102 = scmp.ne.s32.totalorder %s91, %s92
    %p103 = scmp.eq.s32.totalorder %s15, 0
    %p104 = por %p102, %p103
    %p105 = scmp.ne.s32.totalorder %s91, %s92
    %p106 = scmp.eq.s32.totalorder %s16, 1
    %p107 = por %p105, %p106
    %p109 = scmp.ne.s32.totalorder %s92, %s108
    %p110 = scmp.eq.s32.totalorder %s16, 0
    %p111 = por %p109, %p110
    %s112 = ssub.s32 %s10, %s17
    %p113 = scmp.eq.s32.totalorder %s112, 0
    %s115 = sadd.s32 %s114, 1
    %s116 = scalar_select %p113, %s114, %s115
    %p119 = pneg %p113
    %p120 = scmp.eq.s32.totalorder %s10, 1
    %p121 = por %p119, %p120
    %p122 = scmp.ne.s32.totalorder %s114, %s117
    %p123 = scmp.eq.s32.totalorder %s10, 0
    %p124 = por %p122, %p123
    %p125 = scmp.ne.s32.totalorder %s114, %s117
    %p126 = scmp.eq.s32.totalorder %s15, 1
    %p127 = por %p125, %p126
    %p128 = scmp.ne.s32.totalorder %s117, %s118
    %p129 = scmp.eq.s32.totalorder %s15, 0
    %p130 = por %p128, %p129
    %p131 = scmp.ne.s32.totalorder %s117, %s118
    %p132 = scmp.eq.s32.totalorder %s16, 1
    %p133 = por %p131, %p132
    %p135 = scmp.ne.s32.totalorder %s118, %s134
    %p136 = scmp.eq.s32.totalorder %s16, 0
    %p137 = por %p135, %p136
    %p138 = scmp.le.s32.totalorder 1, %s10
    %p139 = scmp.lt.s32.totalorder %s10, 3
    %p140 = pnand %p138, %p139
    %p141 = pneg %p140
    // Predicated region
    $region9: #{resnet_block_forward.5} parent=5 // pred_check
      _
    $region10: #{resnet_block_forward.5} parent=5 // pred_check_branch
      %143 = sbr.rel (%p140) target = $region12
    $region11: #{resnet_block_forward.5} parent=5 // pred_region
      %s144 = ssub.s32 %s10, 1
      // Predicated region
      $region13: #{resnet_block_forward.5} parent=11 // pred_check
        %p145 = pneg %p57
      $region14: #{resnet_block_forward.5} parent=11 // pred_check_branch
        %147 = sbr.rel (%p145) target = $region16
      $region15: #{resnet_block_forward.5} parent=11 // pred_region
        _
      $region16: #{resnet_block_forward.5} parent=11 // pred_fallthru
        _
      // Predicated region
      $region17: #{resnet_block_forward.5} parent=11 // pred_check
        %p148 = pneg %p78
      $region18: #{resnet_block_forward.5} parent=11 // pred_check_branch
        %150 = sbr.rel (%p148) target = $region20
      $region19: #{resnet_block_forward.5} parent=11 // pred_region
        _
      $region20: #{resnet_block_forward.5} parent=11 // pred_fallthru
        _
    $region12: #{resnet_block_forward.5} parent=5 // pred_fallthru
      _
    %p151 = scmp.lt.s32.totalorder %s10, 2
    // Predicated region
    $region21: #{resnet_block_forward.5} parent=5 // pred_check
      %p152 = pneg %p151
    $region22: #{resnet_block_forward.5} parent=5 // pred_check_branch
      %154 = sbr.rel (%p152) target = $region24
    $region23: #{resnet_block_forward.5} parent=5 // pred_region
      // Predicated region
      $region25: #{resnet_block_forward.5} parent=23 // pred_check
        %p155 = pneg %p30
      $region26: #{resnet_block_forward.5} parent=23 // pred_check_branch
        %157 = sbr.rel (%p155) target = $region28
      $region27: #{resnet_block_forward.5} parent=23 // pred_region
        %p158 = scmp.lt.s32.totalorder %s10, 1
        %s159 = scalar_select %p158, %s10, 1
        %s160 = smul.addr %s159, 2
        %s161 = smul.addr %s160, 4
        %s162 = scalar_lea.vmem %s0, %s161
      $region28: #{resnet_block_forward.5} parent=23 // pred_fallthru
        _
      // Predicated region
      $region29: #{resnet_block_forward.5} parent=23 // pred_check
        %p163 = pneg %p98
      $region30: #{resnet_block_forward.5} parent=23 // pred_check_branch
        %165 = sbr.rel (%p163) target = $region32
      $region31: #{resnet_block_forward.5} parent=23 // pred_region
        %p166 = scmp.lt.s32.totalorder %s10, 1
        %s167 = scalar_select %p166, %s10, 1
        %s168 = smul.addr %s167, 2
        %s169 = smul.addr %s168, 4
        %s170 = scalar_lea.vmem %s3, %s169
      $region32: #{resnet_block_forward.5} parent=23 // pred_fallthru
        _
    $region24: #{resnet_block_forward.5} parent=5 // pred_fallthru
      _
    %p171 = scmp.le.s32.totalorder 1, %s10
    %p172 = scmp.lt.s32.totalorder %s10, 3
    %p173 = pnand %p171, %p172
    %p174 = pneg %p173
    // Predicated region
    $region33: #{resnet_block_forward.5} parent=5 // pred_check
      _
    $region34: #{resnet_block_forward.5} parent=5 // pred_check_branch
      %176 = sbr.rel (%p173) target = $region36
    $region35: #{resnet_block_forward.5} parent=5 // pred_region
      %s177 = ssub.s32 %s10, 1
      %p178 = scmp.lt.s32.totalorder %s15, 1
      %s179 = scalar_select %p178, %s15, 1
      %s180 = smul.addr %s179, 2
      %s181 = smul.addr %s180, 4
      %s182 = scalar_lea.vmem %s0, %s181
      %p183 = pneg %p36
      %p184 = pneg %p33
      %p185 = pneg %p57
      %p186 = pneg %p54
      %p187 = pneg %p78
      %p188 = pneg %p75
      %p189 = scmp.lt.s32.totalorder %s15, 1
      %s190 = scalar_select %p189, %s15, 1
      %s191 = smul.addr %s190, 2
      %s192 = smul.addr %s191, 4
      %s193 = scalar_lea.vmem %s3, %s192
      %p194 = pneg %p104
      %p195 = pneg %p101
      %p196 = pneg %p130
      %p197 = pneg %p127
      %p198 = scmp.lt.s32.totalorder %s15, 1
      %s199 = scalar_select %p198, %s15, 1
      %s200 = smul.addr %s199, 2
      %s201 = smul.addr %s200, 4
      %s202 = scalar_lea.vmem %s4, %s201
      %p203 = scmp.lt.s32.totalorder %s15, 1
      %s204 = scalar_select %p203, %s15, 1
      %s205 = smul.addr %s204, 2
      %s206 = smul.addr %s205, 4
      %s207 = scalar_lea.vmem %s0, %s206
      %p208 = scmp.lt.s32.totalorder %s15, 1
      %s209 = scalar_select %p208, %s15, 1
      %s210 = smul.addr %s209, 2
      %s211 = smul.addr %s210, 4
      %s212 = scalar_lea.vmem %s3, %s211
      %p213 = scmp.lt.s32.totalorder %s15, 1
      %s214 = scalar_select %p213, %s15, 1
      %s215 = smul.addr %s214, 2
      %s216 = smul.addr %s215, 4
      %s217 = scalar_lea.vmem %s4, %s216
      %v218 = vld [vmem:[%s207] sm:$0xff]
      %v219 = vld [vmem:[%s1] sm:$0xf]
      %221 = vset.pattern.permute.xlu0 0
      %222 = vperm.xlu0 %221, %v219
      %v223 = vpop.permute.xlu0 %222
      %v225 = vunpack.c.l.s4 839922192
      %v226 = vunpack.c.0.s8 %v225
      %v227 = vlaneseq
      %v228 = vshrl.u32 %v227, 7
      %v229 = vsub.s32 %v226, %v228
      %v230 = vrot.slane %v223, %v229
      %v232 = vmul.f32 %v218, %v230
      %v233 = vld [vmem:[%s2] sm:$0xf]
      %235 = vset.pattern.permute.xlu0 0
      %236 = vperm.xlu0 %235, %v233
      %v237 = vpop.permute.xlu0 %236
      %v239 = vunpack.c.l.s4 839922192
      %v240 = vunpack.c.0.s8 %v239
      %v241 = vlaneseq
      %v242 = vshrl.u32 %v241, 7
      %v243 = vsub.s32 %v240, %v242
      %v244 = vrot.slane %v237, %v243
      %v246 = vadd.f32 %v232, %v244
      %v247 = vld [vmem:[%s212] sm:$0xff]
      %v248 = vadd.f32 %v246, %v247
      %249 = vst [vmem:[%s217] sm:$0xff] %v248
      %p250 = scmp.lt.s32.totalorder %s15, 1
      %s251 = scalar_select %p250, %s15, 1
      %s252 = smul.addr %s251, 2
      %s253 = smul.addr %s252, 4
      %s254 = scalar_lea.vmem %s4, %s253
      // Predicated region
      $region37: #{resnet_block_forward.5} parent=35 // pred_check
        %p255 = pneg %p127
      $region38: #{resnet_block_forward.5} parent=35 // pred_check_branch
        %257 = sbr.rel (%p255) target = $region40
      $region39: #{resnet_block_forward.5} parent=35 // pred_region
        _
      $region40: #{resnet_block_forward.5} parent=35 // pred_fallthru
        _
    $region36: #{resnet_block_forward.5} parent=5 // pred_fallthru
      _
    %p258 = scmp.le.s32.totalorder 2, %s10
    // Predicated region
    $region41: #{resnet_block_forward.5} parent=5 // pred_check
      %p259 = pneg %p258
    $region42: #{resnet_block_forward.5} parent=5 // pred_check_branch
      %261 = sbr.rel (%p259) target = $region44
    $region43: #{resnet_block_forward.5} parent=5 // pred_region
      %s262 = ssub.s32 %s10, 2
      // Predicated region
      $region45: #{resnet_block_forward.5} parent=43 // pred_check
        %p263 = pneg %p133
      $region46: #{resnet_block_forward.5} parent=43 // pred_check_branch
        %265 = sbr.rel (%p263) target = $region48
      $region47: #{resnet_block_forward.5} parent=43 // pred_region
        %p266 = scmp.lt.s32.totalorder %s16, 1
        %s267 = scalar_select %p266, %s16, 1
        %s268 = smul.addr %s267, 2
        %s269 = smul.addr %s268, 4
        %s270 = scalar_lea.vmem %s4, %s269
      $region48: #{resnet_block_forward.5} parent=43 // pred_fallthru
        _
    $region44: #{resnet_block_forward.5} parent=5 // pred_fallthru
      _
  $region6: #{resnet_block_forward.5} parent=0 // loop_footer
    %s14 = sadd.s32 1, %s10
  $region7: #{resnet_block_forward.5} parent=0 // loop_footer_branch
    %9 = sbr.rel target = $region3
  $region8: #{resnet_block_forward.5} parent=0 // loop_exit
    _

// kernel: resnet_block_forward.3
$region0: #{resnet_block_forward.3}
  #allocation0 [shape = 'u32[]', space=smem, size = 0x4, offset = 0x4, fixed_abs, tag = 'smem constant byte address 0x4 - core index']
  #allocation1 [shape = 'u32[144,128]{1,0:T(1,128)}', space=vmem, size = 0x12000, scoped, tag = 'internal scratch']
  %s0 = inlined_call_operand.vmem [shape: f32[2,4,256], index: 0, kind: input, shape index: {}]
  %s1 = inlined_call_operand.vmem [shape: f32[4,36], index: 1, kind: input, shape index: {}]
  %s2 = inlined_call_operand.vmem [shape: f32[9,256], index: 2, kind: input, shape index: {}]
  %s3 = inlined_call_operand.vmem [shape: f32[2,4,256], index: 3, kind: output, shape index: {0}]
  %s4 = inlined_call_operand.vmem [shape: f32[2,4,2], index: 4, kind: output, shape index: {1}]
  %5 = xla_tuple %s3, %s4
  %s6 = sld [smem:[#allocation0]]
  $region53: #{resnet_block_forward.3} parent=0
    _
  %s8 = ssub.s32 1, %s6
  %s9 = scalar_select 0, %s8, %s6
  loop: start=0, step=1, limit=4
  $region2: #{resnet_block_forward.3} parent=0 // loop_pre_header
    _
  $region3: #{resnet_block_forward.3} parent=0 // loop_header
    %s11 = sphi 0, %s15
    %p12 = scmp.ge.s32.totalorder %s11, 4
    %s21 = sphi 0, %s23
    %s24 = sphi 0, %s21
    %s25 = sphi 0, %s24
    %s41 = sphi 0, %s25
    %s45 = sphi 0, %s45
    %s47 = sphi 0, %s45
    %s48 = sphi 0, %s47
    %s62 = sphi 0, %s48
    %s66 = sphi 0, %s66
    %s68 = sphi 0, %s66
    %s69 = sphi 0, %s68
    %s83 = sphi 0, %s69
    %s89 = sphi 0, %s91
    %s92 = sphi 0, %s89
    %s93 = sphi 0, %s92
    %s109 = sphi 0, %s93
    %s115 = sphi 0, %s117
    %s118 = sphi 0, %s115
    %s119 = sphi 0, %s118
    %s135 = sphi 0, %s119
  $region4: #{resnet_block_forward.3} parent=0 // loop_header_branch
    %14 = sbr.rel (%p12) target = $region8
  $region5: #{resnet_block_forward.3} parent=0 // loop_body
    %s16 = ssub.s32 %s11, 1
    %s17 = ssub.s32 %s11, 2
    %s18 = sadd.s32 %s11, 1
    %s19 = ssub.s32 %s11, %s18
    %p20 = scmp.eq.s32.totalorder %s19, 0
    %s22 = sadd.s32 %s21, 1
    %s23 = scalar_select %p20, %s21, %s22
    %p26 = pneg %p20
    %p27 = scmp.eq.s32.totalorder %s11, 1
    %p28 = por %p26, %p27
    %p29 = scmp.ne.s32.totalorder %s21, %s24
    %p30 = scmp.eq.s32.totalorder %s11, 0
    %p31 = por %p29, %p30
    %p32 = scmp.ne.s32.totalorder %s21, %s24
    %p33 = scmp.eq.s32.totalorder %s16, 1
    %p34 = por %p32, %p33
    %p35 = scmp.ne.s32.totalorder %s24, %s25
    %p36 = scmp.eq.s32.totalorder %s16, 0
    %p37 = por %p35, %p36
    %p38 = scmp.ne.s32.totalorder %s24, %s25
    %p39 = scmp.eq.s32.totalorder %s17, 1
    %p40 = por %p38, %p39
    %p42 = scmp.ne.s32.totalorder %s25, %s41
    %p43 = scmp.eq.s32.totalorder %s17, 0
    %p44 = por %p42, %p43
    %s46 = sadd.s32 %s45, 1
    %p49 = scmp.eq.s32.totalorder %s11, 1
    %p50 = scmp.ne.s32.totalorder %s45, %s47
    %p51 = scmp.eq.s32.totalorder %s11, 0
    %p52 = por %p50, %p51
    %p53 = scmp.ne.s32.totalorder %s45, %s47
    %p54 = scmp.eq.s32.totalorder %s16, 1
    %p55 = por %p53, %p54
    %p56 = scmp.ne.s32.totalorder %s47, %s48
    %p57 = scmp.eq.s32.totalorder %s16, 0
    %p58 = por %p56, %p57
    %p59 = scmp.ne.s32.totalorder %s47, %s48
    %p60 = scmp.eq.s32.totalorder %s17, 1
    %p61 = por %p59, %p60
    %p63 = scmp.ne.s32.totalorder %s48, %s62
    %p64 = scmp.eq.s32.totalorder %s17, 0
    %p65 = por %p63, %p64
    %s67 = sadd.s32 %s66, 1
    %p70 = scmp.eq.s32.totalorder %s11, 1
    %p71 = scmp.ne.s32.totalorder %s66, %s68
    %p72 = scmp.eq.s32.totalorder %s11, 0
    %p73 = por %p71, %p72
    %p74 = scmp.ne.s32.totalorder %s66, %s68
    %p75 = scmp.eq.s32.totalorder %s16, 1
    %p76 = por %p74, %p75
    %p77 = scmp.ne.s32.totalorder %s68, %s69
    %p78 = scmp.eq.s32.totalorder %s16, 0
    %p79 = por %p77, %p78
    %p80 = scmp.ne.s32.totalorder %s68, %s69
    %p81 = scmp.eq.s32.totalorder %s17, 1
    %p82 = por %p80, %p81
    %p84 = scmp.ne.s32.totalorder %s69, %s83
    %p85 = scmp.eq.s32.totalorder %s17, 0
    %p86 = por %p84, %p85
    %s87 = ssub.s32 %s11, %s18
    %p88 = scmp.eq.s32.totalorder %s87, 0
    %s90 = sadd.s32 %s89, 1
    %s91 = scalar_select %p88, %s89, %s90
    %p94 = pneg %p88
    %p95 = scmp.eq.s32.totalorder %s11, 1
    %p96 = por %p94, %p95
    %p97 = scmp.ne.s32.totalorder %s89, %s92
    %p98 = scmp.eq.s32.totalorder %s11, 0
    %p99 = por %p97, %p98
    %p100 = scmp.ne.s32.totalorder %s89, %s92
    %p101 = scmp.eq.s32.totalorder %s16, 1
    %p102 = por %p100, %p101
    %p103 = scmp.ne.s32.totalorder %s92, %s93
    %p104 = scmp.eq.s32.totalorder %s16, 0
    %p105 = por %p103, %p104
    %p106 = scmp.ne.s32.totalorder %s92, %s93
    %p107 = scmp.eq.s32.totalorder %s17, 1
    %p108 = por %p106, %p107
    %p110 = scmp.ne.s32.totalorder %s93, %s109
    %p111 = scmp.eq.s32.totalorder %s17, 0
    %p112 = por %p110, %p111
    %s113 = ssub.s32 %s11, %s18
    %p114 = scmp.eq.s32.totalorder %s113, 0
    %s116 = sadd.s32 %s115, 1
    %s117 = scalar_select %p114, %s115, %s116
    %p120 = pneg %p114
    %p121 = scmp.eq.s32.totalorder %s11, 1
    %p122 = por %p120, %p121
    %p123 = scmp.ne.s32.totalorder %s115, %s118
    %p124 = scmp.eq.s32.totalorder %s11, 0
    %p125 = por %p123, %p124
    %p126 = scmp.ne.s32.totalorder %s115, %s118
    %p127 = scmp.eq.s32.totalorder %s16, 1
    %p128 = por %p126, %p127
    %p129 = scmp.ne.s32.totalorder %s118, %s119
    %p130 = scmp.eq.s32.totalorder %s16, 0
    %p131 = por %p129, %p130
    %p132 = scmp.ne.s32.totalorder %s118, %s119
    %p133 = scmp.eq.s32.totalorder %s17, 1
    %p134 = por %p132, %p133
    %p136 = scmp.ne.s32.totalorder %s119, %s135
    %p137 = scmp.eq.s32.totalorder %s17, 0
    %p138 = por %p136, %p137
    %p139 = scmp.le.s32.totalorder 1, %s11
    %p140 = scmp.lt.s32.totalorder %s11, 3
    %p141 = pnand %p139, %p140
    %p142 = pneg %p141
    // Predicated region
    $region9: #{resnet_block_forward.3} parent=5 // pred_check
      _
    $region10: #{resnet_block_forward.3} parent=5 // pred_check_branch
      %144 = sbr.rel (%p141) target = $region12
    $region11: #{resnet_block_forward.3} parent=5 // pred_region
      %s145 = ssub.s32 %s11, 1
      // Predicated region
      $region13: #{resnet_block_forward.3} parent=11 // pred_check
        %p146 = pneg %p58
      $region14: #{resnet_block_forward.3} parent=11 // pred_check_branch
        %148 = sbr.rel (%p146) target = $region16
      $region15: #{resnet_block_forward.3} parent=11 // pred_region
        _
      $region16: #{resnet_block_forward.3} parent=11 // pred_fallthru
        _
      // Predicated region
      $region17: #{resnet_block_forward.3} parent=11 // pred_check
        %p149 = pneg %p79
      $region18: #{resnet_block_forward.3} parent=11 // pred_check_branch
        %151 = sbr.rel (%p149) target = $region20
      $region19: #{resnet_block_forward.3} parent=11 // pred_region
        _
      $region20: #{resnet_block_forward.3} parent=11 // pred_fallthru
        _
    $region12: #{resnet_block_forward.3} parent=5 // pred_fallthru
      _
    %p152 = scmp.lt.s32.totalorder %s11, 2
    // Predicated region
    $region21: #{resnet_block_forward.3} parent=5 // pred_check
      %p153 = pneg %p152
    $region22: #{resnet_block_forward.3} parent=5 // pred_check_branch
      %155 = sbr.rel (%p153) target = $region24
    $region23: #{resnet_block_forward.3} parent=5 // pred_region
      // Predicated region
      $region25: #{resnet_block_forward.3} parent=23 // pred_check
        %p156 = pneg %p31
      $region26: #{resnet_block_forward.3} parent=23 // pred_check_branch
        %158 = sbr.rel (%p156) target = $region28
      $region27: #{resnet_block_forward.3} parent=23 // pred_region
        %p159 = scmp.lt.s32.totalorder %s11, 1
        %s160 = scalar_select %p159, %s11, 1
        %s161 = smul.addr %s160, 2
        %s162 = smul.addr %s161, 4
        %s163 = scalar_lea.vmem %s0, %s162
      $region28: #{resnet_block_forward.3} parent=23 // pred_fallthru
        _
    $region24: #{resnet_block_forward.3} parent=5 // pred_fallthru
      _
    %p164 = scmp.le.s32.totalorder 1, %s11
    %p165 = scmp.lt.s32.totalorder %s11, 3
    %p166 = pnand %p164, %p165
    %p167 = pneg %p166
    // Predicated region
    $region29: #{resnet_block_forward.3} parent=5 // pred_check
      _
    $region30: #{resnet_block_forward.3} parent=5 // pred_check_branch
      %169 = sbr.rel (%p166) target = $region32
    $region31: #{resnet_block_forward.3} parent=5 // pred_region
      %s170 = ssub.s32 %s11, 1
      %p171 = scmp.lt.s32.totalorder %s16, 1
      %s172 = scalar_select %p171, %s16, 1
      %s173 = smul.addr %s172, 2
      %s174 = smul.addr %s173, 4
      %s175 = scalar_lea.vmem %s0, %s174
      %p176 = pneg %p37
      %p177 = pneg %p34
      %p178 = pneg %p58
      %p179 = pneg %p55
      %p180 = pneg %p79
      %p181 = pneg %p76
      %p182 = pneg %p105
      %p183 = pneg %p102
      %p184 = scmp.lt.s32.totalorder %s16, 1
      %s185 = scalar_select %p184, %s16, 1
      %s186 = smul.addr %s185, 2
      %s187 = smul.addr %s186, 4
      %s188 = scalar_lea.vmem %s3, %s187
      %p189 = pneg %p131
      %p190 = pneg %p128
      %p191 = scmp.lt.s32.totalorder %s16, 1
      %s192 = scalar_select %p191, %s16, 1
      %s193 = smul.addr %s192, 4
      %s194 = scalar_lea.vmem %s4, %s193
      %p195 = scmp.lt.s32.totalorder %s16, 1
      %s196 = scalar_select %p195, %s16, 1
      %s197 = smul.addr %s196, 2
      %s198 = smul.addr %s197, 4
      %s199 = scalar_lea.vmem %s0, %s198
      %p200 = scmp.lt.s32.totalorder %s16, 1
      %s201 = scalar_select %p200, %s16, 1
      %s202 = smul.addr %s201, 2
      %s203 = smul.addr %s202, 4
      %s204 = scalar_lea.vmem %s3, %s203
      %p205 = scmp.lt.s32.totalorder %s16, 1
      %s206 = scalar_select %p205, %s16, 1
      %s207 = smul.addr %s206, 4
      %s208 = scalar_lea.vmem %s4, %s207
      %v209 = vld [vmem:[%s199] sm:$0xff]
      %v210 = vld [vmem:[%s1] sm:$0xf]
      %v211 = vld [vmem:[%s2] sm:$0xff]
      %v212 = vld [vmem:[%s2 + $0x8] sm:$0xff]
      %v213 = vld [vmem:[%s2 + $0x10] sm:$0x1]
      %v214 = vld [vmem:[%s2 + $0x18] sm:$0x1]
      %v216 = vcombine.high %v209, %v209
      %218 = vrot.lane.b32.xlu0 %v209, 17
      %v219 = vpop.permute.xlu0 %218
      %220 = vrot.lane.b32.xlu0 %v216, 17
      %v221 = vpop.permute.xlu0 %220
      %v222 = vlaneseq
      %v223 = vand.u32 %v222, 127
      %vm224 = vcmp.lt.s32.totalorder %v223, 17
      %v225 = vsel %vm224, %v219, %v221
      %v226 = vsel %vm224, %v221, %v219
      %v227 = vlaneseq
      %v228 = vshrl.u32 %v227, 7
      %v229 = vsub.s32 0, %v228
      %v230 = vrot.slane %v211, %v229
      %v231 = vlaneseq
      %v232 = vshrl.u32 %v231, 7
      %v233 = vsub.s32 0, %v232
      %v234 = vrot.slane %v212, %v233
      %v235 = vmul.f32 %v226, %v230
      %v236 = vmul.f32 %v225, %v234
      %238 = vset.pattern.permute.xlu0 0
      %239 = vperm.xlu0 %238, %v210
      %v240 = vpop.permute.xlu0 %239
      %v242 = vlaneseq
      %v243 = vshrl.u32 %v242, 7
      %v244 = vsub.s32 0, %v243
      %v245 = vrot.slane %v235, %v244
      %v246 = vlaneseq
      %v247 = vshrl.u32 %v246, 7
      %v248 = vsub.s32 0, %v247
      %v249 = vrot.slane %v236, %v248
      %v250 = vmul.f32 %v240, %v245
      %v251 = vmul.f32 %v240, %v249
      %v252 = vadd.f32 %v250, 0.0
      %v253 = vadd.f32 %v251, 0.0
      %254 = vset.pattern.permute.xlu0 1
      %255 = vperm.xlu0 %254, %v210
      %v256 = vpop.permute.xlu0 %255
      %v258 = vlaneseq
      %v259 = vshrl.u32 %v258, 7
      %v260 = vsub.s32 1, %v259
      %v261 = vrot.slane %v235, %v260
      %v262 = vlaneseq
      %v263 = vshrl.u32 %v262, 7
      %v264 = vsub.s32 1, %v263
      %v265 = vrot.slane %v236, %v264
      %v266 = vmul.f32 %v256, %v261
      %v267 = vmul.f32 %v256, %v265
      %v268 = vadd.f32 %v252, %v266
      %v269 = vadd.f32 %v253, %v267
      %270 = vset.pattern.permute.xlu0 2
      %271 = vperm.xlu0 %270, %v210
      %v272 = vpop.permute.xlu0 %271
      %v274 = vlaneseq
      %v275 = vshrl.u32 %v274, 7
      %v276 = vsub.s32 2, %v275
      %v277 = vrot.slane %v235, %v276
      %v278 = vlaneseq
      %v279 = vshrl.u32 %v278, 7
      %v280 = vsub.s32 2, %v279
      %v281 = vrot.slane %v236, %v280
      %v282 = vmul.f32 %v272, %v277
      %v283 = vmul.f32 %v272, %v281
      %v284 = vadd.f32 %v268, %v282
      %v285 = vadd.f32 %v269, %v283
      %286 = vset.pattern.permute.xlu0 3
      %287 = vperm.xlu0 %286, %v210
      %v288 = vpop.permute.xlu0 %287
      %v290 = vlaneseq
      %v291 = vshrl.u32 %v290, 7
      %v292 = vsub.s32 3, %v291
      %v293 = vrot.slane %v235, %v292
      %v294 = vlaneseq
      %v295 = vshrl.u32 %v294, 7
      %v296 = vsub.s32 3, %v295
      %v297 = vrot.slane %v236, %v296
      %v298 = vmul.f32 %v288, %v293
      %v299 = vmul.f32 %v288, %v297
      %v300 = vadd.f32 %v284, %v298
      %v301 = vadd.f32 %v285, %v299
      %302 = vrot.lane.b32.xlu0 %v209, 16
      %v303 = vpop.permute.xlu0 %302
      %304 = vrot.lane.b32.xlu0 %v216, 16
      %v305 = vpop.permute.xlu0 %304
      %vm306 = vcmp.lt.s32.totalorder %v223, 16
      %v307 = vsel %vm306, %v303, %v305
      %v308 = vsel %vm306, %v305, %v303
      %v309 = vlaneseq
      %v310 = vshrl.u32 %v309, 7
      %v311 = vsub.s32 1, %v310
      %v312 = vrot.slane %v211, %v311
      %v313 = vlaneseq
      %v314 = vshrl.u32 %v313, 7
      %v315 = vsub.s32 1, %v314
      %v316 = vrot.slane %v212, %v315
      %v317 = vmul.f32 %v308, %v312
      %v318 = vmul.f32 %v307, %v316
      %319 = vset.pattern.permute.xlu0 4
      %320 = vperm.xlu0 %319, %v210
      %v321 = vpop.permute.xlu0 %320
      %v323 = vlaneseq
      %v324 = vshrl.u32 %v323, 7
      %v325 = vsub.s32 0, %v324
      %v326 = vrot.slane %v317, %v325
      %v327 = vlaneseq
      %v328 = vshrl.u32 %v327, 7
      %v329 = vsub.s32 0, %v328
      %v330 = vrot.slane %v318, %v329
      %v331 = vmul.f32 %v321, %v326
      %v332 = vmul.f32 %v321, %v330
      %v333 = vadd.f32 %v300, %v331
      %v334 = vadd.f32 %v301, %v332
      %335 = vset.pattern.permute.xlu0 5
      %336 = vperm.xlu0 %335, %v210
      %v337 = vpop.permute.xlu0 %336
      %v339 = vlaneseq
      %v340 = vshrl.u32 %v339, 7
      %v341 = vsub.s32 1, %v340
      %v342 = vrot.slane %v317, %v341
      %v343 = vlaneseq
      %v344 = vshrl.u32 %v343, 7
      %v345 = vsub.s32 1, %v344
      %v346 = vrot.slane %v318, %v345
      %v347 = vmul.f32 %v337, %v342
      %v348 = vmul.f32 %v337, %v346
      %v349 = vadd.f32 %v333, %v347
      %v350 = vadd.f32 %v334, %v348
      %351 = vset.pattern.permute.xlu0 6
      %352 = vperm.xlu0 %351, %v210
      %v353 = vpop.permute.xlu0 %352
      %v355 = vlaneseq
      %v356 = vshrl.u32 %v355, 7
      %v357 = vsub.s32 2, %v356
      %v358 = vrot.slane %v317, %v357
      %v359 = vlaneseq
      %v360 = vshrl.u32 %v359, 7
      %v361 = vsub.s32 2, %v360
      %v362 = vrot.slane %v318, %v361
      %v363 = vmul.f32 %v353, %v358
      %v364 = vmul.f32 %v353, %v362
      %v365 = vadd.f32 %v349, %v363
      %v366 = vadd.f32 %v350, %v364
      %367 = vset.pattern.permute.xlu0 7
      %368 = vperm.xlu0 %367, %v210
      %v369 = vpop.permute.xlu0 %368
      %v371 = vlaneseq
      %v372 = vshrl.u32 %v371, 7
      %v373 = vsub.s32 3, %v372
      %v374 = vrot.slane %v317, %v373
      %v375 = vlaneseq
      %v376 = vshrl.u32 %v375, 7
      %v377 = vsub.s32 3, %v376
      %v378 = vrot.slane %v318, %v377
      %v379 = vmul.f32 %v369, %v374
      %v380 = vmul.f32 %v369, %v378
      %v381 = vadd.f32 %v365, %v379
      %v382 = vadd.f32 %v366, %v380
      %383 = vrot.lane.b32.xlu0 %v209, 15
      %v384 = vpop.permute.xlu0 %383
      %385 = vrot.lane.b32.xlu0 %v216, 15
      %v386 = vpop.permute.xlu0 %385
      %vm387 = vcmp.lt.s32.totalorder %v223, 15
      %v388 = vsel %vm387, %v384, %v386
      %v389 = vsel %vm387, %v386, %v384
      %v390 = vlaneseq
      %v391 = vshrl.u32 %v390, 7
      %v392 = vsub.s32 2, %v391
      %v393 = vrot.slane %v211, %v392
      %v394 = vlaneseq
      %v395 = vshrl.u32 %v394, 7
      %v396 = vsub.s32 2, %v395
      %v397 = vrot.slane %v212, %v396
      %v398 = vmul.f32 %v389, %v393
      %v399 = vmul.f32 %v388, %v397
      %400 = vset.pattern.permute.xlu0 8
      %401 = vperm.xlu0 %400, %v210
      %v402 = vpop.permute.xlu0 %401
      %v404 = vlaneseq
      %v405 = vshrl.u32 %v404, 7
      %v406 = vsub.s32 0, %v405
      %v407 = vrot.slane %v398, %v406
      %v408 = vlaneseq
      %v409 = vshrl.u32 %v408, 7
      %v410 = vsub.s32 0, %v409
      %v411 = vrot.slane %v399, %v410
      %v412 = vmul.f32 %v402, %v407
      %v413 = vmul.f32 %v402, %v411
      %v414 = vadd.f32 %v381, %v412
      %v415 = vadd.f32 %v382, %v413
      %416 = vset.pattern.permute.xlu0 9
      %417 = vperm.xlu0 %416, %v210
      %v418 = vpop.permute.xlu0 %417
      %v420 = vlaneseq
      %v421 = vshrl.u32 %v420, 7
      %v422 = vsub.s32 1, %v421
      %v423 = vrot.slane %v398, %v422
      %v424 = vlaneseq
      %v425 = vshrl.u32 %v424, 7
      %v426 = vsub.s32 1, %v425
      %v427 = vrot.slane %v399, %v426
      %v428 = vmul.f32 %v418, %v423
      %v429 = vmul.f32 %v418, %v427
      %v430 = vadd.f32 %v414, %v428
      %v431 = vadd.f32 %v415, %v429
      %432 = vset.pattern.permute.xlu0 10
      %433 = vperm.xlu0 %432, %v210
      %v434 = vpop.permute.xlu0 %433
      %v436 = vlaneseq
      %v437 = vshrl.u32 %v436, 7
      %v438 = vsub.s32 2, %v437
      %v439 = vrot.slane %v398, %v438
      %v440 = vlaneseq
      %v441 = vshrl.u32 %v440, 7
      %v442 = vsub.s32 2, %v441
      %v443 = vrot.slane %v399, %v442
      %v444 = vmul.f32 %v434, %v439
      %v445 = vmul.f32 %v434, %v443
      %v446 = vadd.f32 %v430, %v444
      %v447 = vadd.f32 %v431, %v445
      %448 = vset.pattern.permute.xlu0 11
      %449 = vperm.xlu0 %448, %v210
      %v450 = vpop.permute.xlu0 %449
      %v452 = vlaneseq
      %v453 = vshrl.u32 %v452, 7
      %v454 = vsub.s32 3, %v453
      %v455 = vrot.slane %v398, %v454
      %v456 = vlaneseq
      %v457 = vshrl.u32 %v456, 7
      %v458 = vsub.s32 3, %v457
      %v459 = vrot.slane %v399, %v458
      %v460 = vmul.f32 %v450, %v455
      %v461 = vmul.f32 %v450, %v459
      %v462 = vadd.f32 %v446, %v460
      %v463 = vadd.f32 %v447, %v461
      %464 = vrot.lane.b32.xlu0 %v209, 1
      %v465 = vpop.permute.xlu0 %464
      %466 = vrot.lane.b32.xlu0 %v216, 1
      %v467 = vpop.permute.xlu0 %466
      %vm468 = vcmp.lt.s32.totalorder %v223, 1
      %v469 = vsel %vm468, %v465, %v467
      %v470 = vsel %vm468, %v467, %v465
      %v471 = vlaneseq
      %v472 = vshrl.u32 %v471, 7
      %v473 = vsub.s32 3, %v472
      %v474 = vrot.slane %v211, %v473
      %v475 = vlaneseq
      %v476 = vshrl.u32 %v475, 7
      %v477 = vsub.s32 3, %v476
      %v478 = vrot.slane %v212, %v477
      %v479 = vmul.f32 %v470, %v474
      %v480 = vmul.f32 %v469, %v478
      %481 = vset.pattern.permute.xlu0 12
      %482 = vperm.xlu0 %481, %v210
      %v483 = vpop.permute.xlu0 %482
      %v485 = vlaneseq
      %v486 = vshrl.u32 %v485, 7
      %v487 = vsub.s32 0, %v486
      %v488 = vrot.slane %v479, %v487
      %v489 = vlaneseq
      %v490 = vshrl.u32 %v489, 7
      %v491 = vsub.s32 0, %v490
      %v492 = vrot.slane %v480, %v491
      %v493 = vmul.f32 %v483, %v488
      %v494 = vmul.f32 %v483, %v492
      %v495 = vadd.f32 %v462, %v493
      %v496 = vadd.f32 %v463, %v494
      %497 = vset.pattern.permute.xlu0 13
      %498 = vperm.xlu0 %497, %v210
      %v499 = vpop.permute.xlu0 %498
      %v501 = vlaneseq
      %v502 = vshrl.u32 %v501, 7
      %v503 = vsub.s32 1, %v502
      %v504 = vrot.slane %v479, %v503
      %v505 = vlaneseq
      %v506 = vshrl.u32 %v505, 7
      %v507 = vsub.s32 1, %v506
      %v508 = vrot.slane %v480, %v507
      %v509 = vmul.f32 %v499, %v504
      %v510 = vmul.f32 %v499, %v508
      %v511 = vadd.f32 %v495, %v509
      %v512 = vadd.f32 %v496, %v510
      %513 = vset.pattern.permute.xlu0 14
      %514 = vperm.xlu0 %513, %v210
      %v515 = vpop.permute.xlu0 %514
      %v517 = vlaneseq
      %v518 = vshrl.u32 %v517, 7
      %v519 = vsub.s32 2, %v518
      %v520 = vrot.slane %v479, %v519
      %v521 = vlaneseq
      %v522 = vshrl.u32 %v521, 7
      %v523 = vsub.s32 2, %v522
      %v524 = vrot.slane %v480, %v523
      %v525 = vmul.f32 %v515, %v520
      %v526 = vmul.f32 %v515, %v524
      %v527 = vadd.f32 %v511, %v525
      %v528 = vadd.f32 %v512, %v526
      %529 = vset.pattern.permute.xlu0 15
      %530 = vperm.xlu0 %529, %v210
      %v531 = vpop.permute.xlu0 %530
      %v533 = vlaneseq
      %v534 = vshrl.u32 %v533, 7
      %v535 = vsub.s32 3, %v534
      %v536 = vrot.slane %v479, %v535
      %v537 = vlaneseq
      %v538 = vshrl.u32 %v537, 7
      %v539 = vsub.s32 3, %v538
      %v540 = vrot.slane %v480, %v539
      %v541 = vmul.f32 %v531, %v536
      %v542 = vmul.f32 %v531, %v540
      %v543 = vadd.f32 %v527, %v541
      %v544 = vadd.f32 %v528, %v542
      %545 = vset.pattern.permute.xlu0 16
      %546 = vperm.xlu0 %545, %v210
      %v547 = vpop.permute.xlu0 %546
      %v549 = vlaneseq
      %v550 = vshrl.u32 %v549, 7
      %v551 = vsub.s32 0, %v550
      %v552 = vrot.slane %v209, %v551
      %v553 = vlaneseq
      %v554 = vshrl.u32 %v553, 7
      %v555 = vsub.s32 4, %v554
      %v556 = vrot.slane %v209, %v555
      %v559 = vlaneseq
      %v560 = vshrl.u32 %v559, 7
      %v561 = vsub.s32 0, %v560
      %v562 = vrot.slane %v552, %v561
      %v563 = vlaneseq
      %v564 = vshrl.u32 %v563, 7
      %v565 = vsub.s32 0, %v564
      %v566 = vrot.slane %v556, %v565
      %v567 = vmul.f32 %v547, %v562
      %v568 = vmul.f32 %v547, %v566
      %v569 = vadd.f32 %v543, %v567
      %v570 = vadd.f32 %v544, %v568
      %571 = vset.pattern.permute.xlu0 17
      %572 = vperm.xlu0 %571, %v210
      %v573 = vpop.permute.xlu0 %572
      %v575 = vlaneseq
      %v576 = vshrl.u32 %v575, 7
      %v577 = vsub.s32 1, %v576
      %v578 = vrot.slane %v209, %v577
      %v579 = vlaneseq
      %v580 = vshrl.u32 %v579, 7
      %v581 = vsub.s32 5, %v580
      %v582 = vrot.slane %v209, %v581
      %v585 = vlaneseq
      %v586 = vshrl.u32 %v585, 7
      %v587 = vsub.s32 1, %v586
      %v588 = vrot.slane %v578, %v587
      %v589 = vlaneseq
      %v590 = vshrl.u32 %v589, 7
      %v591 = vsub.s32 1, %v590
      %v592 = vrot.slane %v582, %v591
      %v593 = vmul.f32 %v573, %v588
      %v594 = vmul.f32 %v573, %v592
      %v595 = vadd.f32 %v569, %v593
      %v596 = vadd.f32 %v570, %v594
      %597 = vset.pattern.permute.xlu0 18
      %598 = vperm.xlu0 %597, %v210
      %v599 = vpop.permute.xlu0 %598
      %v601 = vlaneseq
      %v602 = vshrl.u32 %v601, 7
      %v603 = vsub.s32 2, %v602
      %v604 = vrot.slane %v209, %v603
      %v605 = vlaneseq
      %v606 = vshrl.u32 %v605, 7
      %v607 = vsub.s32 6, %v606
      %v608 = vrot.slane %v209, %v607
      %v611 = vlaneseq
      %v612 = vshrl.u32 %v611, 7
      %v613 = vsub.s32 2, %v612
      %v614 = vrot.slane %v604, %v613
      %v615 = vlaneseq
      %v616 = vshrl.u32 %v615, 7
      %v617 = vsub.s32 2, %v616
      %v618 = vrot.slane %v608, %v617
      %v619 = vmul.f32 %v599, %v614
      %v620 = vmul.f32 %v599, %v618
      %v621 = vadd.f32 %v595, %v619
      %v622 = vadd.f32 %v596, %v620
      %623 = vset.pattern.permute.xlu0 19
      %624 = vperm.xlu0 %623, %v210
      %v625 = vpop.permute.xlu0 %624
      %v627 = vlaneseq
      %v628 = vshrl.u32 %v627, 7
      %v629 = vsub.s32 3, %v628
      %v630 = vrot.slane %v209, %v629
      %v631 = vlaneseq
      %v632 = vshrl.u32 %v631, 7
      %v633 = vsub.s32 7, %v632
      %v634 = vrot.slane %v209, %v633
      %v637 = vlaneseq
      %v638 = vshrl.u32 %v637, 7
      %v639 = vsub.s32 3, %v638
      %v640 = vrot.slane %v630, %v639
      %v641 = vlaneseq
      %v642 = vshrl.u32 %v641, 7
      %v643 = vsub.s32 3, %v642
      %v644 = vrot.slane %v634, %v643
      %v645 = vmul.f32 %v625, %v640
      %v646 = vmul.f32 %v625, %v644
      %v647 = vadd.f32 %v621, %v645
      %v648 = vadd.f32 %v622, %v646
      %649 = vrot.lane.b32.xlu0 %v209, 127
      %v650 = vpop.permute.xlu0 %649
      %651 = vrot.lane.b32.xlu0 %v216, 127
      %v652 = vpop.permute.xlu0 %651
      %vm653 = vcmp.lt.s32.totalorder %v223, 127
      %v654 = vsel %vm653, %v650, %v652
      %v655 = vsel %vm653, %v652, %v650
      %v656 = vlaneseq
      %v657 = vshrl.u32 %v656, 7
      %v658 = vsub.s32 5, %v657
      %v659 = vrot.slane %v211, %v658
      %v660 = vlaneseq
      %v661 = vshrl.u32 %v660, 7
      %v662 = vsub.s32 5, %v661
      %v663 = vrot.slane %v212, %v662
      %v664 = vmul.f32 %v654, %v659
      %v665 = vmul.f32 %v655, %v663
      %666 = vset.pattern.permute.xlu0 20
      %667 = vperm.xlu0 %666, %v210
      %v668 = vpop.permute.xlu0 %667
      %v670 = vlaneseq
      %v671 = vshrl.u32 %v670, 7
      %v672 = vsub.s32 0, %v671
      %v673 = vrot.slane %v664, %v672
      %v674 = vlaneseq
      %v675 = vshrl.u32 %v674, 7
      %v676 = vsub.s32 0, %v675
      %v677 = vrot.slane %v665, %v676
      %v678 = vmul.f32 %v668, %v673
      %v679 = vmul.f32 %v668, %v677
      %v680 = vadd.f32 %v647, %v678
      %v681 = vadd.f32 %v648, %v679
      %682 = vset.pattern.permute.xlu0 21
      %683 = vperm.xlu0 %682, %v210
      %v684 = vpop.permute.xlu0 %683
      %v686 = vlaneseq
      %v687 = vshrl.u32 %v686, 7
      %v688 = vsub.s32 1, %v687
      %v689 = vrot.slane %v664, %v688
      %v690 = vlaneseq
      %v691 = vshrl.u32 %v690, 7
      %v692 = vsub.s32 1, %v691
      %v693 = vrot.slane %v665, %v692
      %v694 = vmul.f32 %v684, %v689
      %v695 = vmul.f32 %v684, %v693
      %v696 = vadd.f32 %v680, %v694
      %v697 = vadd.f32 %v681, %v695
      %698 = vset.pattern.permute.xlu0 22
      %699 = vperm.xlu0 %698, %v210
      %v700 = vpop.permute.xlu0 %699
      %v702 = vlaneseq
      %v703 = vshrl.u32 %v702, 7
      %v704 = vsub.s32 2, %v703
      %v705 = vrot.slane %v664, %v704
      %v706 = vlaneseq
      %v707 = vshrl.u32 %v706, 7
      %v708 = vsub.s32 2, %v707
      %v709 = vrot.slane %v665, %v708
      %v710 = vmul.f32 %v700, %v705
      %v711 = vmul.f32 %v700, %v709
      %v712 = vadd.f32 %v696, %v710
      %v713 = vadd.f32 %v697, %v711
      %714 = vset.pattern.permute.xlu0 23
      %715 = vperm.xlu0 %714, %v210
      %v716 = vpop.permute.xlu0 %715
      %v718 = vlaneseq
      %v719 = vshrl.u32 %v718, 7
      %v720 = vsub.s32 3, %v719
      %v721 = vrot.slane %v664, %v720
      %v722 = vlaneseq
      %v723 = vshrl.u32 %v722, 7
      %v724 = vsub.s32 3, %v723
      %v725 = vrot.slane %v665, %v724
      %v726 = vmul.f32 %v716, %v721
      %v727 = vmul.f32 %v716, %v725
      %v728 = vadd.f32 %v712, %v726
      %v729 = vadd.f32 %v713, %v727
      %730 = vrot.lane.b32.xlu0 %v209, 113
      %v731 = vpop.permute.xlu0 %730
      %732 = vrot.lane.b32.xlu0 %v216, 113
      %v733 = vpop.permute.xlu0 %732
      %vm734 = vcmp.lt.s32.totalorder %v223, 113
      %v735 = vsel %vm734, %v731, %v733
      %v736 = vsel %vm734, %v733, %v731
      %v737 = vlaneseq
      %v738 = vshrl.u32 %v737, 7
      %v739 = vsub.s32 6, %v738
      %v740 = vrot.slane %v211, %v739
      %v741 = vlaneseq
      %v742 = vshrl.u32 %v741, 7
      %v743 = vsub.s32 6, %v742
      %v744 = vrot.slane %v212, %v743
      %v745 = vmul.f32 %v735, %v740
      %v746 = vmul.f32 %v736, %v744
      %747 = vset.pattern.permute.xlu0 24
      %748 = vperm.xlu0 %747, %v210
      %v749 = vpop.permute.xlu0 %748
      %v751 = vlaneseq
      %v752 = vshrl.u32 %v751, 7
      %v753 = vsub.s32 0, %v752
      %v754 = vrot.slane %v745, %v753
      %v755 = vlaneseq
      %v756 = vshrl.u32 %v755, 7
      %v757 = vsub.s32 0, %v756
      %v758 = vrot.slane %v746, %v757
      %v759 = vmul.f32 %v749, %v754
      %v760 = vmul.f32 %v749, %v758
      %v761 = vadd.f32 %v728, %v759
      %v762 = vadd.f32 %v729, %v760
      %763 = vset.pattern.permute.xlu0 25
      %764 = vperm.xlu0 %763, %v210
      %v765 = vpop.permute.xlu0 %764
      %v767 = vlaneseq
      %v768 = vshrl.u32 %v767, 7
      %v769 = vsub.s32 1, %v768
      %v770 = vrot.slane %v745, %v769
      %v771 = vlaneseq
      %v772 = vshrl.u32 %v771, 7
      %v773 = vsub.s32 1, %v772
      %v774 = vrot.slane %v746, %v773
      %v775 = vmul.f32 %v765, %v770
      %v776 = vmul.f32 %v765, %v774
      %v777 = vadd.f32 %v761, %v775
      %v778 = vadd.f32 %v762, %v776
      %779 = vset.pattern.permute.xlu0 26
      %780 = vperm.xlu0 %779, %v210
      %v781 = vpop.permute.xlu0 %780
      %v783 = vlaneseq
      %v784 = vshrl.u32 %v783, 7
      %v785 = vsub.s32 2, %v784
      %v786 = vrot.slane %v745, %v785
      %v787 = vlaneseq
      %v788 = vshrl.u32 %v787, 7
      %v789 = vsub.s32 2, %v788
      %v790 = vrot.slane %v746, %v789
      %v791 = vmul.f32 %v781, %v786
      %v792 = vmul.f32 %v781, %v790
      %v793 = vadd.f32 %v777, %v791
      %v794 = vadd.f32 %v778, %v792
      %795 = vset.pattern.permute.xlu0 27
      %796 = vperm.xlu0 %795, %v210
      %v797 = vpop.permute.xlu0 %796
      %v799 = vlaneseq
      %v800 = vshrl.u32 %v799, 7
      %v801 = vsub.s32 3, %v800
      %v802 = vrot.slane %v745, %v801
      %v803 = vlaneseq
      %v804 = vshrl.u32 %v803, 7
      %v805 = vsub.s32 3, %v804
      %v806 = vrot.slane %v746, %v805
      %v807 = vmul.f32 %v797, %v802
      %v808 = vmul.f32 %v797, %v806
      %v809 = vadd.f32 %v793, %v807
      %v810 = vadd.f32 %v794, %v808
      %811 = vrot.lane.b32.xlu0 %v209, 112
      %v812 = vpop.permute.xlu0 %811
      %813 = vrot.lane.b32.xlu0 %v216, 112
      %v814 = vpop.permute.xlu0 %813
      %vm815 = vcmp.lt.s32.totalorder %v223, 112
      %v816 = vsel %vm815, %v812, %v814
      %v817 = vsel %vm815, %v814, %v812
      %v818 = vlaneseq
      %v819 = vshrl.u32 %v818, 7
      %v820 = vsub.s32 7, %v819
      %v821 = vrot.slane %v211, %v820
      %v822 = vlaneseq
      %v823 = vshrl.u32 %v822, 7
      %v824 = vsub.s32 7, %v823
      %v825 = vrot.slane %v212, %v824
      %v826 = vmul.f32 %v816, %v821
      %v827 = vmul.f32 %v817, %v825
      %828 = vset.pattern.permute.xlu0 28
      %829 = vperm.xlu0 %828, %v210
      %v830 = vpop.permute.xlu0 %829
      %v832 = vlaneseq
      %v833 = vshrl.u32 %v832, 7
      %v834 = vsub.s32 0, %v833
      %v835 = vrot.slane %v826, %v834
      %v836 = vlaneseq
      %v837 = vshrl.u32 %v836, 7
      %v838 = vsub.s32 0, %v837
      %v839 = vrot.slane %v827, %v838
      %v840 = vmul.f32 %v830, %v835
      %v841 = vmul.f32 %v830, %v839
      %v842 = vadd.f32 %v809, %v840
      %v843 = vadd.f32 %v810, %v841
      %844 = vset.pattern.permute.xlu0 29
      %845 = vperm.xlu0 %844, %v210
      %v846 = vpop.permute.xlu0 %845
      %v848 = vlaneseq
      %v849 = vshrl.u32 %v848, 7
      %v850 = vsub.s32 1, %v849
      %v851 = vrot.slane %v826, %v850
      %v852 = vlaneseq
      %v853 = vshrl.u32 %v852, 7
      %v854 = vsub.s32 1, %v853
      %v855 = vrot.slane %v827, %v854
      %v856 = vmul.f32 %v846, %v851
      %v857 = vmul.f32 %v846, %v855
      %v858 = vadd.f32 %v842, %v856
      %v859 = vadd.f32 %v843, %v857
      %860 = vset.pattern.permute.xlu0 30
      %861 = vperm.xlu0 %860, %v210
      %v862 = vpop.permute.xlu0 %861
      %v864 = vlaneseq
      %v865 = vshrl.u32 %v864, 7
      %v866 = vsub.s32 2, %v865
      %v867 = vrot.slane %v826, %v866
      %v868 = vlaneseq
      %v869 = vshrl.u32 %v868, 7
      %v870 = vsub.s32 2, %v869
      %v871 = vrot.slane %v827, %v870
      %v872 = vmul.f32 %v862, %v867
      %v873 = vmul.f32 %v862, %v871
      %v874 = vadd.f32 %v858, %v872
      %v875 = vadd.f32 %v859, %v873
      %876 = vset.pattern.permute.xlu0 31
      %877 = vperm.xlu0 %876, %v210
      %v878 = vpop.permute.xlu0 %877
      %v880 = vlaneseq
      %v881 = vshrl.u32 %v880, 7
      %v882 = vsub.s32 3, %v881
      %v883 = vrot.slane %v826, %v882
      %v884 = vlaneseq
      %v885 = vshrl.u32 %v884, 7
      %v886 = vsub.s32 3, %v885
      %v887 = vrot.slane %v827, %v886
      %v888 = vmul.f32 %v878, %v883
      %v889 = vmul.f32 %v878, %v887
      %v890 = vadd.f32 %v874, %v888
      %v891 = vadd.f32 %v875, %v889
      %892 = vrot.lane.b32.xlu0 %v209, 111
      %v893 = vpop.permute.xlu0 %892
      %894 = vrot.lane.b32.xlu0 %v216, 111
      %v895 = vpop.permute.xlu0 %894
      %vm896 = vcmp.lt.s32.totalorder %v223, 111
      %v897 = vsel %vm896, %v893, %v895
      %v898 = vsel %vm896, %v895, %v893
      %v899 = vlaneseq
      %v900 = vshrl.u32 %v899, 7
      %v901 = vsub.s32 0, %v900
      %v902 = vrot.slane %v213, %v901
      %v903 = vlaneseq
      %v904 = vshrl.u32 %v903, 7
      %v905 = vsub.s32 0, %v904
      %v906 = vrot.slane %v214, %v905
      %v907 = vmul.f32 %v897, %v902
      %v908 = vmul.f32 %v898, %v906
      %909 = vset.pattern.permute.xlu0 32
      %910 = vperm.xlu0 %909, %v210
      %v911 = vpop.permute.xlu0 %910
      %v913 = vlaneseq
      %v914 = vshrl.u32 %v913, 7
      %v915 = vsub.s32 0, %v914
      %v916 = vrot.slane %v907, %v915
      %v917 = vlaneseq
      %v918 = vshrl.u32 %v917, 7
      %v919 = vsub.s32 0, %v918
      %v920 = vrot.slane %v908, %v919
      %v921 = vmul.f32 %v911, %v916
      %v922 = vmul.f32 %v911, %v920
      %v923 = vadd.f32 %v890, %v921
      %v924 = vadd.f32 %v891, %v922
      %925 = vset.pattern.permute.xlu0 33
      %926 = vperm.xlu0 %925, %v210
      %v927 = vpop.permute.xlu0 %926
      %v929 = vlaneseq
      %v930 = vshrl.u32 %v929, 7
      %v931 = vsub.s32 1, %v930
      %v932 = vrot.slane %v907, %v931
      %v933 = vlaneseq
      %v934 = vshrl.u32 %v933, 7
      %v935 = vsub.s32 1, %v934
      %v936 = vrot.slane %v908, %v935
      %v937 = vmul.f32 %v927, %v932
      %v938 = vmul.f32 %v927, %v936
      %v939 = vadd.f32 %v923, %v937
      %v940 = vadd.f32 %v924, %v938
      %941 = vset.pattern.permute.xlu0 34
      %942 = vperm.xlu0 %941, %v210
      %v943 = vpop.permute.xlu0 %942
      %v945 = vlaneseq
      %v946 = vshrl.u32 %v945, 7
      %v947 = vsub.s32 2, %v946
      %v948 = vrot.slane %v907, %v947
      %v949 = vlaneseq
      %v950 = vshrl.u32 %v949, 7
      %v951 = vsub.s32 2, %v950
      %v952 = vrot.slane %v908, %v951
      %v953 = vmul.f32 %v943, %v948
      %v954 = vmul.f32 %v943, %v952
      %v955 = vadd.f32 %v939, %v953
      %v956 = vadd.f32 %v940, %v954
      %957 = vset.pattern.permute.xlu0 35
      %958 = vperm.xlu0 %957, %v210
      %v959 = vpop.permute.xlu0 %958
      %v961 = vlaneseq
      %v962 = vshrl.u32 %v961, 7
      %v963 = vsub.s32 3, %v962
      %v964 = vrot.slane %v907, %v963
      %v965 = vlaneseq
      %v966 = vshrl.u32 %v965, 7
      %v967 = vsub.s32 3, %v966
      %v968 = vrot.slane %v908, %v967
      %v969 = vmul.f32 %v959, %v964
      %v970 = vmul.f32 %v959, %v968
      %v971 = vadd.f32 %v955, %v969
      %v972 = vadd.f32 %v956, %v970
      %v975 = vcombine.low %v971, %v972
      %977 = vst [vmem:[%s204] sm:$0xff] %v975
      %vm978 = vcmask 1043456
      %v979 = vsel %vm978, %v971, 0.0
      %v980 = vsel %vm978, %v972, 0.0
      %v981 = vadd.f32 %v979, %v980
      %982 = vadd.xlane.f32.xlu0 %v981
      %v983 = vpop.xlane.xlu0 %982
      %vm984 = vcmask 3072
      %985 = vst.msk [vmem:[%s208] sm:$0xf] %vm984, %v983
      %v986 = vmul.f32 %v971, %v971
      %v987 = vmul.f32 %v972, %v972
      %v988 = vsel %vm978, %v986, 0.0
      %v989 = vsel %vm978, %v987, 0.0
      %v990 = vadd.f32 %v988, %v989
      %991 = vadd.xlane.f32.xlu0 %v990
      %v992 = vpop.xlane.xlu0 %991
      %vm993 = vcmask 11272
      %994 = vst.msk [vmem:[%s208] sm:$0xf] %vm993, %v992
      %p995 = scmp.lt.s32.totalorder %s16, 1
      %s996 = scalar_select %p995, %s16, 1
      %s997 = smul.addr %s996, 2
      %s998 = smul.addr %s997, 4
      %s999 = scalar_lea.vmem %s3, %s998
      %p1000 = scmp.lt.s32.totalorder %s16, 1
      %s1001 = scalar_select %p1000, %s16, 1
      %s1002 = smul.addr %s1001, 4
      %s1003 = scalar_lea.vmem %s4, %s1002
      // Predicated region
      $region33: #{resnet_block_forward.3} parent=31 // pred_check
        %p1004 = pneg %p102
      $region34: #{resnet_block_forward.3} parent=31 // pred_check_branch
        %1006 = sbr.rel (%p1004) target = $region36
      $region35: #{resnet_block_forward.3} parent=31 // pred_region
        _
      $region36: #{resnet_block_forward.3} parent=31 // pred_fallthru
        _
      // Predicated region
      $region37: #{resnet_block_forward.3} parent=31 // pred_check
        %p1007 = pneg %p128
      $region38: #{resnet_block_forward.3} parent=31 // pred_check_branch
        %1009 = sbr.rel (%p1007) target = $region40
      $region39: #{resnet_block_forward.3} parent=31 // pred_region
        _
      $region40: #{resnet_block_forward.3} parent=31 // pred_fallthru
        _
    $region32: #{resnet_block_forward.3} parent=5 // pred_fallthru
      _
    %p1010 = scmp.le.s32.totalorder 2, %s11
    // Predicated region
    $region41: #{resnet_block_forward.3} parent=5 // pred_check
      %p1011 = pneg %p1010
    $region42: #{resnet_block_forward.3} parent=5 // pred_check_branch
      %1013 = sbr.rel (%p1011) target = $region44
    $region43: #{resnet_block_forward.3} parent=5 // pred_region
      %s1014 = ssub.s32 %s11, 2
      // Predicated region
      $region45: #{resnet_block_forward.3} parent=43 // pred_check
        %p1015 = pneg %p108
      $region46: #{resnet_block_forward.3} parent=43 // pred_check_branch
        %1017 = sbr.rel (%p1015) target = $region48
      $region47: #{resnet_block_forward.3} parent=43 // pred_region
        %p1018 = scmp.lt.s32.totalorder %s17, 1
        %s1019 = scalar_select %p1018, %s17, 1
        %s1020 = smul.addr %s1019, 2
        %s1021 = smul.addr %s1020, 4
        %s1022 = scalar_lea.vmem %s3, %s1021
      $region48: #{resnet_block_forward.3} parent=43 // pred_fallthru
        _
      // Predicated region
      $region49: #{resnet_block_forward.3} parent=43 // pred_check
        %p1023 = pneg %p134
      $region50: #{resnet_block_forward.3} parent=43 // pred_check_branch
        %1025 = sbr.rel (%p1023) target = $region52
      $region51: #{resnet_block_forward.3} parent=43 // pred_region
        %p1026 = scmp.lt.s32.totalorder %s17, 1
        %s1027 = scalar_select %p1026, %s17, 1
        %s1028 = smul.addr %s1027, 4
        %s1029 = scalar_lea.vmem %s4, %s1028
      $region52: #{resnet_block_forward.3} parent=43 // pred_fallthru
        _
    $region44: #{resnet_block_forward.3} parent=5 // pred_fallthru
      _
  $region6: #{resnet_block_forward.3} parent=0 // loop_footer
    %s15 = sadd.s32 1, %s11
  $region7: #{resnet_block_forward.3} parent=0 // loop_footer_branch
    %10 = sbr.rel target = $region3
  $region8: #{resnet_block_forward.3} parent=0 // loop_exit
    _

// kernel: resnet_block_forward.4
$region0: #{resnet_block_forward.4}
  #allocation0 [shape = 'u32[]', space=smem, size = 0x4, offset = 0x4, fixed_abs, tag = 'smem constant byte address 0x4 - core index']
  #allocation1 [shape = 'u32[144,128]{1,0:T(1,128)}', space=vmem, size = 0x12000, scoped, tag = 'internal scratch']
  %s0 = inlined_call_operand.vmem [shape: f32[2,4,256], index: 0, kind: input, shape index: {}]
  %s1 = inlined_call_operand.vmem [shape: f32[4,1], index: 1, kind: input, shape index: {}]
  %s2 = inlined_call_operand.vmem [shape: f32[4,1], index: 2, kind: input, shape index: {}]
  %s3 = inlined_call_operand.vmem [shape: f32[4,36], index: 3, kind: input, shape index: {}]
  %s4 = inlined_call_operand.vmem [shape: f32[9,256], index: 4, kind: input, shape index: {}]
  %s5 = inlined_call_operand.vmem [shape: f32[2,4,256], index: 5, kind: output, shape index: {0}]
  %s6 = inlined_call_operand.vmem [shape: f32[2,4,2], index: 6, kind: output, shape index: {1}]
  %7 = xla_tuple %s5, %s6
  %s8 = sld [smem:[#allocation0]]
  $region61: #{resnet_block_forward.4} parent=0
    _
  %s10 = ssub.s32 1, %s8
  %s11 = scalar_select 0, %s10, %s8
  loop: start=0, step=1, limit=4
  $region2: #{resnet_block_forward.4} parent=0 // loop_pre_header
    _
  $region3: #{resnet_block_forward.4} parent=0 // loop_header
    %s13 = sphi 0, %s17
    %p14 = scmp.ge.s32.totalorder %s13, 4
    %s23 = sphi 0, %s25
    %s26 = sphi 0, %s23
    %s27 = sphi 0, %s26
    %s43 = sphi 0, %s27
    %s47 = sphi 0, %s47
    %s49 = sphi 0, %s47
    %s50 = sphi 0, %s49
    %s64 = sphi 0, %s50
    %s68 = sphi 0, %s68
    %s70 = sphi 0, %s68
    %s71 = sphi 0, %s70
    %s85 = sphi 0, %s71
    %s89 = sphi 0, %s89
    %s91 = sphi 0, %s89
    %s92 = sphi 0, %s91
    %s106 = sphi 0, %s92
    %s110 = sphi 0, %s110
    %s112 = sphi 0, %s110
    %s113 = sphi 0, %s112
    %s127 = sphi 0, %s113
    %s133 = sphi 0, %s135
    %s136 = sphi 0, %s133
    %s137 = sphi 0, %s136
    %s153 = sphi 0, %s137
    %s159 = sphi 0, %s161
    %s162 = sphi 0, %s159
    %s163 = sphi 0, %s162
    %s179 = sphi 0, %s163
  $region4: #{resnet_block_forward.4} parent=0 // loop_header_branch
    %16 = sbr.rel (%p14) target = $region8
  $region5: #{resnet_block_forward.4} parent=0 // loop_body
    %s18 = ssub.s32 %s13, 1
    %s19 = ssub.s32 %s13, 2
    %s20 = sadd.s32 %s13, 1
    %s21 = ssub.s32 %s13, %s20
    %p22 = scmp.eq.s32.totalorder %s21, 0
    %s24 = sadd.s32 %s23, 1
    %s25 = scalar_select %p22, %s23, %s24
    %p28 = pneg %p22
    %p29 = scmp.eq.s32.totalorder %s13, 1
    %p30 = por %p28, %p29
    %p31 = scmp.ne.s32.totalorder %s23, %s26
    %p32 = scmp.eq.s32.totalorder %s13, 0
    %p33 = por %p31, %p32
    %p34 = scmp.ne.s32.totalorder %s23, %s26
    %p35 = scmp.eq.s32.totalorder %s18, 1
    %p36 = por %p34, %p35
    %p37 = scmp.ne.s32.totalorder %s26, %s27
    %p38 = scmp.eq.s32.totalorder %s18, 0
    %p39 = por %p37, %p38
    %p40 = scmp.ne.s32.totalorder %s26, %s27
    %p41 = scmp.eq.s32.totalorder %s19, 1
    %p42 = por %p40, %p41
    %p44 = scmp.ne.s32.totalorder %s27, %s43
    %p45 = scmp.eq.s32.totalorder %s19, 0
    %p46 = por %p44, %p45
    %s48 = sadd.s32 %s47, 1
    %p51 = scmp.eq.s32.totalorder %s13, 1
    %p52 = scmp.ne.s32.totalorder %s47, %s49
    %p53 = scmp.eq.s32.totalorder %s13, 0
    %p54 = por %p52, %p53
    %p55 = scmp.ne.s32.totalorder %s47, %s49
    %p56 = scmp.eq.s32.totalorder %s18, 1
    %p57 = por %p55, %p56
    %p58 = scmp.ne.s32.totalorder %s49, %s50
    %p59 = scmp.eq.s32.totalorder %s18, 0
    %p60 = por %p58, %p59
    %p61 = scmp.ne.s32.totalorder %s49, %s50
    %p62 = scmp.eq.s32.totalorder %s19, 1
    %p63 = por %p61, %p62
    %p65 = scmp.ne.s32.totalorder %s50, %s64
    %p66 = scmp.eq.s32.totalorder %s19, 0
    %p67 = por %p65, %p66
    %s69 = sadd.s32 %s68, 1
    %p72 = scmp.eq.s32.totalorder %s13, 1
    %p73 = scmp.ne.s32.totalorder %s68, %s70
    %p74 = scmp.eq.s32.totalorder %s13, 0
    %p75 = por %p73, %p74
    %p76 = scmp.ne.s32.totalorder %s68, %s70
    %p77 = scmp.eq.s32.totalorder %s18, 1
    %p78 = por %p76, %p77
    %p79 = scmp.ne.s32.totalorder %s70, %s71
    %p80 = scmp.eq.s32.totalorder %s18, 0
    %p81 = por %p79, %p80
    %p82 = scmp.ne.s32.totalorder %s70, %s71
    %p83 = scmp.eq.s32.totalorder %s19, 1
    %p84 = por %p82, %p83
    %p86 = scmp.ne.s32.totalorder %s71, %s85
    %p87 = scmp.eq.s32.totalorder %s19, 0
    %p88 = por %p86, %p87
    %s90 = sadd.s32 %s89, 1
    %p93 = scmp.eq.s32.totalorder %s13, 1
    %p94 = scmp.ne.s32.totalorder %s89, %s91
    %p95 = scmp.eq.s32.totalorder %s13, 0
    %p96 = por %p94, %p95
    %p97 = scmp.ne.s32.totalorder %s89, %s91
    %p98 = scmp.eq.s32.totalorder %s18, 1
    %p99 = por %p97, %p98
    %p100 = scmp.ne.s32.totalorder %s91, %s92
    %p101 = scmp.eq.s32.totalorder %s18, 0
    %p102 = por %p100, %p101
    %p103 = scmp.ne.s32.totalorder %s91, %s92
    %p104 = scmp.eq.s32.totalorder %s19, 1
    %p105 = por %p103, %p104
    %p107 = scmp.ne.s32.totalorder %s92, %s106
    %p108 = scmp.eq.s32.totalorder %s19, 0
    %p109 = por %p107, %p108
    %s111 = sadd.s32 %s110, 1
    %p114 = scmp.eq.s32.totalorder %s13, 1
    %p115 = scmp.ne.s32.totalorder %s110, %s112
    %p116 = scmp.eq.s32.totalorder %s13, 0
    %p117 = por %p115, %p116
    %p118 = scmp.ne.s32.totalorder %s110, %s112
    %p119 = scmp.eq.s32.totalorder %s18, 1
    %p120 = por %p118, %p119
    %p121 = scmp.ne.s32.totalorder %s112, %s113
    %p122 = scmp.eq.s32.totalorder %s18, 0
    %p123 = por %p121, %p122
    %p124 = scmp.ne.s32.totalorder %s112, %s113
    %p125 = scmp.eq.s32.totalorder %s19, 1
    %p126 = por %p124, %p125
    %p128 = scmp.ne.s32.totalorder %s113, %s127
    %p129 = scmp.eq.s32.totalorder %s19, 0
    %p130 = por %p128, %p129
    %s131 = ssub.s32 %s13, %s20
    %p132 = scmp.eq.s32.totalorder %s131, 0
    %s134 = sadd.s32 %s133, 1
    %s135 = scalar_select %p132, %s133, %s134
    %p138 = pneg %p132
    %p139 = scmp.eq.s32.totalorder %s13, 1
    %p140 = por %p138, %p139
    %p141 = scmp.ne.s32.totalorder %s133, %s136
    %p142 = scmp.eq.s32.totalorder %s13, 0
    %p143 = por %p141, %p142
    %p144 = scmp.ne.s32.totalorder %s133, %s136
    %p145 = scmp.eq.s32.totalorder %s18, 1
    %p146 = por %p144, %p145
    %p147 = scmp.ne.s32.totalorder %s136, %s137
    %p148 = scmp.eq.s32.totalorder %s18, 0
    %p149 = por %p147, %p148
    %p150 = scmp.ne.s32.totalorder %s136, %s137
    %p151 = scmp.eq.s32.totalorder %s19, 1
    %p152 = por %p150, %p151
    %p154 = scmp.ne.s32.totalorder %s137, %s153
    %p155 = scmp.eq.s32.totalorder %s19, 0
    %p156 = por %p154, %p155
    %s157 = ssub.s32 %s13, %s20
    %p158 = scmp.eq.s32.totalorder %s157, 0
    %s160 = sadd.s32 %s159, 1
    %s161 = scalar_select %p158, %s159, %s160
    %p164 = pneg %p158
    %p165 = scmp.eq.s32.totalorder %s13, 1
    %p166 = por %p164, %p165
    %p167 = scmp.ne.s32.totalorder %s159, %s162
    %p168 = scmp.eq.s32.totalorder %s13, 0
    %p169 = por %p167, %p168
    %p170 = scmp.ne.s32.totalorder %s159, %s162
    %p171 = scmp.eq.s32.totalorder %s18, 1
    %p172 = por %p170, %p171
    %p173 = scmp.ne.s32.totalorder %s162, %s163
    %p174 = scmp.eq.s32.totalorder %s18, 0
    %p175 = por %p173, %p174
    %p176 = scmp.ne.s32.totalorder %s162, %s163
    %p177 = scmp.eq.s32.totalorder %s19, 1
    %p178 = por %p176, %p177
    %p180 = scmp.ne.s32.totalorder %s163, %s179
    %p181 = scmp.eq.s32.totalorder %s19, 0
    %p182 = por %p180, %p181
    %p183 = scmp.le.s32.totalorder 1, %s13
    %p184 = scmp.lt.s32.totalorder %s13, 3
    %p185 = pnand %p183, %p184
    %p186 = pneg %p185
    // Predicated region
    $region9: #{resnet_block_forward.4} parent=5 // pred_check
      _
    $region10: #{resnet_block_forward.4} parent=5 // pred_check_branch
      %188 = sbr.rel (%p185) target = $region12
    $region11: #{resnet_block_forward.4} parent=5 // pred_region
      %s189 = ssub.s32 %s13, 1
      // Predicated region
      $region13: #{resnet_block_forward.4} parent=11 // pred_check
        %p190 = pneg %p60
      $region14: #{resnet_block_forward.4} parent=11 // pred_check_branch
        %192 = sbr.rel (%p190) target = $region16
      $region15: #{resnet_block_forward.4} parent=11 // pred_region
        _
      $region16: #{resnet_block_forward.4} parent=11 // pred_fallthru
        _
      // Predicated region
      $region17: #{resnet_block_forward.4} parent=11 // pred_check
        %p193 = pneg %p81
      $region18: #{resnet_block_forward.4} parent=11 // pred_check_branch
        %195 = sbr.rel (%p193) target = $region20
      $region19: #{resnet_block_forward.4} parent=11 // pred_region
        _
      $region20: #{resnet_block_forward.4} parent=11 // pred_fallthru
        _
      // Predicated region
      $region21: #{resnet_block_forward.4} parent=11 // pred_check
        %p196 = pneg %p102
      $region22: #{resnet_block_forward.4} parent=11 // pred_check_branch
        %198 = sbr.rel (%p196) target = $region24
      $region23: #{resnet_block_forward.4} parent=11 // pred_region
        _
      $region24: #{resnet_block_forward.4} parent=11 // pred_fallthru
        _
      // Predicated region
      $region25: #{resnet_block_forward.4} parent=11 // pred_check
        %p199 = pneg %p123
      $region26: #{resnet_block_forward.4} parent=11 // pred_check_branch
        %201 = sbr.rel (%p199) target = $region28
      $region27: #{resnet_block_forward.4} parent=11 // pred_region
        _
      $region28: #{resnet_block_forward.4} parent=11 // pred_fallthru
        _
    $region12: #{resnet_block_forward.4} parent=5 // pred_fallthru
      _
    %p202 = scmp.lt.s32.totalorder %s13, 2
    // Predicated region
    $region29: #{resnet_block_forward.4} parent=5 // pred_check
      %p203 = pneg %p202
    $region30: #{resnet_block_forward.4} parent=5 // pred_check_branch
      %205 = sbr.rel (%p203) target = $region32
    $region31: #{resnet_block_forward.4} parent=5 // pred_region
      // Predicated region
      $region33: #{resnet_block_forward.4} parent=31 // pred_check
        %p206 = pneg %p33
      $region34: #{resnet_block_forward.4} parent=31 // pred_check_branch
        %208 = sbr.rel (%p206) target = $region36
      $region35: #{resnet_block_forward.4} parent=31 // pred_region
        %p209 = scmp.lt.s32.totalorder %s13, 1
        %s210 = scalar_select %p209, %s13, 1
        %s211 = smul.addr %s210, 2
        %s212 = smul.addr %s211, 4
        %s213 = scalar_lea.vmem %s0, %s212
      $region36: #{resnet_block_forward.4} parent=31 // pred_fallthru
        _
    $region32: #{resnet_block_forward.4} parent=5 // pred_fallthru
      _
    %p214 = scmp.le.s32.totalorder 1, %s13
    %p215 = scmp.lt.s32.totalorder %s13, 3
    %p216 = pnand %p214, %p215
    %p217 = pneg %p216
    // Predicated region
    $region37: #{resnet_block_forward.4} parent=5 // pred_check
      _
    $region38: #{resnet_block_forward.4} parent=5 // pred_check_branch
      %219 = sbr.rel (%p216) target = $region40
    $region39: #{resnet_block_forward.4} parent=5 // pred_region
      %s220 = ssub.s32 %s13, 1
      %p221 = scmp.lt.s32.totalorder %s18, 1
      %s222 = scalar_select %p221, %s18, 1
      %s223 = smul.addr %s222, 2
      %s224 = smul.addr %s223, 4
      %s225 = scalar_lea.vmem %s0, %s224
      %p226 = pneg %p39
      %p227 = pneg %p36
      %p228 = pneg %p60
      %p229 = pneg %p57
      %p230 = pneg %p81
      %p231 = pneg %p78
      %p232 = pneg %p102
      %p233 = pneg %p99
      %p234 = pneg %p123
      %p235 = pneg %p120
      %p236 = pneg %p149
      %p237 = pneg %p146
      %p238 = scmp.lt.s32.totalorder %s18, 1
      %s239 = scalar_select %p238, %s18, 1
      %s240 = smul.addr %s239, 2
      %s241 = smul.addr %s240, 4
      %s242 = scalar_lea.vmem %s5, %s241
      %p243 = pneg %p175
      %p244 = pneg %p172
      %p245 = scmp.lt.s32.totalorder %s18, 1
      %s246 = scalar_select %p245, %s18, 1
      %s247 = smul.addr %s246, 4
      %s248 = scalar_lea.vmem %s6, %s247
      %p249 = scmp.lt.s32.totalorder %s18, 1
      %s250 = scalar_select %p249, %s18, 1
      %s251 = smul.addr %s250, 2
      %s252 = smul.addr %s251, 4
      %s253 = scalar_lea.vmem %s0, %s252
      %p254 = scmp.lt.s32.totalorder %s18, 1
      %s255 = scalar_select %p254, %s18, 1
      %s256 = smul.addr %s255, 2
      %s257 = smul.addr %s256, 4
      %s258 = scalar_lea.vmem %s5, %s257
      %p259 = scmp.lt.s32.totalorder %s18, 1
      %s260 = scalar_select %p259, %s18, 1
      %s261 = smul.addr %s260, 4
      %s262 = scalar_lea.vmem %s6, %s261
      %v263 = vld [vmem:[%s253] sm:$0xff]
      %v264 = vld [vmem:[%s1] sm:$0xf]
      %266 = vset.pattern.permute.xlu0 0
      %267 = vperm.xlu0 %266, %v264
      %v268 = vpop.permute.xlu0 %267
      %v270 = vunpack.c.l.s4 839922192
      %v271 = vunpack.c.0.s8 %v270
      %v272 = vlaneseq
      %v273 = vshrl.u32 %v272, 7
      %v274 = vsub.s32 %v271, %v273
      %v275 = vrot.slane %v268, %v274
      %v277 = vmul.f32 %v263, %v275
      %v278 = vld [vmem:[%s2] sm:$0xf]
      %280 = vset.pattern.permute.xlu0 0
      %281 = vperm.xlu0 %280, %v278
      %v282 = vpop.permute.xlu0 %281
      %v284 = vunpack.c.l.s4 839922192
      %v285 = vunpack.c.0.s8 %v284
      %v286 = vlaneseq
      %v287 = vshrl.u32 %v286, 7
      %v288 = vsub.s32 %v285, %v287
      %v289 = vrot.slane %v282, %v288
      %v291 = vadd.f32 %v277, %v289
      %v292 = vmax.f32 %v291, 0.0
      %v293 = vld [vmem:[%s3] sm:$0xf]
      %v294 = vld [vmem:[%s4] sm:$0xff]
      %v295 = vld [vmem:[%s4 + $0x8] sm:$0xff]
      %v296 = vld [vmem:[%s4 + $0x10] sm:$0x1]
      %v297 = vld [vmem:[%s4 + $0x18] sm:$0x1]
      %v299 = vcombine.high %v292, %v292
      %301 = vrot.lane.b32.xlu0 %v292, 17
      %v302 = vpop.permute.xlu0 %301
      %303 = vrot.lane.b32.xlu0 %v299, 17
      %v304 = vpop.permute.xlu0 %303
      %v305 = vlaneseq
      %v306 = vand.u32 %v305, 127
      %vm307 = vcmp.lt.s32.totalorder %v306, 17
      %v308 = vsel %vm307, %v302, %v304
      %v309 = vsel %vm307, %v304, %v302
      %v310 = vlaneseq
      %v311 = vshrl.u32 %v310, 7
      %v312 = vsub.s32 0, %v311
      %v313 = vrot.slane %v294, %v312
      %v314 = vlaneseq
      %v315 = vshrl.u32 %v314, 7
      %v316 = vsub.s32 0, %v315
      %v317 = vrot.slane %v295, %v316
      %v318 = vmul.f32 %v309, %v313
      %v319 = vmul.f32 %v308, %v317
      %321 = vset.pattern.permute.xlu0 0
      %322 = vperm.xlu0 %321, %v293
      %v323 = vpop.permute.xlu0 %322
      %v325 = vlaneseq
      %v326 = vshrl.u32 %v325, 7
      %v327 = vsub.s32 0, %v326
      %v328 = vrot.slane %v318, %v327
      %v329 = vlaneseq
      %v330 = vshrl.u32 %v329, 7
      %v331 = vsub.s32 0, %v330
      %v332 = vrot.slane %v319, %v331
      %v333 = vmul.f32 %v323, %v328
      %v334 = vmul.f32 %v323, %v332
      %v335 = vadd.f32 %v333, 0.0
      %v336 = vadd.f32 %v334, 0.0
      %337 = vset.pattern.permute.xlu0 1
      %338 = vperm.xlu0 %337, %v293
      %v339 = vpop.permute.xlu0 %338
      %v341 = vlaneseq
      %v342 = vshrl.u32 %v341, 7
      %v343 = vsub.s32 1, %v342
      %v344 = vrot.slane %v318, %v343
      %v345 = vlaneseq
      %v346 = vshrl.u32 %v345, 7
      %v347 = vsub.s32 1, %v346
      %v348 = vrot.slane %v319, %v347
      %v349 = vmul.f32 %v339, %v344
      %v350 = vmul.f32 %v339, %v348
      %v351 = vadd.f32 %v335, %v349
      %v352 = vadd.f32 %v336, %v350
      %353 = vset.pattern.permute.xlu0 2
      %354 = vperm.xlu0 %353, %v293
      %v355 = vpop.permute.xlu0 %354
      %v357 = vlaneseq
      %v358 = vshrl.u32 %v357, 7
      %v359 = vsub.s32 2, %v358
      %v360 = vrot.slane %v318, %v359
      %v361 = vlaneseq
      %v362 = vshrl.u32 %v361, 7
      %v363 = vsub.s32 2, %v362
      %v364 = vrot.slane %v319, %v363
      %v365 = vmul.f32 %v355, %v360
      %v366 = vmul.f32 %v355, %v364
      %v367 = vadd.f32 %v351, %v365
      %v368 = vadd.f32 %v352, %v366
      %369 = vset.pattern.permute.xlu0 3
      %370 = vperm.xlu0 %369, %v293
      %v371 = vpop.permute.xlu0 %370
      %v373 = vlaneseq
      %v374 = vshrl.u32 %v373, 7
      %v375 = vsub.s32 3, %v374
      %v376 = vrot.slane %v318, %v375
      %v377 = vlaneseq
      %v378 = vshrl.u32 %v377, 7
      %v379 = vsub.s32 3, %v378
      %v380 = vrot.slane %v319, %v379
      %v381 = vmul.f32 %v371, %v376
      %v382 = vmul.f32 %v371, %v380
      %v383 = vadd.f32 %v367, %v381
      %v384 = vadd.f32 %v368, %v382
      %385 = vrot.lane.b32.xlu0 %v292, 16
      %v386 = vpop.permute.xlu0 %385
      %387 = vrot.lane.b32.xlu0 %v299, 16
      %v388 = vpop.permute.xlu0 %387
      %vm389 = vcmp.lt.s32.totalorder %v306, 16
      %v390 = vsel %vm389, %v386, %v388
      %v391 = vsel %vm389, %v388, %v386
      %v392 = vlaneseq
      %v393 = vshrl.u32 %v392, 7
      %v394 = vsub.s32 1, %v393
      %v395 = vrot.slane %v294, %v394
      %v396 = vlaneseq
      %v397 = vshrl.u32 %v396, 7
      %v398 = vsub.s32 1, %v397
      %v399 = vrot.slane %v295, %v398
      %v400 = vmul.f32 %v391, %v395
      %v401 = vmul.f32 %v390, %v399
      %402 = vset.pattern.permute.xlu0 4
      %403 = vperm.xlu0 %402, %v293
      %v404 = vpop.permute.xlu0 %403
      %v406 = vlaneseq
      %v407 = vshrl.u32 %v406, 7
      %v408 = vsub.s32 0, %v407
      %v409 = vrot.slane %v400, %v408
      %v410 = vlaneseq
      %v411 = vshrl.u32 %v410, 7
      %v412 = vsub.s32 0, %v411
      %v413 = vrot.slane %v401, %v412
      %v414 = vmul.f32 %v404, %v409
      %v415 = vmul.f32 %v404, %v413
      %v416 = vadd.f32 %v383, %v414
      %v417 = vadd.f32 %v384, %v415
      %418 = vset.pattern.permute.xlu0 5
      %419 = vperm.xlu0 %418, %v293
      %v420 = vpop.permute.xlu0 %419
      %v422 = vlaneseq
      %v423 = vshrl.u32 %v422, 7
      %v424 = vsub.s32 1, %v423
      %v425 = vrot.slane %v400, %v424
      %v426 = vlaneseq
      %v427 = vshrl.u32 %v426, 7
      %v428 = vsub.s32 1, %v427
      %v429 = vrot.slane %v401, %v428
      %v430 = vmul.f32 %v420, %v425
      %v431 = vmul.f32 %v420, %v429
      %v432 = vadd.f32 %v416, %v430
      %v433 = vadd.f32 %v417, %v431
      %434 = vset.pattern.permute.xlu0 6
      %435 = vperm.xlu0 %434, %v293
      %v436 = vpop.permute.xlu0 %435
      %v438 = vlaneseq
      %v439 = vshrl.u32 %v438, 7
      %v440 = vsub.s32 2, %v439
      %v441 = vrot.slane %v400, %v440
      %v442 = vlaneseq
      %v443 = vshrl.u32 %v442, 7
      %v444 = vsub.s32 2, %v443
      %v445 = vrot.slane %v401, %v444
      %v446 = vmul.f32 %v436, %v441
      %v447 = vmul.f32 %v436, %v445
      %v448 = vadd.f32 %v432, %v446
      %v449 = vadd.f32 %v433, %v447
      %450 = vset.pattern.permute.xlu0 7
      %451 = vperm.xlu0 %450, %v293
      %v452 = vpop.permute.xlu0 %451
      %v454 = vlaneseq
      %v455 = vshrl.u32 %v454, 7
      %v456 = vsub.s32 3, %v455
      %v457 = vrot.slane %v400, %v456
      %v458 = vlaneseq
      %v459 = vshrl.u32 %v458, 7
      %v460 = vsub.s32 3, %v459
      %v461 = vrot.slane %v401, %v460
      %v462 = vmul.f32 %v452, %v457
      %v463 = vmul.f32 %v452, %v461
      %v464 = vadd.f32 %v448, %v462
      %v465 = vadd.f32 %v449, %v463
      %466 = vrot.lane.b32.xlu0 %v292, 15
      %v467 = vpop.permute.xlu0 %466
      %468 = vrot.lane.b32.xlu0 %v299, 15
      %v469 = vpop.permute.xlu0 %468
      %vm470 = vcmp.lt.s32.totalorder %v306, 15
      %v471 = vsel %vm470, %v467, %v469
      %v472 = vsel %vm470, %v469, %v467
      %v473 = vlaneseq
      %v474 = vshrl.u32 %v473, 7
      %v475 = vsub.s32 2, %v474
      %v476 = vrot.slane %v294, %v475
      %v477 = vlaneseq
      %v478 = vshrl.u32 %v477, 7
      %v479 = vsub.s32 2, %v478
      %v480 = vrot.slane %v295, %v479
      %v481 = vmul.f32 %v472, %v476
      %v482 = vmul.f32 %v471, %v480
      %483 = vset.pattern.permute.xlu0 8
      %484 = vperm.xlu0 %483, %v293
      %v485 = vpop.permute.xlu0 %484
      %v487 = vlaneseq
      %v488 = vshrl.u32 %v487, 7
      %v489 = vsub.s32 0, %v488
      %v490 = vrot.slane %v481, %v489
      %v491 = vlaneseq
      %v492 = vshrl.u32 %v491, 7
      %v493 = vsub.s32 0, %v492
      %v494 = vrot.slane %v482, %v493
      %v495 = vmul.f32 %v485, %v490
      %v496 = vmul.f32 %v485, %v494
      %v497 = vadd.f32 %v464, %v495
      %v498 = vadd.f32 %v465, %v496
      %499 = vset.pattern.permute.xlu0 9
      %500 = vperm.xlu0 %499, %v293
      %v501 = vpop.permute.xlu0 %500
      %v503 = vlaneseq
      %v504 = vshrl.u32 %v503, 7
      %v505 = vsub.s32 1, %v504
      %v506 = vrot.slane %v481, %v505
      %v507 = vlaneseq
      %v508 = vshrl.u32 %v507, 7
      %v509 = vsub.s32 1, %v508
      %v510 = vrot.slane %v482, %v509
      %v511 = vmul.f32 %v501, %v506
      %v512 = vmul.f32 %v501, %v510
      %v513 = vadd.f32 %v497, %v511
      %v514 = vadd.f32 %v498, %v512
      %515 = vset.pattern.permute.xlu0 10
      %516 = vperm.xlu0 %515, %v293
      %v517 = vpop.permute.xlu0 %516
      %v519 = vlaneseq
      %v520 = vshrl.u32 %v519, 7
      %v521 = vsub.s32 2, %v520
      %v522 = vrot.slane %v481, %v521
      %v523 = vlaneseq
      %v524 = vshrl.u32 %v523, 7
      %v525 = vsub.s32 2, %v524
      %v526 = vrot.slane %v482, %v525
      %v527 = vmul.f32 %v517, %v522
      %v528 = vmul.f32 %v517, %v526
      %v529 = vadd.f32 %v513, %v527
      %v530 = vadd.f32 %v514, %v528
      %531 = vset.pattern.permute.xlu0 11
      %532 = vperm.xlu0 %531, %v293
      %v533 = vpop.permute.xlu0 %532
      %v535 = vlaneseq
      %v536 = vshrl.u32 %v535, 7
      %v537 = vsub.s32 3, %v536
      %v538 = vrot.slane %v481, %v537
      %v539 = vlaneseq
      %v540 = vshrl.u32 %v539, 7
      %v541 = vsub.s32 3, %v540
      %v542 = vrot.slane %v482, %v541
      %v543 = vmul.f32 %v533, %v538
      %v544 = vmul.f32 %v533, %v542
      %v545 = vadd.f32 %v529, %v543
      %v546 = vadd.f32 %v530, %v544
      %547 = vrot.lane.b32.xlu0 %v292, 1
      %v548 = vpop.permute.xlu0 %547
      %549 = vrot.lane.b32.xlu0 %v299, 1
      %v550 = vpop.permute.xlu0 %549
      %vm551 = vcmp.lt.s32.totalorder %v306, 1
      %v552 = vsel %vm551, %v548, %v550
      %v553 = vsel %vm551, %v550, %v548
      %v554 = vlaneseq
      %v555 = vshrl.u32 %v554, 7
      %v556 = vsub.s32 3, %v555
      %v557 = vrot.slane %v294, %v556
      %v558 = vlaneseq
      %v559 = vshrl.u32 %v558, 7
      %v560 = vsub.s32 3, %v559
      %v561 = vrot.slane %v295, %v560
      %v562 = vmul.f32 %v553, %v557
      %v563 = vmul.f32 %v552, %v561
      %564 = vset.pattern.permute.xlu0 12
      %565 = vperm.xlu0 %564, %v293
      %v566 = vpop.permute.xlu0 %565
      %v568 = vlaneseq
      %v569 = vshrl.u32 %v568, 7
      %v570 = vsub.s32 0, %v569
      %v571 = vrot.slane %v562, %v570
      %v572 = vlaneseq
      %v573 = vshrl.u32 %v572, 7
      %v574 = vsub.s32 0, %v573
      %v575 = vrot.slane %v563, %v574
      %v576 = vmul.f32 %v566, %v571
      %v577 = vmul.f32 %v566, %v575
      %v578 = vadd.f32 %v545, %v576
      %v579 = vadd.f32 %v546, %v577
      %580 = vset.pattern.permute.xlu0 13
      %581 = vperm.xlu0 %580, %v293
      %v582 = vpop.permute.xlu0 %581
      %v584 = vlaneseq
      %v585 = vshrl.u32 %v584, 7
      %v586 = vsub.s32 1, %v585
      %v587 = vrot.slane %v562, %v586
      %v588 = vlaneseq
      %v589 = vshrl.u32 %v588, 7
      %v590 = vsub.s32 1, %v589
      %v591 = vrot.slane %v563, %v590
      %v592 = vmul.f32 %v582, %v587
      %v593 = vmul.f32 %v582, %v591
      %v594 = vadd.f32 %v578, %v592
      %v595 = vadd.f32 %v579, %v593
      %596 = vset.pattern.permute.xlu0 14
      %597 = vperm.xlu0 %596, %v293
      %v598 = vpop.permute.xlu0 %597
      %v600 = vlaneseq
      %v601 = vshrl.u32 %v600, 7
      %v602 = vsub.s32 2, %v601
      %v603 = vrot.slane %v562, %v602
      %v604 = vlaneseq
      %v605 = vshrl.u32 %v604, 7
      %v606 = vsub.s32 2, %v605
      %v607 = vrot.slane %v563, %v606
      %v608 = vmul.f32 %v598, %v603
      %v609 = vmul.f32 %v598, %v607
      %v610 = vadd.f32 %v594, %v608
      %v611 = vadd.f32 %v595, %v609
      %612 = vset.pattern.permute.xlu0 15
      %613 = vperm.xlu0 %612, %v293
      %v614 = vpop.permute.xlu0 %613
      %v616 = vlaneseq
      %v617 = vshrl.u32 %v616, 7
      %v618 = vsub.s32 3, %v617
      %v619 = vrot.slane %v562, %v618
      %v620 = vlaneseq
      %v621 = vshrl.u32 %v620, 7
      %v622 = vsub.s32 3, %v621
      %v623 = vrot.slane %v563, %v622
      %v624 = vmul.f32 %v614, %v619
      %v625 = vmul.f32 %v614, %v623
      %v626 = vadd.f32 %v610, %v624
      %v627 = vadd.f32 %v611, %v625
      %628 = vset.pattern.permute.xlu0 16
      %629 = vperm.xlu0 %628, %v293
      %v630 = vpop.permute.xlu0 %629
      %v632 = vlaneseq
      %v633 = vshrl.u32 %v632, 7
      %v634 = vsub.s32 0, %v633
      %v635 = vrot.slane %v292, %v634
      %v636 = vlaneseq
      %v637 = vshrl.u32 %v636, 7
      %v638 = vsub.s32 4, %v637
      %v639 = vrot.slane %v292, %v638
      %v642 = vlaneseq
      %v643 = vshrl.u32 %v642, 7
      %v644 = vsub.s32 0, %v643
      %v645 = vrot.slane %v635, %v644
      %v646 = vlaneseq
      %v647 = vshrl.u32 %v646, 7
      %v648 = vsub.s32 0, %v647
      %v649 = vrot.slane %v639, %v648
      %v650 = vmul.f32 %v630, %v645
      %v651 = vmul.f32 %v630, %v649
      %v652 = vadd.f32 %v626, %v650
      %v653 = vadd.f32 %v627, %v651
      %654 = vset.pattern.permute.xlu0 17
      %655 = vperm.xlu0 %654, %v293
      %v656 = vpop.permute.xlu0 %655
      %v658 = vlaneseq
      %v659 = vshrl.u32 %v658, 7
      %v660 = vsub.s32 1, %v659
      %v661 = vrot.slane %v292, %v660
      %v662 = vlaneseq
      %v663 = vshrl.u32 %v662, 7
      %v664 = vsub.s32 5, %v663
      %v665 = vrot.slane %v292, %v664
      %v668 = vlaneseq
      %v669 = vshrl.u32 %v668, 7
      %v670 = vsub.s32 1, %v669
      %v671 = vrot.slane %v661, %v670
      %v672 = vlaneseq
      %v673 = vshrl.u32 %v672, 7
      %v674 = vsub.s32 1, %v673
      %v675 = vrot.slane %v665, %v674
      %v676 = vmul.f32 %v656, %v671
      %v677 = vmul.f32 %v656, %v675
      %v678 = vadd.f32 %v652, %v676
      %v679 = vadd.f32 %v653, %v677
      %680 = vset.pattern.permute.xlu0 18
      %681 = vperm.xlu0 %680, %v293
      %v682 = vpop.permute.xlu0 %681
      %v684 = vlaneseq
      %v685 = vshrl.u32 %v684, 7
      %v686 = vsub.s32 2, %v685
      %v687 = vrot.slane %v292, %v686
      %v688 = vlaneseq
      %v689 = vshrl.u32 %v688, 7
      %v690 = vsub.s32 6, %v689
      %v691 = vrot.slane %v292, %v690
      %v694 = vlaneseq
      %v695 = vshrl.u32 %v694, 7
      %v696 = vsub.s32 2, %v695
      %v697 = vrot.slane %v687, %v696
      %v698 = vlaneseq
      %v699 = vshrl.u32 %v698, 7
      %v700 = vsub.s32 2, %v699
      %v701 = vrot.slane %v691, %v700
      %v702 = vmul.f32 %v682, %v697
      %v703 = vmul.f32 %v682, %v701
      %v704 = vadd.f32 %v678, %v702
      %v705 = vadd.f32 %v679, %v703
      %706 = vset.pattern.permute.xlu0 19
      %707 = vperm.xlu0 %706, %v293
      %v708 = vpop.permute.xlu0 %707
      %v710 = vlaneseq
      %v711 = vshrl.u32 %v710, 7
      %v712 = vsub.s32 3, %v711
      %v713 = vrot.slane %v292, %v712
      %v714 = vlaneseq
      %v715 = vshrl.u32 %v714, 7
      %v716 = vsub.s32 7, %v715
      %v717 = vrot.slane %v292, %v716
      %v720 = vlaneseq
      %v721 = vshrl.u32 %v720, 7
      %v722 = vsub.s32 3, %v721
      %v723 = vrot.slane %v713, %v722
      %v724 = vlaneseq
      %v725 = vshrl.u32 %v724, 7
      %v726 = vsub.s32 3, %v725
      %v727 = vrot.slane %v717, %v726
      %v728 = vmul.f32 %v708, %v723
      %v729 = vmul.f32 %v708, %v727
      %v730 = vadd.f32 %v704, %v728
      %v731 = vadd.f32 %v705, %v729
      %732 = vrot.lane.b32.xlu0 %v292, 127
      %v733 = vpop.permute.xlu0 %732
      %734 = vrot.lane.b32.xlu0 %v299, 127
      %v735 = vpop.permute.xlu0 %734
      %vm736 = vcmp.lt.s32.totalorder %v306, 127
      %v737 = vsel %vm736, %v733, %v735
      %v738 = vsel %vm736, %v735, %v733
      %v739 = vlaneseq
      %v740 = vshrl.u32 %v739, 7
      %v741 = vsub.s32 5, %v740
      %v742 = vrot.slane %v294, %v741
      %v743 = vlaneseq
      %v744 = vshrl.u32 %v743, 7
      %v745 = vsub.s32 5, %v744
      %v746 = vrot.slane %v295, %v745
      %v747 = vmul.f32 %v737, %v742
      %v748 = vmul.f32 %v738, %v746
      %749 = vset.pattern.permute.xlu0 20
      %750 = vperm.xlu0 %749, %v293
      %v751 = vpop.permute.xlu0 %750
      %v753 = vlaneseq
      %v754 = vshrl.u32 %v753, 7
      %v755 = vsub.s32 0, %v754
      %v756 = vrot.slane %v747, %v755
      %v757 = vlaneseq
      %v758 = vshrl.u32 %v757, 7
      %v759 = vsub.s32 0, %v758
      %v760 = vrot.slane %v748, %v759
      %v761 = vmul.f32 %v751, %v756
      %v762 = vmul.f32 %v751, %v760
      %v763 = vadd.f32 %v730, %v761
      %v764 = vadd.f32 %v731, %v762
      %765 = vset.pattern.permute.xlu0 21
      %766 = vperm.xlu0 %765, %v293
      %v767 = vpop.permute.xlu0 %766
      %v769 = vlaneseq
      %v770 = vshrl.u32 %v769, 7
      %v771 = vsub.s32 1, %v770
      %v772 = vrot.slane %v747, %v771
      %v773 = vlaneseq
      %v774 = vshrl.u32 %v773, 7
      %v775 = vsub.s32 1, %v774
      %v776 = vrot.slane %v748, %v775
      %v777 = vmul.f32 %v767, %v772
      %v778 = vmul.f32 %v767, %v776
      %v779 = vadd.f32 %v763, %v777
      %v780 = vadd.f32 %v764, %v778
      %781 = vset.pattern.permute.xlu0 22
      %782 = vperm.xlu0 %781, %v293
      %v783 = vpop.permute.xlu0 %782
      %v785 = vlaneseq
      %v786 = vshrl.u32 %v785, 7
      %v787 = vsub.s32 2, %v786
      %v788 = vrot.slane %v747, %v787
      %v789 = vlaneseq
      %v790 = vshrl.u32 %v789, 7
      %v791 = vsub.s32 2, %v790
      %v792 = vrot.slane %v748, %v791
      %v793 = vmul.f32 %v783, %v788
      %v794 = vmul.f32 %v783, %v792
      %v795 = vadd.f32 %v779, %v793
      %v796 = vadd.f32 %v780, %v794
      %797 = vset.pattern.permute.xlu0 23
      %798 = vperm.xlu0 %797, %v293
      %v799 = vpop.permute.xlu0 %798
      %v801 = vlaneseq
      %v802 = vshrl.u32 %v801, 7
      %v803 = vsub.s32 3, %v802
      %v804 = vrot.slane %v747, %v803
      %v805 = vlaneseq
      %v806 = vshrl.u32 %v805, 7
      %v807 = vsub.s32 3, %v806
      %v808 = vrot.slane %v748, %v807
      %v809 = vmul.f32 %v799, %v804
      %v810 = vmul.f32 %v799, %v808
      %v811 = vadd.f32 %v795, %v809
      %v812 = vadd.f32 %v796, %v810
      %813 = vrot.lane.b32.xlu0 %v292, 113
      %v814 = vpop.permute.xlu0 %813
      %815 = vrot.lane.b32.xlu0 %v299, 113
      %v816 = vpop.permute.xlu0 %815
      %vm817 = vcmp.lt.s32.totalorder %v306, 113
      %v818 = vsel %vm817, %v814, %v816
      %v819 = vsel %vm817, %v816, %v814
      %v820 = vlaneseq
      %v821 = vshrl.u32 %v820, 7
      %v822 = vsub.s32 6, %v821
      %v823 = vrot.slane %v294, %v822
      %v824 = vlaneseq
      %v825 = vshrl.u32 %v824, 7
      %v826 = vsub.s32 6, %v825
      %v827 = vrot.slane %v295, %v826
      %v828 = vmul.f32 %v818, %v823
      %v829 = vmul.f32 %v819, %v827
      %830 = vset.pattern.permute.xlu0 24
      %831 = vperm.xlu0 %830, %v293
      %v832 = vpop.permute.xlu0 %831
      %v834 = vlaneseq
      %v835 = vshrl.u32 %v834, 7
      %v836 = vsub.s32 0, %v835
      %v837 = vrot.slane %v828, %v836
      %v838 = vlaneseq
      %v839 = vshrl.u32 %v838, 7
      %v840 = vsub.s32 0, %v839
      %v841 = vrot.slane %v829, %v840
      %v842 = vmul.f32 %v832, %v837
      %v843 = vmul.f32 %v832, %v841
      %v844 = vadd.f32 %v811, %v842
      %v845 = vadd.f32 %v812, %v843
      %846 = vset.pattern.permute.xlu0 25
      %847 = vperm.xlu0 %846, %v293
      %v848 = vpop.permute.xlu0 %847
      %v850 = vlaneseq
      %v851 = vshrl.u32 %v850, 7
      %v852 = vsub.s32 1, %v851
      %v853 = vrot.slane %v828, %v852
      %v854 = vlaneseq
      %v855 = vshrl.u32 %v854, 7
      %v856 = vsub.s32 1, %v855
      %v857 = vrot.slane %v829, %v856
      %v858 = vmul.f32 %v848, %v853
      %v859 = vmul.f32 %v848, %v857
      %v860 = vadd.f32 %v844, %v858
      %v861 = vadd.f32 %v845, %v859
      %862 = vset.pattern.permute.xlu0 26
      %863 = vperm.xlu0 %862, %v293
      %v864 = vpop.permute.xlu0 %863
      %v866 = vlaneseq
      %v867 = vshrl.u32 %v866, 7
      %v868 = vsub.s32 2, %v867
      %v869 = vrot.slane %v828, %v868
      %v870 = vlaneseq
      %v871 = vshrl.u32 %v870, 7
      %v872 = vsub.s32 2, %v871
      %v873 = vrot.slane %v829, %v872
      %v874 = vmul.f32 %v864, %v869
      %v875 = vmul.f32 %v864, %v873
      %v876 = vadd.f32 %v860, %v874
      %v877 = vadd.f32 %v861, %v875
      %878 = vset.pattern.permute.xlu0 27
      %879 = vperm.xlu0 %878, %v293
      %v880 = vpop.permute.xlu0 %879
      %v882 = vlaneseq
      %v883 = vshrl.u32 %v882, 7
      %v884 = vsub.s32 3, %v883
      %v885 = vrot.slane %v828, %v884
      %v886 = vlaneseq
      %v887 = vshrl.u32 %v886, 7
      %v888 = vsub.s32 3, %v887
      %v889 = vrot.slane %v829, %v888
      %v890 = vmul.f32 %v880, %v885
      %v891 = vmul.f32 %v880, %v889
      %v892 = vadd.f32 %v876, %v890
      %v893 = vadd.f32 %v877, %v891
      %894 = vrot.lane.b32.xlu0 %v292, 112
      %v895 = vpop.permute.xlu0 %894
      %896 = vrot.lane.b32.xlu0 %v299, 112
      %v897 = vpop.permute.xlu0 %896
      %vm898 = vcmp.lt.s32.totalorder %v306, 112
      %v899 = vsel %vm898, %v895, %v897
      %v900 = vsel %vm898, %v897, %v895
      %v901 = vlaneseq
      %v902 = vshrl.u32 %v901, 7
      %v903 = vsub.s32 7, %v902
      %v904 = vrot.slane %v294, %v903
      %v905 = vlaneseq
      %v906 = vshrl.u32 %v905, 7
      %v907 = vsub.s32 7, %v906
      %v908 = vrot.slane %v295, %v907
      %v909 = vmul.f32 %v899, %v904
      %v910 = vmul.f32 %v900, %v908
      %911 = vset.pattern.permute.xlu0 28
      %912 = vperm.xlu0 %911, %v293
      %v913 = vpop.permute.xlu0 %912
      %v915 = vlaneseq
      %v916 = vshrl.u32 %v915, 7
      %v917 = vsub.s32 0, %v916
      %v918 = vrot.slane %v909, %v917
      %v919 = vlaneseq
      %v920 = vshrl.u32 %v919, 7
      %v921 = vsub.s32 0, %v920
      %v922 = vrot.slane %v910, %v921
      %v923 = vmul.f32 %v913, %v918
      %v924 = vmul.f32 %v913, %v922
      %v925 = vadd.f32 %v892, %v923
      %v926 = vadd.f32 %v893, %v924
      %927 = vset.pattern.permute.xlu0 29
      %928 = vperm.xlu0 %927, %v293
      %v929 = vpop.permute.xlu0 %928
      %v931 = vlaneseq
      %v932 = vshrl.u32 %v931, 7
      %v933 = vsub.s32 1, %v932
      %v934 = vrot.slane %v909, %v933
      %v935 = vlaneseq
      %v936 = vshrl.u32 %v935, 7
      %v937 = vsub.s32 1, %v936
      %v938 = vrot.slane %v910, %v937
      %v939 = vmul.f32 %v929, %v934
      %v940 = vmul.f32 %v929, %v938
      %v941 = vadd.f32 %v925, %v939
      %v942 = vadd.f32 %v926, %v940
      %943 = vset.pattern.permute.xlu0 30
      %944 = vperm.xlu0 %943, %v293
      %v945 = vpop.permute.xlu0 %944
      %v947 = vlaneseq
      %v948 = vshrl.u32 %v947, 7
      %v949 = vsub.s32 2, %v948
      %v950 = vrot.slane %v909, %v949
      %v951 = vlaneseq
      %v952 = vshrl.u32 %v951, 7
      %v953 = vsub.s32 2, %v952
      %v954 = vrot.slane %v910, %v953
      %v955 = vmul.f32 %v945, %v950
      %v956 = vmul.f32 %v945, %v954
      %v957 = vadd.f32 %v941, %v955
      %v958 = vadd.f32 %v942, %v956
      %959 = vset.pattern.permute.xlu0 31
      %960 = vperm.xlu0 %959, %v293
      %v961 = vpop.permute.xlu0 %960
      %v963 = vlaneseq
      %v964 = vshrl.u32 %v963, 7
      %v965 = vsub.s32 3, %v964
      %v966 = vrot.slane %v909, %v965
      %v967 = vlaneseq
      %v968 = vshrl.u32 %v967, 7
      %v969 = vsub.s32 3, %v968
      %v970 = vrot.slane %v910, %v969
      %v971 = vmul.f32 %v961, %v966
      %v972 = vmul.f32 %v961, %v970
      %v973 = vadd.f32 %v957, %v971
      %v974 = vadd.f32 %v958, %v972
      %975 = vrot.lane.b32.xlu0 %v292, 111
      %v976 = vpop.permute.xlu0 %975
      %977 = vrot.lane.b32.xlu0 %v299, 111
      %v978 = vpop.permute.xlu0 %977
      %vm979 = vcmp.lt.s32.totalorder %v306, 111
      %v980 = vsel %vm979, %v976, %v978
      %v981 = vsel %vm979, %v978, %v976
      %v982 = vlaneseq
      %v983 = vshrl.u32 %v982, 7
      %v984 = vsub.s32 0, %v983
      %v985 = vrot.slane %v296, %v984
      %v986 = vlaneseq
      %v987 = vshrl.u32 %v986, 7
      %v988 = vsub.s32 0, %v987
      %v989 = vrot.slane %v297, %v988
      %v990 = vmul.f32 %v980, %v985
      %v991 = vmul.f32 %v981, %v989
      %992 = vset.pattern.permute.xlu0 32
      %993 = vperm.xlu0 %992, %v293
      %v994 = vpop.permute.xlu0 %993
      %v996 = vlaneseq
      %v997 = vshrl.u32 %v996, 7
      %v998 = vsub.s32 0, %v997
      %v999 = vrot.slane %v990, %v998
      %v1000 = vlaneseq
      %v1001 = vshrl.u32 %v1000, 7
      %v1002 = vsub.s32 0, %v1001
      %v1003 = vrot.slane %v991, %v1002
      %v1004 = vmul.f32 %v994, %v999
      %v1005 = vmul.f32 %v994, %v1003
      %v1006 = vadd.f32 %v973, %v1004
      %v1007 = vadd.f32 %v974, %v1005
      %1008 = vset.pattern.permute.xlu0 33
      %1009 = vperm.xlu0 %1008, %v293
      %v1010 = vpop.permute.xlu0 %1009
      %v1012 = vlaneseq
      %v1013 = vshrl.u32 %v1012, 7
      %v1014 = vsub.s32 1, %v1013
      %v1015 = vrot.slane %v990, %v1014
      %v1016 = vlaneseq
      %v1017 = vshrl.u32 %v1016, 7
      %v1018 = vsub.s32 1, %v1017
      %v1019 = vrot.slane %v991, %v1018
      %v1020 = vmul.f32 %v1010, %v1015
      %v1021 = vmul.f32 %v1010, %v1019
      %v1022 = vadd.f32 %v1006, %v1020
      %v1023 = vadd.f32 %v1007, %v1021
      %1024 = vset.pattern.permute.xlu0 34
      %1025 = vperm.xlu0 %1024, %v293
      %v1026 = vpop.permute.xlu0 %1025
      %v1028 = vlaneseq
      %v1029 = vshrl.u32 %v1028, 7
      %v1030 = vsub.s32 2, %v1029
      %v1031 = vrot.slane %v990, %v1030
      %v1032 = vlaneseq
      %v1033 = vshrl.u32 %v1032, 7
      %v1034 = vsub.s32 2, %v1033
      %v1035 = vrot.slane %v991, %v1034
      %v1036 = vmul.f32 %v1026, %v1031
      %v1037 = vmul.f32 %v1026, %v1035
      %v1038 = vadd.f32 %v1022, %v1036
      %v1039 = vadd.f32 %v1023, %v1037
      %1040 = vset.pattern.permute.xlu0 35
      %1041 = vperm.xlu0 %1040, %v293
      %v1042 = vpop.permute.xlu0 %1041
      %v1044 = vlaneseq
      %v1045 = vshrl.u32 %v1044, 7
      %v1046 = vsub.s32 3, %v1045
      %v1047 = vrot.slane %v990, %v1046
      %v1048 = vlaneseq
      %v1049 = vshrl.u32 %v1048, 7
      %v1050 = vsub.s32 3, %v1049
      %v1051 = vrot.slane %v991, %v1050
      %v1052 = vmul.f32 %v1042, %v1047
      %v1053 = vmul.f32 %v1042, %v1051
      %v1054 = vadd.f32 %v1038, %v1052
      %v1055 = vadd.f32 %v1039, %v1053
      %v1058 = vcombine.low %v1054, %v1055
      %1060 = vst [vmem:[%s258] sm:$0xff] %v1058
      %vm1061 = vcmask 1043456
      %v1062 = vsel %vm1061, %v1054, 0.0
      %v1063 = vsel %vm1061, %v1055, 0.0
      %v1064 = vadd.f32 %v1062, %v1063
      %1065 = vadd.xlane.f32.xlu0 %v1064
      %v1066 = vpop.xlane.xlu0 %1065
      %vm1067 = vcmask 3072
      %1068 = vst.msk [vmem:[%s262] sm:$0xf] %vm1067, %v1066
      %v1069 = vmul.f32 %v1054, %v1054
      %v1070 = vmul.f32 %v1055, %v1055
      %v1071 = vsel %vm1061, %v1069, 0.0
      %v1072 = vsel %vm1061, %v1070, 0.0
      %v1073 = vadd.f32 %v1071, %v1072
      %1074 = vadd.xlane.f32.xlu0 %v1073
      %v1075 = vpop.xlane.xlu0 %1074
      %vm1076 = vcmask 11272
      %1077 = vst.msk [vmem:[%s262] sm:$0xf] %vm1076, %v1075
      %p1078 = scmp.lt.s32.totalorder %s18, 1
      %s1079 = scalar_select %p1078, %s18, 1
      %s1080 = smul.addr %s1079, 2
      %s1081 = smul.addr %s1080, 4
      %s1082 = scalar_lea.vmem %s5, %s1081
      %p1083 = scmp.lt.s32.totalorder %s18, 1
      %s1084 = scalar_select %p1083, %s18, 1
      %s1085 = smul.addr %s1084, 4
      %s1086 = scalar_lea.vmem %s6, %s1085
      // Predicated region
      $region41: #{resnet_block_forward.4} parent=39 // pred_check
        %p1087 = pneg %p146
      $region42: #{resnet_block_forward.4} parent=39 // pred_check_branch
        %1089 = sbr.rel (%p1087) target = $region44
      $region43: #{resnet_block_forward.4} parent=39 // pred_region
        _
      $region44: #{resnet_block_forward.4} parent=39 // pred_fallthru
        _
      // Predicated region
      $region45: #{resnet_block_forward.4} parent=39 // pred_check
        %p1090 = pneg %p172
      $region46: #{resnet_block_forward.4} parent=39 // pred_check_branch
        %1092 = sbr.rel (%p1090) target = $region48
      $region47: #{resnet_block_forward.4} parent=39 // pred_region
        _
      $region48: #{resnet_block_forward.4} parent=39 // pred_fallthru
        _
    $region40: #{resnet_block_forward.4} parent=5 // pred_fallthru
      _
    %p1093 = scmp.le.s32.totalorder 2, %s13
    // Predicated region
    $region49: #{resnet_block_forward.4} parent=5 // pred_check
      %p1094 = pneg %p1093
    $region50: #{resnet_block_forward.4} parent=5 // pred_check_branch
      %1096 = sbr.rel (%p1094) target = $region52
    $region51: #{resnet_block_forward.4} parent=5 // pred_region
      %s1097 = ssub.s32 %s13, 2
      // Predicated region
      $region53: #{resnet_block_forward.4} parent=51 // pred_check
        %p1098 = pneg %p152
      $region54: #{resnet_block_forward.4} parent=51 // pred_check_branch
        %1100 = sbr.rel (%p1098) target = $region56
      $region55: #{resnet_block_forward.4} parent=51 // pred_region
        %p1101 = scmp.lt.s32.totalorder %s19, 1
        %s1102 = scalar_select %p1101, %s19, 1
        %s1103 = smul.addr %s1102, 2
        %s1104 = smul.addr %s1103, 4
        %s1105 = scalar_lea.vmem %s5, %s1104
      $region56: #{resnet_block_forward.4} parent=51 // pred_fallthru
        _
      // Predicated region
      $region57: #{resnet_block_forward.4} parent=51 // pred_check
        %p1106 = pneg %p178
      $region58: #{resnet_block_forward.4} parent=51 // pred_check_branch
        %1108 = sbr.rel (%p1106) target = $region60
      $region59: #{resnet_block_forward.4} parent=51 // pred_region
        %p1109 = scmp.lt.s32.totalorder %s19, 1
        %s1110 = scalar_select %p1109, %s19, 1
        %s1111 = smul.addr %s1110, 4
        %s1112 = scalar_lea.vmem %s6, %s1111
      $region60: #{resnet_block_forward.4} parent=51 // pred_fallthru
        _
    $region52: #{resnet_block_forward.4} parent=5 // pred_fallthru
      _
  $region6: #{resnet_block_forward.4} parent=0 // loop_footer
    %s17 = sadd.s32 1, %s13
  $region7: #{resnet_block_forward.4} parent=0 // loop_footer_branch
    %12 = sbr.rel target = $region3
  $region8: #{resnet_block_forward.4} parent=0 // loop_exit
    _

</llo_original>
